<compile_context>
chip_gen: v6e
topology: v6e:2x2x1
jax: 0.10.0
libtpu: 0.0.40
codegen_flags: <defaults>
</compile_context>

<pallas_src>
import jax
import jax.numpy as jnp
import numpy as np
from jax.experimental import pallas as pl
from jax.experimental.pallas import tpu as pltpu

# ---- shapes implied by DeepConvNet.__init__ / _get_conv_output_size ----
NUM_CHANNELS = 14
NUM_CLASSES = 4
L_IN = 50
K1, C1 = 10, 25            # temporal_conv: Conv1d(14, 25, k=10)
K2, C2 = 10, 50            # spatial_conv : Conv1d(25, 50, k=10)
L1 = L_IN - K1 + 1         # 41
P1 = L1 // 3               # 13   (MaxPool1d(3))
L2 = P1 - K2 + 1           # 4
P2 = L2 // 3               # 1    (MaxPool1d(3))
TO_LINEAR = C2 * P2        # 50
BN_EPS = 1e-5

N_POOL1_USED = 12          # conv-2's 3 surviving outputs read pooled positions 0..11 only
MB = 128                   # micro-tile rows per inner pass (keeps operands in vregs)
OUT_PAD = 128              # FC output N padded to a full lane group (lane-dense stores)


def _elu(v):
    return jnp.where(v > 0, v, jnp.exp(v) - 1.0)


def deepconvnet_kernel(xu_ref, w1_ref, b1_ref, w2_ref, b2_ref, wfc_ref, bfc_ref,
                       out_ref, p1_ref):
    # xu_ref block: (L1, TB, 140) bf16, time-major im2col patches.
    tb = xu_ref.shape[1]
    mb = min(MB, tb)

    w1 = w1_ref[...]          # (140, 25) bf16  (BN folded)
    b1 = b1_ref[...]          # (1, 25)  f32    (BN-folded bias)
    b2 = b2_ref[...]          # (1, 50)  f32
    wfc = wfc_ref[...]        # (50, 128) bf16  (N padded 4 -> 128)
    bfc = bfc_ref[...]        # (1, 128)  f32

    for h in range(tb // mb):                      # 128-row micro-tiles within the batch tile
        lo = h * mb

        # ---- stage 1: temporal conv (im2col matmul) -> MaxPool(3) -> bias -> ELU ----
        for i in range(N_POOL1_USED):
            pooled = None
            for r in range(3):                     # pool window over conv positions 3i..3i+2
                t = 3 * i + r
                d = jnp.dot(xu_ref[t, lo:lo + mb, :], w1,
                            preferred_element_type=jnp.float32)       # (mb, 25) f32
                pooled = d if pooled is None else jnp.maximum(pooled, d)
            act = _elu(pooled + b1)                # bias + ELU only on the surviving position
            p1_ref[i * mb:(i + 1) * mb, :] = act.astype(jnp.bfloat16)

        # ---- stage 2: spatial conv (per-tap) -> MaxPool(3) -> bias -> ELU ----
        z_raw = None
        for j in range(3):                         # only outputs 0..2 survive MaxPool1d(3)
            acc = None
            for k in range(K2):
                lhs = p1_ref[(j + k) * mb:(j + k + 1) * mb, :]         # (mb, 25) bf16
                d = jnp.dot(lhs, w2_ref[k], preferred_element_type=jnp.float32)
                acc = d if acc is None else acc + d                    # (mb, 50) f32 in vregs
            z_raw = acc if z_raw is None else jnp.maximum(z_raw, acc)
        z = _elu(z_raw + b2).astype(jnp.bfloat16)                      # (mb, 50)

        # ---- classifier: Dropout(0.5) identity (eval); Linear(50 -> 4), N padded to 128 ----
        out_ref[lo:lo + mb, :] = jnp.dot(z, wfc,
                                         preferred_element_type=jnp.float32) + bfc


def _round_up(v, m):
    return ((v + m - 1) // m) * m


def _pick_tb(batch):
    """Batch tile: <=128 (multiple of 8) or 256; >=2 grid steps whenever possible (v7x)."""
    if batch <= 8:
        return 8
    half = -(-batch // 2)
    if half <= MB:
        return _round_up(half, 8)
    return min(2 * MB, _round_up(half, MB))        # >128 must be a multiple of the micro-tile


@jax.jit
def deepconvnet_forward(x, params):
    """x: (B, 14, 50) (or (B, 50, 14), transposed like the PyTorch forward).
    Returns (B, 4) float32 logits."""
    if x.shape[1] != NUM_CHANNELS:                 # mirror `if x.size(1) != 14: transpose(1,2)`
        x = jnp.transpose(x, (0, 2, 1))
    B = x.shape[0]
    TB = _pick_tb(B)
    B_pad = _round_up(B, TB)
    mb = min(MB, TB)
    assert TB <= MB or TB % MB == 0

    # im2col, time-major: x_unf[t, b, k*Cin + c] = x[b, c, t + k]
    x_lbc = jnp.transpose(x, (2, 0, 1)).astype(jnp.bfloat16)                  # (50, B, 14)
    x_unf = jnp.concatenate([x_lbc[k:k + L1] for k in range(K1)], axis=-1)    # (41, B, 140)
    if B_pad != B:
        x_unf = jnp.pad(x_unf, ((0, 0), (0, B_pad - B), (0, 0)))

    # Fold eval-mode BatchNorm + conv bias into the conv weights/biases (host side).
    def fold(w, b, gamma, beta, mean, var):
        s = gamma * jax.lax.rsqrt(var + BN_EPS)                   # (Cout,)
        w_f = jnp.transpose(w * s[:, None, None], (2, 1, 0))      # (K, Cin, Cout)
        b_f = ((b - mean) * s + beta).reshape(1, -1).astype(jnp.float32)
        return w_f, b_f

    w1_kco, b1f = fold(params["w1"], params["b1"], params["bn1_gamma"],
                       params["bn1_beta"], params["bn1_mean"], params["bn1_var"])
    w1m = w1_kco.reshape(K1 * NUM_CHANNELS, C1).astype(jnp.bfloat16)          # (140, 25)
    w2t, b2f = fold(params["w2"], params["b2"], params["bn2_gamma"],
                    params["bn2_beta"], params["bn2_mean"], params["bn2_var"])
    w2t = w2t.astype(jnp.bfloat16)                                            # (10, 25, 50)

    wfc_pad = jnp.zeros((TO_LINEAR, OUT_PAD), jnp.float32)
    wfc_pad = wfc_pad.at[:, :NUM_CLASSES].set(params["wfc"].T).astype(jnp.bfloat16)
    bfc_pad = jnp.zeros((1, OUT_PAD), jnp.float32).at[:, :NUM_CLASSES].set(
        params["bfc"].reshape(1, -1))

    out = pl.pallas_call(
        deepconvnet_kernel,
        out_shape=jax.ShapeDtypeStruct((B_pad, OUT_PAD), jnp.float32),
        grid=(B_pad // TB,),
        in_specs=[
            pl.BlockSpec((L1, TB, K1 * NUM_CHANNELS), lambda j: (0, j, 0)),
            pl.BlockSpec(w1m.shape, lambda j: (0, 0)),
            pl.BlockSpec(b1f.shape, lambda j: (0, 0)),
            pl.BlockSpec(w2t.shape, lambda j: (0, 0, 0)),
            pl.BlockSpec(b2f.shape, lambda j: (0, 0)),
            pl.BlockSpec(wfc_pad.shape, lambda j: (0, 0)),
            pl.BlockSpec(bfc_pad.shape, lambda j: (0, 0)),
        ],
        out_specs=pl.BlockSpec((TB, OUT_PAD), lambda j: (j, 0)),
        scratch_shapes=[pltpu.VMEM((N_POOL1_USED * mb, C1), jnp.bfloat16)],
        compiler_params=pltpu.CompilerParams(
            dimension_semantics=("parallel",),       # batch tiles independent (v7x 2 TCs)
            vmem_limit_bytes=32 * 1024 * 1024),
    )(x_unf, w1m, b1f, w2t, b2f, wfc_pad, bfc_pad)
    return out[:B, :NUM_CLASSES]


def init_params(key):
    ks = jax.random.split(key, 16)
    u = lambda k, shp, s: jax.random.uniform(k, shp, jnp.float32, -s, s)
    n = lambda k, shp, s: s * jax.random.normal(k, shp, jnp.float32)
    return {
        "w1": u(ks[0], (C1, NUM_CHANNELS, K1), 0.1),
        "b1": u(ks[1], (C1,), 0.1),
        "bn1_gamma": 1.0 + n(ks[2], (C1,), 0.1),
        "bn1_beta": n(ks[3], (C1,), 0.1),
        "bn1_mean": n(ks[4], (C1,), 0.1),
        "bn1_var": jax.random.uniform(ks[5], (C1,), jnp.float32, 0.5, 1.5),
        "w2": u(ks[6], (C2, C1, K2), 0.1),
        "b2": u(ks[7], (C2,), 0.1),
        "bn2_gamma": 1.0 + n(ks[8], (C2,), 0.1),
        "bn2_beta": n(ks[9], (C2,), 0.1),
        "bn2_mean": n(ks[10], (C2,), 0.1),
        "bn2_var": jax.random.uniform(ks[11], (C2,), jnp.float32, 0.5, 1.5),
        "wfc": u(ks[12], (NUM_CLASSES, TO_LINEAR), 0.1),
        "bfc": u(ks[13], (NUM_CLASSES,), 0.1),
    }


def reference_forward(x_ncl, p):
    """Pure-JAX f32 reference with the original (unfolded, ELU-then-pool) PyTorch math."""
    x = jnp.transpose(x_ncl, (0, 2, 1))                   # (B, L, C)
    B = x.shape[0]
    y = jnp.zeros((B, L1, C1), jnp.float32)
    for k in range(K1):
        y = y + jnp.einsum('blc,oc->blo', x[:, k:k + L1, :], p["w1"][:, :, k])
    y = y + p["b1"]
    y = (y - p["bn1_mean"]) / jnp.sqrt(p["bn1_var"] + BN_EPS) * p["bn1_gamma"] + p["bn1_beta"]
    y = jnp.where(y > 0, y, jnp.exp(y) - 1.0)
    y = y[:, :3 * P1, :].reshape(B, P1, 3, C1).max(axis=2)
    z = jnp.zeros((B, L2, C2), jnp.float32)
    for k in range(K2):
        z = z + jnp.einsum('blc,oc->blo', y[:, k:k + L2, :], p["w2"][:, :, k])
    z = z + p["b2"]
    z = (z - p["bn2_mean"]) / jnp.sqrt(p["bn2_var"] + BN_EPS) * p["bn2_gamma"] + p["bn2_beta"]
    z = jnp.where(z > 0, z, jnp.exp(z) - 1.0)
    z = z[:, :3 * P2, :].reshape(B, P2, 3, C2).max(axis=2)
    feat = z.reshape(B, -1)
    return feat @ p["wfc"].T + p["bfc"]


if __name__ == "__main__":
    key = jax.random.PRNGKey(0)
    k_x1, k_x2, k_p = jax.random.split(key, 3)
    params = init_params(k_p)

    # B=2: single grid step; B=20: padded batch + 2-step "parallel" grid.
    for B, kx in ((2, k_x1), (20, k_x2)):
        x = jax.random.normal(kx, (B, NUM_CHANNELS, L_IN), jnp.float32)   # (B, 14, 50) NCL
        logits = jax.block_until_ready(deepconvnet_forward(x, params))
        ref = jax.block_until_ready(reference_forward(x, params))
        assert logits.shape == (B, NUM_CLASSES)
        err = float(np.max(np.abs(np.asarray(logits) - np.asarray(ref))))
        # bf16 matmul operands vs. pure-f32 reference -> expected diff ~1e-3..1e-2.
        assert np.allclose(np.asarray(logits), np.asarray(ref), atol=3e-2, rtol=3e-2), \
            f"B={B}: max abs diff {err}"

    print("KERNEL_OK")
</pallas_src>

<mosaic_0001>
module attributes {stable_mosaic.version = 11 : i64} {
  func.func @deepconvnet_kernel(%arg0: i32, %arg1: memref<41x8x140xbf16, #tpu.memory_space<vmem>>, %arg2: memref<140x25xbf16, #tpu.memory_space<vmem>>, %arg3: memref<1x25xf32, #tpu.memory_space<vmem>>, %arg4: memref<10x25x50xbf16, #tpu.memory_space<vmem>>, %arg5: memref<1x50xf32, #tpu.memory_space<vmem>>, %arg6: memref<50x128xbf16, #tpu.memory_space<vmem>>, %arg7: memref<1x128xf32, #tpu.memory_space<vmem>>, %arg8: memref<8x128xf32, #tpu.memory_space<vmem>>, %arg9: memref<96x25xbf16, #tpu.memory_space<vmem>>) attributes {dimension_semantics = [#tpu.dimension_semantics<parallel>], iteration_bounds = array<i64: 1>, scalar_prefetch = 0 : i64, scratch_operands = 1 : i64, tpu.core_type = #tpu.core_type<tc>, window_params = [{transform_indices = @transform_0, window_bounds = array<i64: 41, 8, 140>}, {pipeline_mode = #tpu.pipeline_mode<synchronous>, transform_indices = @transform_1, window_bounds = array<i64: 140, 25>}, {pipeline_mode = #tpu.pipeline_mode<synchronous>, transform_indices = @transform_2, window_bounds = array<i64: 1, 25>}, {pipeline_mode = #tpu.pipeline_mode<synchronous>, transform_indices = @transform_3, window_bounds = array<i64: 10, 25, 50>}, {pipeline_mode = #tpu.pipeline_mode<synchronous>, transform_indices = @transform_4, window_bounds = array<i64: 1, 50>}, {pipeline_mode = #tpu.pipeline_mode<synchronous>, transform_indices = @transform_5, window_bounds = array<i64: 50, 128>}, {pipeline_mode = #tpu.pipeline_mode<synchronous>, transform_indices = @transform_6, window_bounds = array<i64: 1, 128>}, {transform_indices = @transform_7, window_bounds = array<i64: 8, 128>}]} {
    %c0 = arith.constant 0 : index
    %c0_0 = arith.constant 0 : index
    %0 = vector.load %arg2[%c0, %c0_0] : memref<140x25xbf16, #tpu.memory_space<vmem>>, vector<140x25xbf16>
    %c0_1 = arith.constant 0 : index
    %c0_2 = arith.constant 0 : index
    %1 = vector.load %arg3[%c0_1, %c0_2] : memref<1x25xf32, #tpu.memory_space<vmem>>, vector<1x25xf32>
    %c0_3 = arith.constant 0 : index
    %c0_4 = arith.constant 0 : index
    %2 = vector.load %arg5[%c0_3, %c0_4] : memref<1x50xf32, #tpu.memory_space<vmem>>, vector<1x50xf32>
    %c0_5 = arith.constant 0 : index
    %c0_6 = arith.constant 0 : index
    %3 = vector.load %arg6[%c0_5, %c0_6] : memref<50x128xbf16, #tpu.memory_space<vmem>>, vector<50x128xbf16>
    %c0_7 = arith.constant 0 : index
    %c0_8 = arith.constant 0 : index
    %4 = vector.load %arg7[%c0_7, %c0_8] : memref<1x128xf32, #tpu.memory_space<vmem>>, vector<1x128xf32>
    %c0_9 = arith.constant 0 : index
    %c0_10 = arith.constant 0 : index
    %c0_11 = arith.constant 0 : index
    %5 = vector.load %arg1[%c0_9, %c0_10, %c0_11] : memref<41x8x140xbf16, #tpu.memory_space<vmem>>, vector<1x8x140xbf16>
    %6 = vector.shape_cast %5 : vector<1x8x140xbf16> to vector<8x140xbf16>
    %cst = arith.constant dense<0.000000e+00> : vector<8x25xf32>
    %7 = tpu.matmul %6, %0, %cst {dimension_numbers = #tpu.dot_dimension_numbers<[1], [0], [0], [1], [0, 0, 1, 1], [], []>} : vector<8x140xbf16>, vector<140x25xbf16>, vector<8x25xf32> -> vector<8x25xf32>
    %c1 = arith.constant 1 : index
    %c0_12 = arith.constant 0 : index
    %c0_13 = arith.constant 0 : index
    %8 = vector.load %arg1[%c1, %c0_12, %c0_13] : memref<41x8x140xbf16, #tpu.memory_space<vmem>>, vector<1x8x140xbf16>
    %9 = vector.shape_cast %8 : vector<1x8x140xbf16> to vector<8x140xbf16>
    %cst_14 = arith.constant dense<0.000000e+00> : vector<8x25xf32>
    %10 = tpu.matmul %9, %0, %cst_14 {dimension_numbers = #tpu.dot_dimension_numbers<[1], [0], [0], [1], [0, 0, 1, 1], [], []>} : vector<8x140xbf16>, vector<140x25xbf16>, vector<8x25xf32> -> vector<8x25xf32>
    %11 = arith.maximumf %7, %10 : vector<8x25xf32>
    %c2 = arith.constant 2 : index
    %c0_15 = arith.constant 0 : index
    %c0_16 = arith.constant 0 : index
    %12 = vector.load %arg1[%c2, %c0_15, %c0_16] : memref<41x8x140xbf16, #tpu.memory_space<vmem>>, vector<1x8x140xbf16>
    %13 = vector.shape_cast %12 : vector<1x8x140xbf16> to vector<8x140xbf16>
    %cst_17 = arith.constant dense<0.000000e+00> : vector<8x25xf32>
    %14 = tpu.matmul %13, %0, %cst_17 {dimension_numbers = #tpu.dot_dimension_numbers<[1], [0], [0], [1], [0, 0, 1, 1], [], []>} : vector<8x140xbf16>, vector<140x25xbf16>, vector<8x25xf32> -> vector<8x25xf32>
    %15 = arith.maximumf %11, %14 : vector<8x25xf32>
    %16 = vector.broadcast %1 : vector<1x25xf32> to vector<8x25xf32>
    %17 = arith.addf %15, %16 : vector<8x25xf32>
    %cst_18 = arith.constant 0.000000e+00 : f32
    %18 = vector.broadcast %cst_18 : f32 to vector<8x25xf32>
    %19 = arith.cmpf ogt, %17, %18 : vector<8x25xf32>
    %20 = math.exp %17 : vector<8x25xf32>
    %cst_19 = arith.constant 1.000000e+00 : f32
    %21 = vector.broadcast %cst_19 : f32 to vector<8x25xf32>
    %22 = arith.subf %20, %21 : vector<8x25xf32>
    %23 = arith.select %19, %17, %22 : vector<8x25xi1>, vector<8x25xf32>
    %24 = arith.truncf %23 : vector<8x25xf32> to vector<8x25xbf16>
    %c0_20 = arith.constant 0 : index
    %c0_21 = arith.constant 0 : index
    %25 = vector.load %arg9[%c0_20, %c0_21] : memref<96x25xbf16, #tpu.memory_space<vmem>>, vector<8x25xbf16>
    tpu.vector_store %arg9[%c0_20, %c0_21], %24 {strides = array<i32>} : memref<96x25xbf16, #tpu.memory_space<vmem>>, vector<8x25xbf16>,
    %c3 = arith.constant 3 : index
    %c0_22 = arith.constant 0 : index
    %c0_23 = arith.constant 0 : index
    %26 = vector.load %arg1[%c3, %c0_22, %c0_23] : memref<41x8x140xbf16, #tpu.memory_space<vmem>>, vector<1x8x140xbf16>
    %27 = vector.shape_cast %26 : vector<1x8x140xbf16> to vector<8x140xbf16>
    %cst_24 = arith.constant dense<0.000000e+00> : vector<8x25xf32>
    %28 = tpu.matmul %27, %0, %cst_24 {dimension_numbers = #tpu.dot_dimension_numbers<[1], [0], [0], [1], [0, 0, 1, 1], [], []>} : vector<8x140xbf16>, vector<140x25xbf16>, vector<8x25xf32> -> vector<8x25xf32>
    %c4 = arith.constant 4 : index
    %c0_25 = arith.constant 0 : index
    %c0_26 = arith.constant 0 : index
    %29 = vector.load %arg1[%c4, %c0_25, %c0_26] : memref<41x8x140xbf16, #tpu.memory_space<vmem>>, vector<1x8x140xbf16>
    %30 = vector.shape_cast %29 : vector<1x8x140xbf16> to vector<8x140xbf16>
    %cst_27 = arith.constant dense<0.000000e+00> : vector<8x25xf32>
    %31 = tpu.matmul %30, %0, %cst_27 {dimension_numbers = #tpu.dot_dimension_numbers<[1], [0], [0], [1], [0, 0, 1, 1], [], []>} : vector<8x140xbf16>, vector<140x25xbf16>, vector<8x25xf32> -> vector<8x25xf32>
    %32 = arith.maximumf %28, %31 : vector<8x25xf32>
    %c5 = arith.constant 5 : index
    %c0_28 = arith.constant 0 : index
    %c0_29 = arith.constant 0 : index
    %33 = vector.load %arg1[%c5, %c0_28, %c0_29] : memref<41x8x140xbf16, #tpu.memory_space<vmem>>, vector<1x8x140xbf16>
    %34 = vector.shape_cast %33 : vector<1x8x140xbf16> to vector<8x140xbf16>
    %cst_30 = arith.constant dense<0.000000e+00> : vector<8x25xf32>
    %35 = tpu.matmul %34, %0, %cst_30 {dimension_numbers = #tpu.dot_dimension_numbers<[1], [0], [0], [1], [0, 0, 1, 1], [], []>} : vector<8x140xbf16>, vector<140x25xbf16>, vector<8x25xf32> -> vector<8x25xf32>
    %36 = arith.maximumf %32, %35 : vector<8x25xf32>
    %37 = vector.broadcast %1 : vector<1x25xf32> to vector<8x25xf32>
    %38 = arith.addf %36, %37 : vector<8x25xf32>
    %cst_31 = arith.constant 0.000000e+00 : f32
    %39 = vector.broadcast %cst_31 : f32 to vector<8x25xf32>
    %40 = arith.cmpf ogt, %38, %39 : vector<8x25xf32>
    %41 = math.exp %38 : vector<8x25xf32>
    %cst_32 = arith.constant 1.000000e+00 : f32
    %42 = vector.broadcast %cst_32 : f32 to vector<8x25xf32>
    %43 = arith.subf %41, %42 : vector<8x25xf32>
    %44 = arith.select %40, %38, %43 : vector<8x25xi1>, vector<8x25xf32>
    %45 = arith.truncf %44 : vector<8x25xf32> to vector<8x25xbf16>
    %c8 = arith.constant 8 : index
    %c0_33 = arith.constant 0 : index
    %46 = vector.load %arg9[%c8, %c0_33] : memref<96x25xbf16, #tpu.memory_space<vmem>>, vector<8x25xbf16>
    tpu.vector_store %arg9[%c8, %c0_33], %45 {strides = array<i32>} : memref<96x25xbf16, #tpu.memory_space<vmem>>, vector<8x25xbf16>,
    %c6 = arith.constant 6 : index
    %c0_34 = arith.constant 0 : index
    %c0_35 = arith.constant 0 : index
    %47 = vector.load %arg1[%c6, %c0_34, %c0_35] : memref<41x8x140xbf16, #tpu.memory_space<vmem>>, vector<1x8x140xbf16>
    %48 = vector.shape_cast %47 : vector<1x8x140xbf16> to vector<8x140xbf16>
    %cst_36 = arith.constant dense<0.000000e+00> : vector<8x25xf32>
    %49 = tpu.matmul %48, %0, %cst_36 {dimension_numbers = #tpu.dot_dimension_numbers<[1], [0], [0], [1], [0, 0, 1, 1], [], []>} : vector<8x140xbf16>, vector<140x25xbf16>, vector<8x25xf32> -> vector<8x25xf32>
    %c7 = arith.constant 7 : index
    %c0_37 = arith.constant 0 : index
    %c0_38 = arith.constant 0 : index
    %50 = vector.load %arg1[%c7, %c0_37, %c0_38] : memref<41x8x140xbf16, #tpu.memory_space<vmem>>, vector<1x8x140xbf16>
    %51 = vector.shape_cast %50 : vector<1x8x140xbf16> to vector<8x140xbf16>
    %cst_39 = arith.constant dense<0.000000e+00> : vector<8x25xf32>
    %52 = tpu.matmul %51, %0, %cst_39 {dimension_numbers = #tpu.dot_dimension_numbers<[1], [0], [0], [1], [0, 0, 1, 1], [], []>} : vector<8x140xbf16>, vector<140x25xbf16>, vector<8x25xf32> -> vector<8x25xf32>
    %53 = arith.maximumf %49, %52 : vector<8x25xf32>
    %c8_40 = arith.constant 8 : index
    %c0_41 = arith.constant 0 : index
    %c0_42 = arith.constant 0 : index
    %54 = vector.load %arg1[%c8_40, %c0_41, %c0_42] : memref<41x8x140xbf16, #tpu.memory_space<vmem>>, vector<1x8x140xbf16>
    %55 = vector.shape_cast %54 : vector<1x8x140xbf16> to vector<8x140xbf16>
    %cst_43 = arith.constant dense<0.000000e+00> : vector<8x25xf32>
    %56 = tpu.matmul %55, %0, %cst_43 {dimension_numbers = #tpu.dot_dimension_numbers<[1], [0], [0], [1], [0, 0, 1, 1], [], []>} : vector<8x140xbf16>, vector<140x25xbf16>, vector<8x25xf32> -> vector<8x25xf32>
    %57 = arith.maximumf %53, %56 : vector<8x25xf32>
    %58 = vector.broadcast %1 : vector<1x25xf32> to vector<8x25xf32>
    %59 = arith.addf %57, %58 : vector<8x25xf32>
    %cst_44 = arith.constant 0.000000e+00 : f32
    %60 = vector.broadcast %cst_44 : f32 to vector<8x25xf32>
    %61 = arith.cmpf ogt, %59, %60 : vector<8x25xf32>
    %62 = math.exp %59 : vector<8x25xf32>
    %cst_45 = arith.constant 1.000000e+00 : f32
    %63 = vector.broadcast %cst_45 : f32 to vector<8x25xf32>
    %64 = arith.subf %62, %63 : vector<8x25xf32>
    %65 = arith.select %61, %59, %64 : vector<8x25xi1>, vector<8x25xf32>
    %66 = arith.truncf %65 : vector<8x25xf32> to vector<8x25xbf16>
    %c16 = arith.constant 16 : index
    %c0_46 = arith.constant 0 : index
    %67 = vector.load %arg9[%c16, %c0_46] : memref<96x25xbf16, #tpu.memory_space<vmem>>, vector<8x25xbf16>
    tpu.vector_store %arg9[%c16, %c0_46], %66 {strides = array<i32>} : memref<96x25xbf16, #tpu.memory_space<vmem>>, vector<8x25xbf16>,
    %c9 = arith.constant 9 : index
    %c0_47 = arith.constant 0 : index
    %c0_48 = arith.constant 0 : index
    %68 = vector.load %arg1[%c9, %c0_47, %c0_48] : memref<41x8x140xbf16, #tpu.memory_space<vmem>>, vector<1x8x140xbf16>
    %69 = vector.shape_cast %68 : vector<1x8x140xbf16> to vector<8x140xbf16>
    %cst_49 = arith.constant dense<0.000000e+00> : vector<8x25xf32>
    %70 = tpu.matmul %69, %0, %cst_49 {dimension_numbers = #tpu.dot_dimension_numbers<[1], [0], [0], [1], [0, 0, 1, 1], [], []>} : vector<8x140xbf16>, vector<140x25xbf16>, vector<8x25xf32> -> vector<8x25xf32>
    %c10 = arith.constant 10 : index
    %c0_50 = arith.constant 0 : index
    %c0_51 = arith.constant 0 : index
    %71 = vector.load %arg1[%c10, %c0_50, %c0_51] : memref<41x8x140xbf16, #tpu.memory_space<vmem>>, vector<1x8x140xbf16>
    %72 = vector.shape_cast %71 : vector<1x8x140xbf16> to vector<8x140xbf16>
    %cst_52 = arith.constant dense<0.000000e+00> : vector<8x25xf32>
    %73 = tpu.matmul %72, %0, %cst_52 {dimension_numbers = #tpu.dot_dimension_numbers<[1], [0], [0], [1], [0, 0, 1, 1], [], []>} : vector<8x140xbf16>, vector<140x25xbf16>, vector<8x25xf32> -> vector<8x25xf32>
    %74 = arith.maximumf %70, %73 : vector<8x25xf32>
    %c11 = arith.constant 11 : index
    %c0_53 = arith.constant 0 : index
    %c0_54 = arith.constant 0 : index
    %75 = vector.load %arg1[%c11, %c0_53, %c0_54] : memref<41x8x140xbf16, #tpu.memory_space<vmem>>, vector<1x8x140xbf16>
    %76 = vector.shape_cast %75 : vector<1x8x140xbf16> to vector<8x140xbf16>
    %cst_55 = arith.constant dense<0.000000e+00> : vector<8x25xf32>
    %77 = tpu.matmul %76, %0, %cst_55 {dimension_numbers = #tpu.dot_dimension_numbers<[1], [0], [0], [1], [0, 0, 1, 1], [], []>} : vector<8x140xbf16>, vector<140x25xbf16>, vector<8x25xf32> -> vector<8x25xf32>
    %78 = arith.maximumf %74, %77 : vector<8x25xf32>
    %79 = vector.broadcast %1 : vector<1x25xf32> to vector<8x25xf32>
    %80 = arith.addf %78, %79 : vector<8x25xf32>
    %cst_56 = arith.constant 0.000000e+00 : f32
    %81 = vector.broadcast %cst_56 : f32 to vector<8x25xf32>
    %82 = arith.cmpf ogt, %80, %81 : vector<8x25xf32>
    %83 = math.exp %80 : vector<8x25xf32>
    %cst_57 = arith.constant 1.000000e+00 : f32
    %84 = vector.broadcast %cst_57 : f32 to vector<8x25xf32>
    %85 = arith.subf %83, %84 : vector<8x25xf32>
    %86 = arith.select %82, %80, %85 : vector<8x25xi1>, vector<8x25xf32>
    %87 = arith.truncf %86 : vector<8x25xf32> to vector<8x25xbf16>
    %c24 = arith.constant 24 : index
    %c0_58 = arith.constant 0 : index
    %88 = vector.load %arg9[%c24, %c0_58] : memref<96x25xbf16, #tpu.memory_space<vmem>>, vector<8x25xbf16>
    tpu.vector_store %arg9[%c24, %c0_58], %87 {strides = array<i32>} : memref<96x25xbf16, #tpu.memory_space<vmem>>, vector<8x25xbf16>,
    %c12 = arith.constant 12 : index
    %c0_59 = arith.constant 0 : index
    %c0_60 = arith.constant 0 : index
    %89 = vector.load %arg1[%c12, %c0_59, %c0_60] : memref<41x8x140xbf16, #tpu.memory_space<vmem>>, vector<1x8x140xbf16>
    %90 = vector.shape_cast %89 : vector<1x8x140xbf16> to vector<8x140xbf16>
    %cst_61 = arith.constant dense<0.000000e+00> : vector<8x25xf32>
    %91 = tpu.matmul %90, %0, %cst_61 {dimension_numbers = #tpu.dot_dimension_numbers<[1], [0], [0], [1], [0, 0, 1, 1], [], []>} : vector<8x140xbf16>, vector<140x25xbf16>, vector<8x25xf32> -> vector<8x25xf32>
    %c13 = arith.constant 13 : index
    %c0_62 = arith.constant 0 : index
    %c0_63 = arith.constant 0 : index
    %92 = vector.load %arg1[%c13, %c0_62, %c0_63] : memref<41x8x140xbf16, #tpu.memory_space<vmem>>, vector<1x8x140xbf16>
    %93 = vector.shape_cast %92 : vector<1x8x140xbf16> to vector<8x140xbf16>
    %cst_64 = arith.constant dense<0.000000e+00> : vector<8x25xf32>
    %94 = tpu.matmul %93, %0, %cst_64 {dimension_numbers = #tpu.dot_dimension_numbers<[1], [0], [0], [1], [0, 0, 1, 1], [], []>} : vector<8x140xbf16>, vector<140x25xbf16>, vector<8x25xf32> -> vector<8x25xf32>
    %95 = arith.maximumf %91, %94 : vector<8x25xf32>
    %c14 = arith.constant 14 : index
    %c0_65 = arith.constant 0 : index
    %c0_66 = arith.constant 0 : index
    %96 = vector.load %arg1[%c14, %c0_65, %c0_66] : memref<41x8x140xbf16, #tpu.memory_space<vmem>>, vector<1x8x140xbf16>
    %97 = vector.shape_cast %96 : vector<1x8x140xbf16> to vector<8x140xbf16>
    %cst_67 = arith.constant dense<0.000000e+00> : vector<8x25xf32>
    %98 = tpu.matmul %97, %0, %cst_67 {dimension_numbers = #tpu.dot_dimension_numbers<[1], [0], [0], [1], [0, 0, 1, 1], [], []>} : vector<8x140xbf16>, vector<140x25xbf16>, vector<8x25xf32> -> vector<8x25xf32>
    %99 = arith.maximumf %95, %98 : vector<8x25xf32>
    %100 = vector.broadcast %1 : vector<1x25xf32> to vector<8x25xf32>
    %101 = arith.addf %99, %100 : vector<8x25xf32>
    %cst_68 = arith.constant 0.000000e+00 : f32
    %102 = vector.broadcast %cst_68 : f32 to vector<8x25xf32>
    %103 = arith.cmpf ogt, %101, %102 : vector<8x25xf32>
    %104 = math.exp %101 : vector<8x25xf32>
    %cst_69 = arith.constant 1.000000e+00 : f32
    %105 = vector.broadcast %cst_69 : f32 to vector<8x25xf32>
    %106 = arith.subf %104, %105 : vector<8x25xf32>
    %107 = arith.select %103, %101, %106 : vector<8x25xi1>, vector<8x25xf32>
    %108 = arith.truncf %107 : vector<8x25xf32> to vector<8x25xbf16>
    %c32 = arith.constant 32 : index
    %c0_70 = arith.constant 0 : index
    %109 = vector.load %arg9[%c32, %c0_70] : memref<96x25xbf16, #tpu.memory_space<vmem>>, vector<8x25xbf16>
    tpu.vector_store %arg9[%c32, %c0_70], %108 {strides = array<i32>} : memref<96x25xbf16, #tpu.memory_space<vmem>>, vector<8x25xbf16>,
    %c15 = arith.constant 15 : index
    %c0_71 = arith.constant 0 : index
    %c0_72 = arith.constant 0 : index
    %110 = vector.load %arg1[%c15, %c0_71, %c0_72] : memref<41x8x140xbf16, #tpu.memory_space<vmem>>, vector<1x8x140xbf16>
    %111 = vector.shape_cast %110 : vector<1x8x140xbf16> to vector<8x140xbf16>
    %cst_73 = arith.constant dense<0.000000e+00> : vector<8x25xf32>
    %112 = tpu.matmul %111, %0, %cst_73 {dimension_numbers = #tpu.dot_dimension_numbers<[1], [0], [0], [1], [0, 0, 1, 1], [], []>} : vector<8x140xbf16>, vector<140x25xbf16>, vector<8x25xf32> -> vector<8x25xf32>
    %c16_74 = arith.constant 16 : index
    %c0_75 = arith.constant 0 : index
    %c0_76 = arith.constant 0 : index
    %113 = vector.load %arg1[%c16_74, %c0_75, %c0_76] : memref<41x8x140xbf16, #tpu.memory_space<vmem>>, vector<1x8x140xbf16>
    %114 = vector.shape_cast %113 : vector<1x8x140xbf16> to vector<8x140xbf16>
    %cst_77 = arith.constant dense<0.000000e+00> : vector<8x25xf32>
    %115 = tpu.matmul %114, %0, %cst_77 {dimension_numbers = #tpu.dot_dimension_numbers<[1], [0], [0], [1], [0, 0, 1, 1], [], []>} : vector<8x140xbf16>, vector<140x25xbf16>, vector<8x25xf32> -> vector<8x25xf32>
    %116 = arith.maximumf %112, %115 : vector<8x25xf32>
    %c17 = arith.constant 17 : index
    %c0_78 = arith.constant 0 : index
    %c0_79 = arith.constant 0 : index
    %117 = vector.load %arg1[%c17, %c0_78, %c0_79] : memref<41x8x140xbf16, #tpu.memory_space<vmem>>, vector<1x8x140xbf16>
    %118 = vector.shape_cast %117 : vector<1x8x140xbf16> to vector<8x140xbf16>
    %cst_80 = arith.constant dense<0.000000e+00> : vector<8x25xf32>
    %119 = tpu.matmul %118, %0, %cst_80 {dimension_numbers = #tpu.dot_dimension_numbers<[1], [0], [0], [1], [0, 0, 1, 1], [], []>} : vector<8x140xbf16>, vector<140x25xbf16>, vector<8x25xf32> -> vector<8x25xf32>
    %120 = arith.maximumf %116, %119 : vector<8x25xf32>
    %121 = vector.broadcast %1 : vector<1x25xf32> to vector<8x25xf32>
    %122 = arith.addf %120, %121 : vector<8x25xf32>
    %cst_81 = arith.constant 0.000000e+00 : f32
    %123 = vector.broadcast %cst_81 : f32 to vector<8x25xf32>
    %124 = arith.cmpf ogt, %122, %123 : vector<8x25xf32>
    %125 = math.exp %122 : vector<8x25xf32>
    %cst_82 = arith.constant 1.000000e+00 : f32
    %126 = vector.broadcast %cst_82 : f32 to vector<8x25xf32>
    %127 = arith.subf %125, %126 : vector<8x25xf32>
    %128 = arith.select %124, %122, %127 : vector<8x25xi1>, vector<8x25xf32>
    %129 = arith.truncf %128 : vector<8x25xf32> to vector<8x25xbf16>
    %c40 = arith.constant 40 : index
    %c0_83 = arith.constant 0 : index
    %130 = vector.load %arg9[%c40, %c0_83] : memref<96x25xbf16, #tpu.memory_space<vmem>>, vector<8x25xbf16>
    tpu.vector_store %arg9[%c40, %c0_83], %129 {strides = array<i32>} : memref<96x25xbf16, #tpu.memory_space<vmem>>, vector<8x25xbf16>,
    %c18 = arith.constant 18 : index
    %c0_84 = arith.constant 0 : index
    %c0_85 = arith.constant 0 : index
    %131 = vector.load %arg1[%c18, %c0_84, %c0_85] : memref<41x8x140xbf16, #tpu.memory_space<vmem>>, vector<1x8x140xbf16>
    %132 = vector.shape_cast %131 : vector<1x8x140xbf16> to vector<8x140xbf16>
    %cst_86 = arith.constant dense<0.000000e+00> : vector<8x25xf32>
    %133 = tpu.matmul %132, %0, %cst_86 {dimension_numbers = #tpu.dot_dimension_numbers<[1], [0], [0], [1], [0, 0, 1, 1], [], []>} : vector<8x140xbf16>, vector<140x25xbf16>, vector<8x25xf32> -> vector<8x25xf32>
    %c19 = arith.constant 19 : index
    %c0_87 = arith.constant 0 : index
    %c0_88 = arith.constant 0 : index
    %134 = vector.load %arg1[%c19, %c0_87, %c0_88] : memref<41x8x140xbf16, #tpu.memory_space<vmem>>, vector<1x8x140xbf16>
    %135 = vector.shape_cast %134 : vector<1x8x140xbf16> to vector<8x140xbf16>
    %cst_89 = arith.constant dense<0.000000e+00> : vector<8x25xf32>
    %136 = tpu.matmul %135, %0, %cst_89 {dimension_numbers = #tpu.dot_dimension_numbers<[1], [0], [0], [1], [0, 0, 1, 1], [], []>} : vector<8x140xbf16>, vector<140x25xbf16>, vector<8x25xf32> -> vector<8x25xf32>
    %137 = arith.maximumf %133, %136 : vector<8x25xf32>
    %c20 = arith.constant 20 : index
    %c0_90 = arith.constant 0 : index
    %c0_91 = arith.constant 0 : index
    %138 = vector.load %arg1[%c20, %c0_90, %c0_91] : memref<41x8x140xbf16, #tpu.memory_space<vmem>>, vector<1x8x140xbf16>
    %139 = vector.shape_cast %138 : vector<1x8x140xbf16> to vector<8x140xbf16>
    %cst_92 = arith.constant dense<0.000000e+00> : vector<8x25xf32>
    %140 = tpu.matmul %139, %0, %cst_92 {dimension_numbers = #tpu.dot_dimension_numbers<[1], [0], [0], [1], [0, 0, 1, 1], [], []>} : vector<8x140xbf16>, vector<140x25xbf16>, vector<8x25xf32> -> vector<8x25xf32>
    %141 = arith.maximumf %137, %140 : vector<8x25xf32>
    %142 = vector.broadcast %1 : vector<1x25xf32> to vector<8x25xf32>
    %143 = arith.addf %141, %142 : vector<8x25xf32>
    %cst_93 = arith.constant 0.000000e+00 : f32
    %144 = vector.broadcast %cst_93 : f32 to vector<8x25xf32>
    %145 = arith.cmpf ogt, %143, %144 : vector<8x25xf32>
    %146 = math.exp %143 : vector<8x25xf32>
    %cst_94 = arith.constant 1.000000e+00 : f32
    %147 = vector.broadcast %cst_94 : f32 to vector<8x25xf32>
    %148 = arith.subf %146, %147 : vector<8x25xf32>
    %149 = arith.select %145, %143, %148 : vector<8x25xi1>, vector<8x25xf32>
    %150 = arith.truncf %149 : vector<8x25xf32> to vector<8x25xbf16>
    %c48 = arith.constant 48 : index
    %c0_95 = arith.constant 0 : index
    %151 = vector.load %arg9[%c48, %c0_95] : memref<96x25xbf16, #tpu.memory_space<vmem>>, vector<8x25xbf16>
    tpu.vector_store %arg9[%c48, %c0_95], %150 {strides = array<i32>} : memref<96x25xbf16, #tpu.memory_space<vmem>>, vector<8x25xbf16>,
    %c21 = arith.constant 21 : index
    %c0_96 = arith.constant 0 : index
    %c0_97 = arith.constant 0 : index
    %152 = vector.load %arg1[%c21, %c0_96, %c0_97] : memref<41x8x140xbf16, #tpu.memory_space<vmem>>, vector<1x8x140xbf16>
    %153 = vector.shape_cast %152 : vector<1x8x140xbf16> to vector<8x140xbf16>
    %cst_98 = arith.constant dense<0.000000e+00> : vector<8x25xf32>
    %154 = tpu.matmul %153, %0, %cst_98 {dimension_numbers = #tpu.dot_dimension_numbers<[1], [0], [0], [1], [0, 0, 1, 1], [], []>} : vector<8x140xbf16>, vector<140x25xbf16>, vector<8x25xf32> -> vector<8x25xf32>
    %c22 = arith.constant 22 : index
    %c0_99 = arith.constant 0 : index
    %c0_100 = arith.constant 0 : index
    %155 = vector.load %arg1[%c22, %c0_99, %c0_100] : memref<41x8x140xbf16, #tpu.memory_space<vmem>>, vector<1x8x140xbf16>
    %156 = vector.shape_cast %155 : vector<1x8x140xbf16> to vector<8x140xbf16>
    %cst_101 = arith.constant dense<0.000000e+00> : vector<8x25xf32>
    %157 = tpu.matmul %156, %0, %cst_101 {dimension_numbers = #tpu.dot_dimension_numbers<[1], [0], [0], [1], [0, 0, 1, 1], [], []>} : vector<8x140xbf16>, vector<140x25xbf16>, vector<8x25xf32> -> vector<8x25xf32>
    %158 = arith.maximumf %154, %157 : vector<8x25xf32>
    %c23 = arith.constant 23 : index
    %c0_102 = arith.constant 0 : index
    %c0_103 = arith.constant 0 : index
    %159 = vector.load %arg1[%c23, %c0_102, %c0_103] : memref<41x8x140xbf16, #tpu.memory_space<vmem>>, vector<1x8x140xbf16>
    %160 = vector.shape_cast %159 : vector<1x8x140xbf16> to vector<8x140xbf16>
    %cst_104 = arith.constant dense<0.000000e+00> : vector<8x25xf32>
    %161 = tpu.matmul %160, %0, %cst_104 {dimension_numbers = #tpu.dot_dimension_numbers<[1], [0], [0], [1], [0, 0, 1, 1], [], []>} : vector<8x140xbf16>, vector<140x25xbf16>, vector<8x25xf32> -> vector<8x25xf32>
    %162 = arith.maximumf %158, %161 : vector<8x25xf32>
    %163 = vector.broadcast %1 : vector<1x25xf32> to vector<8x25xf32>
    %164 = arith.addf %162, %163 : vector<8x25xf32>
    %cst_105 = arith.constant 0.000000e+00 : f32
    %165 = vector.broadcast %cst_105 : f32 to vector<8x25xf32>
    %166 = arith.cmpf ogt, %164, %165 : vector<8x25xf32>
    %167 = math.exp %164 : vector<8x25xf32>
    %cst_106 = arith.constant 1.000000e+00 : f32
    %168 = vector.broadcast %cst_106 : f32 to vector<8x25xf32>
    %169 = arith.subf %167, %168 : vector<8x25xf32>
    %170 = arith.select %166, %164, %169 : vector<8x25xi1>, vector<8x25xf32>
    %171 = arith.truncf %170 : vector<8x25xf32> to vector<8x25xbf16>
    %c56 = arith.constant 56 : index
    %c0_107 = arith.constant 0 : index
    %172 = vector.load %arg9[%c56, %c0_107] : memref<96x25xbf16, #tpu.memory_space<vmem>>, vector<8x25xbf16>
    tpu.vector_store %arg9[%c56, %c0_107], %171 {strides = array<i32>} : memref<96x25xbf16, #tpu.memory_space<vmem>>, vector<8x25xbf16>,
    %c24_108 = arith.constant 24 : index
    %c0_109 = arith.constant 0 : index
    %c0_110 = arith.constant 0 : index
    %173 = vector.load %arg1[%c24_108, %c0_109, %c0_110] : memref<41x8x140xbf16, #tpu.memory_space<vmem>>, vector<1x8x140xbf16>
    %174 = vector.shape_cast %173 : vector<1x8x140xbf16> to vector<8x140xbf16>
    %cst_111 = arith.constant dense<0.000000e+00> : vector<8x25xf32>
    %175 = tpu.matmul %174, %0, %cst_111 {dimension_numbers = #tpu.dot_dimension_numbers<[1], [0], [0], [1], [0, 0, 1, 1], [], []>} : vector<8x140xbf16>, vector<140x25xbf16>, vector<8x25xf32> -> vector<8x25xf32>
    %c25 = arith.constant 25 : index
    %c0_112 = arith.constant 0 : index
    %c0_113 = arith.constant 0 : index
    %176 = vector.load %arg1[%c25, %c0_112, %c0_113] : memref<41x8x140xbf16, #tpu.memory_space<vmem>>, vector<1x8x140xbf16>
    %177 = vector.shape_cast %176 : vector<1x8x140xbf16> to vector<8x140xbf16>
    %cst_114 = arith.constant dense<0.000000e+00> : vector<8x25xf32>
    %178 = tpu.matmul %177, %0, %cst_114 {dimension_numbers = #tpu.dot_dimension_numbers<[1], [0], [0], [1], [0, 0, 1, 1], [], []>} : vector<8x140xbf16>, vector<140x25xbf16>, vector<8x25xf32> -> vector<8x25xf32>
    %179 = arith.maximumf %175, %178 : vector<8x25xf32>
    %c26 = arith.constant 26 : index
    %c0_115 = arith.constant 0 : index
    %c0_116 = arith.constant 0 : index
    %180 = vector.load %arg1[%c26, %c0_115, %c0_116] : memref<41x8x140xbf16, #tpu.memory_space<vmem>>, vector<1x8x140xbf16>
    %181 = vector.shape_cast %180 : vector<1x8x140xbf16> to vector<8x140xbf16>
    %cst_117 = arith.constant dense<0.000000e+00> : vector<8x25xf32>
    %182 = tpu.matmul %181, %0, %cst_117 {dimension_numbers = #tpu.dot_dimension_numbers<[1], [0], [0], [1], [0, 0, 1, 1], [], []>} : vector<8x140xbf16>, vector<140x25xbf16>, vector<8x25xf32> -> vector<8x25xf32>
    %183 = arith.maximumf %179, %182 : vector<8x25xf32>
    %184 = vector.broadcast %1 : vector<1x25xf32> to vector<8x25xf32>
    %185 = arith.addf %183, %184 : vector<8x25xf32>
    %cst_118 = arith.constant 0.000000e+00 : f32
    %186 = vector.broadcast %cst_118 : f32 to vector<8x25xf32>
    %187 = arith.cmpf ogt, %185, %186 : vector<8x25xf32>
    %188 = math.exp %185 : vector<8x25xf32>
    %cst_119 = arith.constant 1.000000e+00 : f32
    %189 = vector.broadcast %cst_119 : f32 to vector<8x25xf32>
    %190 = arith.subf %188, %189 : vector<8x25xf32>
    %191 = arith.select %187, %185, %190 : vector<8x25xi1>, vector<8x25xf32>
    %192 = arith.truncf %191 : vector<8x25xf32> to vector<8x25xbf16>
    %c64 = arith.constant 64 : index
    %c0_120 = arith.constant 0 : index
    %193 = vector.load %arg9[%c64, %c0_120] : memref<96x25xbf16, #tpu.memory_space<vmem>>, vector<8x25xbf16>
    tpu.vector_store %arg9[%c64, %c0_120], %192 {strides = array<i32>} : memref<96x25xbf16, #tpu.memory_space<vmem>>, vector<8x25xbf16>,
    %c27 = arith.constant 27 : index
    %c0_121 = arith.constant 0 : index
    %c0_122 = arith.constant 0 : index
    %194 = vector.load %arg1[%c27, %c0_121, %c0_122] : memref<41x8x140xbf16, #tpu.memory_space<vmem>>, vector<1x8x140xbf16>
    %195 = vector.shape_cast %194 : vector<1x8x140xbf16> to vector<8x140xbf16>
    %cst_123 = arith.constant dense<0.000000e+00> : vector<8x25xf32>
    %196 = tpu.matmul %195, %0, %cst_123 {dimension_numbers = #tpu.dot_dimension_numbers<[1], [0], [0], [1], [0, 0, 1, 1], [], []>} : vector<8x140xbf16>, vector<140x25xbf16>, vector<8x25xf32> -> vector<8x25xf32>
    %c28 = arith.constant 28 : index
    %c0_124 = arith.constant 0 : index
    %c0_125 = arith.constant 0 : index
    %197 = vector.load %arg1[%c28, %c0_124, %c0_125] : memref<41x8x140xbf16, #tpu.memory_space<vmem>>, vector<1x8x140xbf16>
    %198 = vector.shape_cast %197 : vector<1x8x140xbf16> to vector<8x140xbf16>
    %cst_126 = arith.constant dense<0.000000e+00> : vector<8x25xf32>
    %199 = tpu.matmul %198, %0, %cst_126 {dimension_numbers = #tpu.dot_dimension_numbers<[1], [0], [0], [1], [0, 0, 1, 1], [], []>} : vector<8x140xbf16>, vector<140x25xbf16>, vector<8x25xf32> -> vector<8x25xf32>
    %200 = arith.maximumf %196, %199 : vector<8x25xf32>
    %c29 = arith.constant 29 : index
    %c0_127 = arith.constant 0 : index
    %c0_128 = arith.constant 0 : index
    %201 = vector.load %arg1[%c29, %c0_127, %c0_128] : memref<41x8x140xbf16, #tpu.memory_space<vmem>>, vector<1x8x140xbf16>
    %202 = vector.shape_cast %201 : vector<1x8x140xbf16> to vector<8x140xbf16>
    %cst_129 = arith.constant dense<0.000000e+00> : vector<8x25xf32>
    %203 = tpu.matmul %202, %0, %cst_129 {dimension_numbers = #tpu.dot_dimension_numbers<[1], [0], [0], [1], [0, 0, 1, 1], [], []>} : vector<8x140xbf16>, vector<140x25xbf16>, vector<8x25xf32> -> vector<8x25xf32>
    %204 = arith.maximumf %200, %203 : vector<8x25xf32>
    %205 = vector.broadcast %1 : vector<1x25xf32> to vector<8x25xf32>
    %206 = arith.addf %204, %205 : vector<8x25xf32>
    %cst_130 = arith.constant 0.000000e+00 : f32
    %207 = vector.broadcast %cst_130 : f32 to vector<8x25xf32>
    %208 = arith.cmpf ogt, %206, %207 : vector<8x25xf32>
    %209 = math.exp %206 : vector<8x25xf32>
    %cst_131 = arith.constant 1.000000e+00 : f32
    %210 = vector.broadcast %cst_131 : f32 to vector<8x25xf32>
    %211 = arith.subf %209, %210 : vector<8x25xf32>
    %212 = arith.select %208, %206, %211 : vector<8x25xi1>, vector<8x25xf32>
    %213 = arith.truncf %212 : vector<8x25xf32> to vector<8x25xbf16>
    %c72 = arith.constant 72 : index
    %c0_132 = arith.constant 0 : index
    %214 = vector.load %arg9[%c72, %c0_132] : memref<96x25xbf16, #tpu.memory_space<vmem>>, vector<8x25xbf16>
    tpu.vector_store %arg9[%c72, %c0_132], %213 {strides = array<i32>} : memref<96x25xbf16, #tpu.memory_space<vmem>>, vector<8x25xbf16>,
    %c30 = arith.constant 30 : index
    %c0_133 = arith.constant 0 : index
    %c0_134 = arith.constant 0 : index
    %215 = vector.load %arg1[%c30, %c0_133, %c0_134] : memref<41x8x140xbf16, #tpu.memory_space<vmem>>, vector<1x8x140xbf16>
    %216 = vector.shape_cast %215 : vector<1x8x140xbf16> to vector<8x140xbf16>
    %cst_135 = arith.constant dense<0.000000e+00> : vector<8x25xf32>
    %217 = tpu.matmul %216, %0, %cst_135 {dimension_numbers = #tpu.dot_dimension_numbers<[1], [0], [0], [1], [0, 0, 1, 1], [], []>} : vector<8x140xbf16>, vector<140x25xbf16>, vector<8x25xf32> -> vector<8x25xf32>
    %c31 = arith.constant 31 : index
    %c0_136 = arith.constant 0 : index
    %c0_137 = arith.constant 0 : index
    %218 = vector.load %arg1[%c31, %c0_136, %c0_137] : memref<41x8x140xbf16, #tpu.memory_space<vmem>>, vector<1x8x140xbf16>
    %219 = vector.shape_cast %218 : vector<1x8x140xbf16> to vector<8x140xbf16>
    %cst_138 = arith.constant dense<0.000000e+00> : vector<8x25xf32>
    %220 = tpu.matmul %219, %0, %cst_138 {dimension_numbers = #tpu.dot_dimension_numbers<[1], [0], [0], [1], [0, 0, 1, 1], [], []>} : vector<8x140xbf16>, vector<140x25xbf16>, vector<8x25xf32> -> vector<8x25xf32>
    %221 = arith.maximumf %217, %220 : vector<8x25xf32>
    %c32_139 = arith.constant 32 : index
    %c0_140 = arith.constant 0 : index
    %c0_141 = arith.constant 0 : index
    %222 = vector.load %arg1[%c32_139, %c0_140, %c0_141] : memref<41x8x140xbf16, #tpu.memory_space<vmem>>, vector<1x8x140xbf16>
    %223 = vector.shape_cast %222 : vector<1x8x140xbf16> to vector<8x140xbf16>
    %cst_142 = arith.constant dense<0.000000e+00> : vector<8x25xf32>
    %224 = tpu.matmul %223, %0, %cst_142 {dimension_numbers = #tpu.dot_dimension_numbers<[1], [0], [0], [1], [0, 0, 1, 1], [], []>} : vector<8x140xbf16>, vector<140x25xbf16>, vector<8x25xf32> -> vector<8x25xf32>
    %225 = arith.maximumf %221, %224 : vector<8x25xf32>
    %226 = vector.broadcast %1 : vector<1x25xf32> to vector<8x25xf32>
    %227 = arith.addf %225, %226 : vector<8x25xf32>
    %cst_143 = arith.constant 0.000000e+00 : f32
    %228 = vector.broadcast %cst_143 : f32 to vector<8x25xf32>
    %229 = arith.cmpf ogt, %227, %228 : vector<8x25xf32>
    %230 = math.exp %227 : vector<8x25xf32>
    %cst_144 = arith.constant 1.000000e+00 : f32
    %231 = vector.broadcast %cst_144 : f32 to vector<8x25xf32>
    %232 = arith.subf %230, %231 : vector<8x25xf32>
    %233 = arith.select %229, %227, %232 : vector<8x25xi1>, vector<8x25xf32>
    %234 = arith.truncf %233 : vector<8x25xf32> to vector<8x25xbf16>
    %c80 = arith.constant 80 : index
    %c0_145 = arith.constant 0 : index
    %235 = vector.load %arg9[%c80, %c0_145] : memref<96x25xbf16, #tpu.memory_space<vmem>>, vector<8x25xbf16>
    tpu.vector_store %arg9[%c80, %c0_145], %234 {strides = array<i32>} : memref<96x25xbf16, #tpu.memory_space<vmem>>, vector<8x25xbf16>,
    %c33 = arith.constant 33 : index
    %c0_146 = arith.constant 0 : index
    %c0_147 = arith.constant 0 : index
    %236 = vector.load %arg1[%c33, %c0_146, %c0_147] : memref<41x8x140xbf16, #tpu.memory_space<vmem>>, vector<1x8x140xbf16>
    %237 = vector.shape_cast %236 : vector<1x8x140xbf16> to vector<8x140xbf16>
    %cst_148 = arith.constant dense<0.000000e+00> : vector<8x25xf32>
    %238 = tpu.matmul %237, %0, %cst_148 {dimension_numbers = #tpu.dot_dimension_numbers<[1], [0], [0], [1], [0, 0, 1, 1], [], []>} : vector<8x140xbf16>, vector<140x25xbf16>, vector<8x25xf32> -> vector<8x25xf32>
    %c34 = arith.constant 34 : index
    %c0_149 = arith.constant 0 : index
    %c0_150 = arith.constant 0 : index
    %239 = vector.load %arg1[%c34, %c0_149, %c0_150] : memref<41x8x140xbf16, #tpu.memory_space<vmem>>, vector<1x8x140xbf16>
    %240 = vector.shape_cast %239 : vector<1x8x140xbf16> to vector<8x140xbf16>
    %cst_151 = arith.constant dense<0.000000e+00> : vector<8x25xf32>
    %241 = tpu.matmul %240, %0, %cst_151 {dimension_numbers = #tpu.dot_dimension_numbers<[1], [0], [0], [1], [0, 0, 1, 1], [], []>} : vector<8x140xbf16>, vector<140x25xbf16>, vector<8x25xf32> -> vector<8x25xf32>
    %242 = arith.maximumf %238, %241 : vector<8x25xf32>
    %c35 = arith.constant 35 : index
    %c0_152 = arith.constant 0 : index
    %c0_153 = arith.constant 0 : index
    %243 = vector.load %arg1[%c35, %c0_152, %c0_153] : memref<41x8x140xbf16, #tpu.memory_space<vmem>>, vector<1x8x140xbf16>
    %244 = vector.shape_cast %243 : vector<1x8x140xbf16> to vector<8x140xbf16>
    %cst_154 = arith.constant dense<0.000000e+00> : vector<8x25xf32>
    %245 = tpu.matmul %244, %0, %cst_154 {dimension_numbers = #tpu.dot_dimension_numbers<[1], [0], [0], [1], [0, 0, 1, 1], [], []>} : vector<8x140xbf16>, vector<140x25xbf16>, vector<8x25xf32> -> vector<8x25xf32>
    %246 = arith.maximumf %242, %245 : vector<8x25xf32>
    %247 = vector.broadcast %1 : vector<1x25xf32> to vector<8x25xf32>
    %248 = arith.addf %246, %247 : vector<8x25xf32>
    %cst_155 = arith.constant 0.000000e+00 : f32
    %249 = vector.broadcast %cst_155 : f32 to vector<8x25xf32>
    %250 = arith.cmpf ogt, %248, %249 : vector<8x25xf32>
    %251 = math.exp %248 : vector<8x25xf32>
    %cst_156 = arith.constant 1.000000e+00 : f32
    %252 = vector.broadcast %cst_156 : f32 to vector<8x25xf32>
    %253 = arith.subf %251, %252 : vector<8x25xf32>
    %254 = arith.select %250, %248, %253 : vector<8x25xi1>, vector<8x25xf32>
    %255 = arith.truncf %254 : vector<8x25xf32> to vector<8x25xbf16>
    %c88 = arith.constant 88 : index
    %c0_157 = arith.constant 0 : index
    %256 = vector.load %arg9[%c88, %c0_157] : memref<96x25xbf16, #tpu.memory_space<vmem>>, vector<8x25xbf16>
    tpu.vector_store %arg9[%c88, %c0_157], %255 {strides = array<i32>} : memref<96x25xbf16, #tpu.memory_space<vmem>>, vector<8x25xbf16>,
    %c0_158 = arith.constant 0 : index
    %c0_159 = arith.constant 0 : index
    %257 = vector.load %arg9[%c0_158, %c0_159] : memref<96x25xbf16, #tpu.memory_space<vmem>>, vector<8x25xbf16>
    %c0_160 = arith.constant 0 : index
    %c0_161 = arith.constant 0 : index
    %c0_162 = arith.constant 0 : index
    %258 = vector.load %arg4[%c0_160, %c0_161, %c0_162] : memref<10x25x50xbf16, #tpu.memory_space<vmem>>, vector<1x25x50xbf16>
    %259 = vector.shape_cast %258 : vector<1x25x50xbf16> to vector<25x50xbf16>
    %cst_163 = arith.constant dense<0.000000e+00> : vector<8x50xf32>
    %260 = tpu.matmul %257, %259, %cst_163 {dimension_numbers = #tpu.dot_dimension_numbers<[1], [0], [0], [1], [0, 0, 1, 1], [], []>} : vector<8x25xbf16>, vector<25x50xbf16>, vector<8x50xf32> -> vector<8x50xf32>
    %c8_164 = arith.constant 8 : index
    %c0_165 = arith.constant 0 : index
    %261 = vector.load %arg9[%c8_164, %c0_165] : memref<96x25xbf16, #tpu.memory_space<vmem>>, vector<8x25xbf16>
    %c1_166 = arith.constant 1 : index
    %c0_167 = arith.constant 0 : index
    %c0_168 = arith.constant 0 : index
    %262 = vector.load %arg4[%c1_166, %c0_167, %c0_168] : memref<10x25x50xbf16, #tpu.memory_space<vmem>>, vector<1x25x50xbf16>
    %263 = vector.shape_cast %262 : vector<1x25x50xbf16> to vector<25x50xbf16>
    %cst_169 = arith.constant dense<0.000000e+00> : vector<8x50xf32>
    %264 = tpu.matmul %261, %263, %cst_169 {dimension_numbers = #tpu.dot_dimension_numbers<[1], [0], [0], [1], [0, 0, 1, 1], [], []>} : vector<8x25xbf16>, vector<25x50xbf16>, vector<8x50xf32> -> vector<8x50xf32>
    %265 = arith.addf %260, %264 : vector<8x50xf32>
    %c16_170 = arith.constant 16 : index
    %c0_171 = arith.constant 0 : index
    %266 = vector.load %arg9[%c16_170, %c0_171] : memref<96x25xbf16, #tpu.memory_space<vmem>>, vector<8x25xbf16>
    %c2_172 = arith.constant 2 : index
    %c0_173 = arith.constant 0 : index
    %c0_174 = arith.constant 0 : index
    %267 = vector.load %arg4[%c2_172, %c0_173, %c0_174] : memref<10x25x50xbf16, #tpu.memory_space<vmem>>, vector<1x25x50xbf16>
    %268 = vector.shape_cast %267 : vector<1x25x50xbf16> to vector<25x50xbf16>
    %cst_175 = arith.constant dense<0.000000e+00> : vector<8x50xf32>
    %269 = tpu.matmul %266, %268, %cst_175 {dimension_numbers = #tpu.dot_dimension_numbers<[1], [0], [0], [1], [0, 0, 1, 1], [], []>} : vector<8x25xbf16>, vector<25x50xbf16>, vector<8x50xf32> -> vector<8x50xf32>
    %270 = arith.addf %265, %269 : vector<8x50xf32>
    %c24_176 = arith.constant 24 : index
    %c0_177 = arith.constant 0 : index
    %271 = vector.load %arg9[%c24_176, %c0_177] : memref<96x25xbf16, #tpu.memory_space<vmem>>, vector<8x25xbf16>
    %c3_178 = arith.constant 3 : index
    %c0_179 = arith.constant 0 : index
    %c0_180 = arith.constant 0 : index
    %272 = vector.load %arg4[%c3_178, %c0_179, %c0_180] : memref<10x25x50xbf16, #tpu.memory_space<vmem>>, vector<1x25x50xbf16>
    %273 = vector.shape_cast %272 : vector<1x25x50xbf16> to vector<25x50xbf16>
    %cst_181 = arith.constant dense<0.000000e+00> : vector<8x50xf32>
    %274 = tpu.matmul %271, %273, %cst_181 {dimension_numbers = #tpu.dot_dimension_numbers<[1], [0], [0], [1], [0, 0, 1, 1], [], []>} : vector<8x25xbf16>, vector<25x50xbf16>, vector<8x50xf32> -> vector<8x50xf32>
    %275 = arith.addf %270, %274 : vector<8x50xf32>
    %c32_182 = arith.constant 32 : index
    %c0_183 = arith.constant 0 : index
    %276 = vector.load %arg9[%c32_182, %c0_183] : memref<96x25xbf16, #tpu.memory_space<vmem>>, vector<8x25xbf16>
    %c4_184 = arith.constant 4 : index
    %c0_185 = arith.constant 0 : index
    %c0_186 = arith.constant 0 : index
    %277 = vector.load %arg4[%c4_184, %c0_185, %c0_186] : memref<10x25x50xbf16, #tpu.memory_space<vmem>>, vector<1x25x50xbf16>
    %278 = vector.shape_cast %277 : vector<1x25x50xbf16> to vector<25x50xbf16>
    %cst_187 = arith.constant dense<0.000000e+00> : vector<8x50xf32>
    %279 = tpu.matmul %276, %278, %cst_187 {dimension_numbers = #tpu.dot_dimension_numbers<[1], [0], [0], [1], [0, 0, 1, 1], [], []>} : vector<8x25xbf16>, vector<25x50xbf16>, vector<8x50xf32> -> vector<8x50xf32>
    %280 = arith.addf %275, %279 : vector<8x50xf32>
    %c40_188 = arith.constant 40 : index
    %c0_189 = arith.constant 0 : index
    %281 = vector.load %arg9[%c40_188, %c0_189] : memref<96x25xbf16, #tpu.memory_space<vmem>>, vector<8x25xbf16>
    %c5_190 = arith.constant 5 : index
    %c0_191 = arith.constant 0 : index
    %c0_192 = arith.constant 0 : index
    %282 = vector.load %arg4[%c5_190, %c0_191, %c0_192] : memref<10x25x50xbf16, #tpu.memory_space<vmem>>, vector<1x25x50xbf16>
    %283 = vector.shape_cast %282 : vector<1x25x50xbf16> to vector<25x50xbf16>
    %cst_193 = arith.constant dense<0.000000e+00> : vector<8x50xf32>
    %284 = tpu.matmul %281, %283, %cst_193 {dimension_numbers = #tpu.dot_dimension_numbers<[1], [0], [0], [1], [0, 0, 1, 1], [], []>} : vector<8x25xbf16>, vector<25x50xbf16>, vector<8x50xf32> -> vector<8x50xf32>
    %285 = arith.addf %280, %284 : vector<8x50xf32>
    %c48_194 = arith.constant 48 : index
    %c0_195 = arith.constant 0 : index
    %286 = vector.load %arg9[%c48_194, %c0_195] : memref<96x25xbf16, #tpu.memory_space<vmem>>, vector<8x25xbf16>
    %c6_196 = arith.constant 6 : index
    %c0_197 = arith.constant 0 : index
    %c0_198 = arith.constant 0 : index
    %287 = vector.load %arg4[%c6_196, %c0_197, %c0_198] : memref<10x25x50xbf16, #tpu.memory_space<vmem>>, vector<1x25x50xbf16>
    %288 = vector.shape_cast %287 : vector<1x25x50xbf16> to vector<25x50xbf16>
    %cst_199 = arith.constant dense<0.000000e+00> : vector<8x50xf32>
    %289 = tpu.matmul %286, %288, %cst_199 {dimension_numbers = #tpu.dot_dimension_numbers<[1], [0], [0], [1], [0, 0, 1, 1], [], []>} : vector<8x25xbf16>, vector<25x50xbf16>, vector<8x50xf32> -> vector<8x50xf32>
    %290 = arith.addf %285, %289 : vector<8x50xf32>
    %c56_200 = arith.constant 56 : index
    %c0_201 = arith.constant 0 : index
    %291 = vector.load %arg9[%c56_200, %c0_201] : memref<96x25xbf16, #tpu.memory_space<vmem>>, vector<8x25xbf16>
    %c7_202 = arith.constant 7 : index
    %c0_203 = arith.constant 0 : index
    %c0_204 = arith.constant 0 : index
    %292 = vector.load %arg4[%c7_202, %c0_203, %c0_204] : memref<10x25x50xbf16, #tpu.memory_space<vmem>>, vector<1x25x50xbf16>
    %293 = vector.shape_cast %292 : vector<1x25x50xbf16> to vector<25x50xbf16>
    %cst_205 = arith.constant dense<0.000000e+00> : vector<8x50xf32>
    %294 = tpu.matmul %291, %293, %cst_205 {dimension_numbers = #tpu.dot_dimension_numbers<[1], [0], [0], [1], [0, 0, 1, 1], [], []>} : vector<8x25xbf16>, vector<25x50xbf16>, vector<8x50xf32> -> vector<8x50xf32>
    %295 = arith.addf %290, %294 : vector<8x50xf32>
    %c64_206 = arith.constant 64 : index
    %c0_207 = arith.constant 0 : index
    %296 = vector.load %arg9[%c64_206, %c0_207] : memref<96x25xbf16, #tpu.memory_space<vmem>>, vector<8x25xbf16>
    %c8_208 = arith.constant 8 : index
    %c0_209 = arith.constant 0 : index
    %c0_210 = arith.constant 0 : index
    %297 = vector.load %arg4[%c8_208, %c0_209, %c0_210] : memref<10x25x50xbf16, #tpu.memory_space<vmem>>, vector<1x25x50xbf16>
    %298 = vector.shape_cast %297 : vector<1x25x50xbf16> to vector<25x50xbf16>
    %cst_211 = arith.constant dense<0.000000e+00> : vector<8x50xf32>
    %299 = tpu.matmul %296, %298, %cst_211 {dimension_numbers = #tpu.dot_dimension_numbers<[1], [0], [0], [1], [0, 0, 1, 1], [], []>} : vector<8x25xbf16>, vector<25x50xbf16>, vector<8x50xf32> -> vector<8x50xf32>
    %300 = arith.addf %295, %299 : vector<8x50xf32>
    %c72_212 = arith.constant 72 : index
    %c0_213 = arith.constant 0 : index
    %301 = vector.load %arg9[%c72_212, %c0_213] : memref<96x25xbf16, #tpu.memory_space<vmem>>, vector<8x25xbf16>
    %c9_214 = arith.constant 9 : index
    %c0_215 = arith.constant 0 : index
    %c0_216 = arith.constant 0 : index
    %302 = vector.load %arg4[%c9_214, %c0_215, %c0_216] : memref<10x25x50xbf16, #tpu.memory_space<vmem>>, vector<1x25x50xbf16>
    %303 = vector.shape_cast %302 : vector<1x25x50xbf16> to vector<25x50xbf16>
    %cst_217 = arith.constant dense<0.000000e+00> : vector<8x50xf32>
    %304 = tpu.matmul %301, %303, %cst_217 {dimension_numbers = #tpu.dot_dimension_numbers<[1], [0], [0], [1], [0, 0, 1, 1], [], []>} : vector<8x25xbf16>, vector<25x50xbf16>, vector<8x50xf32> -> vector<8x50xf32>
    %305 = arith.addf %300, %304 : vector<8x50xf32>
    %c8_218 = arith.constant 8 : index
    %c0_219 = arith.constant 0 : index
    %306 = vector.load %arg9[%c8_218, %c0_219] : memref<96x25xbf16, #tpu.memory_space<vmem>>, vector<8x25xbf16>
    %c0_220 = arith.constant 0 : index
    %c0_221 = arith.constant 0 : index
    %c0_222 = arith.constant 0 : index
    %307 = vector.load %arg4[%c0_220, %c0_221, %c0_222] : memref<10x25x50xbf16, #tpu.memory_space<vmem>>, vector<1x25x50xbf16>
    %308 = vector.shape_cast %307 : vector<1x25x50xbf16> to vector<25x50xbf16>
    %cst_223 = arith.constant dense<0.000000e+00> : vector<8x50xf32>
    %309 = tpu.matmul %306, %308, %cst_223 {dimension_numbers = #tpu.dot_dimension_numbers<[1], [0], [0], [1], [0, 0, 1, 1], [], []>} : vector<8x25xbf16>, vector<25x50xbf16>, vector<8x50xf32> -> vector<8x50xf32>
    %c16_224 = arith.constant 16 : index
    %c0_225 = arith.constant 0 : index
    %310 = vector.load %arg9[%c16_224, %c0_225] : memref<96x25xbf16, #tpu.memory_space<vmem>>, vector<8x25xbf16>
    %c1_226 = arith.constant 1 : index
    %c0_227 = arith.constant 0 : index
    %c0_228 = arith.constant 0 : index
    %311 = vector.load %arg4[%c1_226, %c0_227, %c0_228] : memref<10x25x50xbf16, #tpu.memory_space<vmem>>, vector<1x25x50xbf16>
    %312 = vector.shape_cast %311 : vector<1x25x50xbf16> to vector<25x50xbf16>
    %cst_229 = arith.constant dense<0.000000e+00> : vector<8x50xf32>
    %313 = tpu.matmul %310, %312, %cst_229 {dimension_numbers = #tpu.dot_dimension_numbers<[1], [0], [0], [1], [0, 0, 1, 1], [], []>} : vector<8x25xbf16>, vector<25x50xbf16>, vector<8x50xf32> -> vector<8x50xf32>
    %314 = arith.addf %309, %313 : vector<8x50xf32>
    %c24_230 = arith.constant 24 : index
    %c0_231 = arith.constant 0 : index
    %315 = vector.load %arg9[%c24_230, %c0_231] : memref<96x25xbf16, #tpu.memory_space<vmem>>, vector<8x25xbf16>
    %c2_232 = arith.constant 2 : index
    %c0_233 = arith.constant 0 : index
    %c0_234 = arith.constant 0 : index
    %316 = vector.load %arg4[%c2_232, %c0_233, %c0_234] : memref<10x25x50xbf16, #tpu.memory_space<vmem>>, vector<1x25x50xbf16>
    %317 = vector.shape_cast %316 : vector<1x25x50xbf16> to vector<25x50xbf16>
    %cst_235 = arith.constant dense<0.000000e+00> : vector<8x50xf32>
    %318 = tpu.matmul %315, %317, %cst_235 {dimension_numbers = #tpu.dot_dimension_numbers<[1], [0], [0], [1], [0, 0, 1, 1], [], []>} : vector<8x25xbf16>, vector<25x50xbf16>, vector<8x50xf32> -> vector<8x50xf32>
    %319 = arith.addf %314, %318 : vector<8x50xf32>
    %c32_236 = arith.constant 32 : index
    %c0_237 = arith.constant 0 : index
    %320 = vector.load %arg9[%c32_236, %c0_237] : memref<96x25xbf16, #tpu.memory_space<vmem>>, vector<8x25xbf16>
    %c3_238 = arith.constant 3 : index
    %c0_239 = arith.constant 0 : index
    %c0_240 = arith.constant 0 : index
    %321 = vector.load %arg4[%c3_238, %c0_239, %c0_240] : memref<10x25x50xbf16, #tpu.memory_space<vmem>>, vector<1x25x50xbf16>
    %322 = vector.shape_cast %321 : vector<1x25x50xbf16> to vector<25x50xbf16>
    %cst_241 = arith.constant dense<0.000000e+00> : vector<8x50xf32>
    %323 = tpu.matmul %320, %322, %cst_241 {dimension_numbers = #tpu.dot_dimension_numbers<[1], [0], [0], [1], [0, 0, 1, 1], [], []>} : vector<8x25xbf16>, vector<25x50xbf16>, vector<8x50xf32> -> vector<8x50xf32>
    %324 = arith.addf %319, %323 : vector<8x50xf32>
    %c40_242 = arith.constant 40 : index
    %c0_243 = arith.constant 0 : index
    %325 = vector.load %arg9[%c40_242, %c0_243] : memref<96x25xbf16, #tpu.memory_space<vmem>>, vector<8x25xbf16>
    %c4_244 = arith.constant 4 : index
    %c0_245 = arith.constant 0 : index
    %c0_246 = arith.constant 0 : index
    %326 = vector.load %arg4[%c4_244, %c0_245, %c0_246] : memref<10x25x50xbf16, #tpu.memory_space<vmem>>, vector<1x25x50xbf16>
    %327 = vector.shape_cast %326 : vector<1x25x50xbf16> to vector<25x50xbf16>
    %cst_247 = arith.constant dense<0.000000e+00> : vector<8x50xf32>
    %328 = tpu.matmul %325, %327, %cst_247 {dimension_numbers = #tpu.dot_dimension_numbers<[1], [0], [0], [1], [0, 0, 1, 1], [], []>} : vector<8x25xbf16>, vector<25x50xbf16>, vector<8x50xf32> -> vector<8x50xf32>
    %329 = arith.addf %324, %328 : vector<8x50xf32>
    %c48_248 = arith.constant 48 : index
    %c0_249 = arith.constant 0 : index
    %330 = vector.load %arg9[%c48_248, %c0_249] : memref<96x25xbf16, #tpu.memory_space<vmem>>, vector<8x25xbf16>
    %c5_250 = arith.constant 5 : index
    %c0_251 = arith.constant 0 : index
    %c0_252 = arith.constant 0 : index
    %331 = vector.load %arg4[%c5_250, %c0_251, %c0_252] : memref<10x25x50xbf16, #tpu.memory_space<vmem>>, vector<1x25x50xbf16>
    %332 = vector.shape_cast %331 : vector<1x25x50xbf16> to vector<25x50xbf16>
    %cst_253 = arith.constant dense<0.000000e+00> : vector<8x50xf32>
    %333 = tpu.matmul %330, %332, %cst_253 {dimension_numbers = #tpu.dot_dimension_numbers<[1], [0], [0], [1], [0, 0, 1, 1], [], []>} : vector<8x25xbf16>, vector<25x50xbf16>, vector<8x50xf32> -> vector<8x50xf32>
    %334 = arith.addf %329, %333 : vector<8x50xf32>
    %c56_254 = arith.constant 56 : index
    %c0_255 = arith.constant 0 : index
    %335 = vector.load %arg9[%c56_254, %c0_255] : memref<96x25xbf16, #tpu.memory_space<vmem>>, vector<8x25xbf16>
    %c6_256 = arith.constant 6 : index
    %c0_257 = arith.constant 0 : index
    %c0_258 = arith.constant 0 : index
    %336 = vector.load %arg4[%c6_256, %c0_257, %c0_258] : memref<10x25x50xbf16, #tpu.memory_space<vmem>>, vector<1x25x50xbf16>
    %337 = vector.shape_cast %336 : vector<1x25x50xbf16> to vector<25x50xbf16>
    %cst_259 = arith.constant dense<0.000000e+00> : vector<8x50xf32>
    %338 = tpu.matmul %335, %337, %cst_259 {dimension_numbers = #tpu.dot_dimension_numbers<[1], [0], [0], [1], [0, 0, 1, 1], [], []>} : vector<8x25xbf16>, vector<25x50xbf16>, vector<8x50xf32> -> vector<8x50xf32>
    %339 = arith.addf %334, %338 : vector<8x50xf32>
    %c64_260 = arith.constant 64 : index
    %c0_261 = arith.constant 0 : index
    %340 = vector.load %arg9[%c64_260, %c0_261] : memref<96x25xbf16, #tpu.memory_space<vmem>>, vector<8x25xbf16>
    %c7_262 = arith.constant 7 : index
    %c0_263 = arith.constant 0 : index
    %c0_264 = arith.constant 0 : index
    %341 = vector.load %arg4[%c7_262, %c0_263, %c0_264] : memref<10x25x50xbf16, #tpu.memory_space<vmem>>, vector<1x25x50xbf16>
    %342 = vector.shape_cast %341 : vector<1x25x50xbf16> to vector<25x50xbf16>
    %cst_265 = arith.constant dense<0.000000e+00> : vector<8x50xf32>
    %343 = tpu.matmul %340, %342, %cst_265 {dimension_numbers = #tpu.dot_dimension_numbers<[1], [0], [0], [1], [0, 0, 1, 1], [], []>} : vector<8x25xbf16>, vector<25x50xbf16>, vector<8x50xf32> -> vector<8x50xf32>
    %344 = arith.addf %339, %343 : vector<8x50xf32>
    %c72_266 = arith.constant 72 : index
    %c0_267 = arith.constant 0 : index
    %345 = vector.load %arg9[%c72_266, %c0_267] : memref<96x25xbf16, #tpu.memory_space<vmem>>, vector<8x25xbf16>
    %c8_268 = arith.constant 8 : index
    %c0_269 = arith.constant 0 : index
    %c0_270 = arith.constant 0 : index
    %346 = vector.load %arg4[%c8_268, %c0_269, %c0_270] : memref<10x25x50xbf16, #tpu.memory_space<vmem>>, vector<1x25x50xbf16>
    %347 = vector.shape_cast %346 : vector<1x25x50xbf16> to vector<25x50xbf16>
    %cst_271 = arith.constant dense<0.000000e+00> : vector<8x50xf32>
    %348 = tpu.matmul %345, %347, %cst_271 {dimension_numbers = #tpu.dot_dimension_numbers<[1], [0], [0], [1], [0, 0, 1, 1], [], []>} : vector<8x25xbf16>, vector<25x50xbf16>, vector<8x50xf32> -> vector<8x50xf32>
    %349 = arith.addf %344, %348 : vector<8x50xf32>
    %c80_272 = arith.constant 80 : index
    %c0_273 = arith.constant 0 : index
    %350 = vector.load %arg9[%c80_272, %c0_273] : memref<96x25xbf16, #tpu.memory_space<vmem>>, vector<8x25xbf16>
    %c9_274 = arith.constant 9 : index
    %c0_275 = arith.constant 0 : index
    %c0_276 = arith.constant 0 : index
    %351 = vector.load %arg4[%c9_274, %c0_275, %c0_276] : memref<10x25x50xbf16, #tpu.memory_space<vmem>>, vector<1x25x50xbf16>
    %352 = vector.shape_cast %351 : vector<1x25x50xbf16> to vector<25x50xbf16>
    %cst_277 = arith.constant dense<0.000000e+00> : vector<8x50xf32>
    %353 = tpu.matmul %350, %352, %cst_277 {dimension_numbers = #tpu.dot_dimension_numbers<[1], [0], [0], [1], [0, 0, 1, 1], [], []>} : vector<8x25xbf16>, vector<25x50xbf16>, vector<8x50xf32> -> vector<8x50xf32>
    %354 = arith.addf %349, %353 : vector<8x50xf32>
    %355 = arith.maximumf %305, %354 : vector<8x50xf32>
    %c16_278 = arith.constant 16 : index
    %c0_279 = arith.constant 0 : index
    %356 = vector.load %arg9[%c16_278, %c0_279] : memref<96x25xbf16, #tpu.memory_space<vmem>>, vector<8x25xbf16>
    %c0_280 = arith.constant 0 : index
    %c0_281 = arith.constant 0 : index
    %c0_282 = arith.constant 0 : index
    %357 = vector.load %arg4[%c0_280, %c0_281, %c0_282] : memref<10x25x50xbf16, #tpu.memory_space<vmem>>, vector<1x25x50xbf16>
    %358 = vector.shape_cast %357 : vector<1x25x50xbf16> to vector<25x50xbf16>
    %cst_283 = arith.constant dense<0.000000e+00> : vector<8x50xf32>
    %359 = tpu.matmul %356, %358, %cst_283 {dimension_numbers = #tpu.dot_dimension_numbers<[1], [0], [0], [1], [0, 0, 1, 1], [], []>} : vector<8x25xbf16>, vector<25x50xbf16>, vector<8x50xf32> -> vector<8x50xf32>
    %c24_284 = arith.constant 24 : index
    %c0_285 = arith.constant 0 : index
    %360 = vector.load %arg9[%c24_284, %c0_285] : memref<96x25xbf16, #tpu.memory_space<vmem>>, vector<8x25xbf16>
    %c1_286 = arith.constant 1 : index
    %c0_287 = arith.constant 0 : index
    %c0_288 = arith.constant 0 : index
    %361 = vector.load %arg4[%c1_286, %c0_287, %c0_288] : memref<10x25x50xbf16, #tpu.memory_space<vmem>>, vector<1x25x50xbf16>
    %362 = vector.shape_cast %361 : vector<1x25x50xbf16> to vector<25x50xbf16>
    %cst_289 = arith.constant dense<0.000000e+00> : vector<8x50xf32>
    %363 = tpu.matmul %360, %362, %cst_289 {dimension_numbers = #tpu.dot_dimension_numbers<[1], [0], [0], [1], [0, 0, 1, 1], [], []>} : vector<8x25xbf16>, vector<25x50xbf16>, vector<8x50xf32> -> vector<8x50xf32>
    %364 = arith.addf %359, %363 : vector<8x50xf32>
    %c32_290 = arith.constant 32 : index
    %c0_291 = arith.constant 0 : index
    %365 = vector.load %arg9[%c32_290, %c0_291] : memref<96x25xbf16, #tpu.memory_space<vmem>>, vector<8x25xbf16>
    %c2_292 = arith.constant 2 : index
    %c0_293 = arith.constant 0 : index
    %c0_294 = arith.constant 0 : index
    %366 = vector.load %arg4[%c2_292, %c0_293, %c0_294] : memref<10x25x50xbf16, #tpu.memory_space<vmem>>, vector<1x25x50xbf16>
    %367 = vector.shape_cast %366 : vector<1x25x50xbf16> to vector<25x50xbf16>
    %cst_295 = arith.constant dense<0.000000e+00> : vector<8x50xf32>
    %368 = tpu.matmul %365, %367, %cst_295 {dimension_numbers = #tpu.dot_dimension_numbers<[1], [0], [0], [1], [0, 0, 1, 1], [], []>} : vector<8x25xbf16>, vector<25x50xbf16>, vector<8x50xf32> -> vector<8x50xf32>
    %369 = arith.addf %364, %368 : vector<8x50xf32>
    %c40_296 = arith.constant 40 : index
    %c0_297 = arith.constant 0 : index
    %370 = vector.load %arg9[%c40_296, %c0_297] : memref<96x25xbf16, #tpu.memory_space<vmem>>, vector<8x25xbf16>
    %c3_298 = arith.constant 3 : index
    %c0_299 = arith.constant 0 : index
    %c0_300 = arith.constant 0 : index
    %371 = vector.load %arg4[%c3_298, %c0_299, %c0_300] : memref<10x25x50xbf16, #tpu.memory_space<vmem>>, vector<1x25x50xbf16>
    %372 = vector.shape_cast %371 : vector<1x25x50xbf16> to vector<25x50xbf16>
    %cst_301 = arith.constant dense<0.000000e+00> : vector<8x50xf32>
    %373 = tpu.matmul %370, %372, %cst_301 {dimension_numbers = #tpu.dot_dimension_numbers<[1], [0], [0], [1], [0, 0, 1, 1], [], []>} : vector<8x25xbf16>, vector<25x50xbf16>, vector<8x50xf32> -> vector<8x50xf32>
    %374 = arith.addf %369, %373 : vector<8x50xf32>
    %c48_302 = arith.constant 48 : index
    %c0_303 = arith.constant 0 : index
    %375 = vector.load %arg9[%c48_302, %c0_303] : memref<96x25xbf16, #tpu.memory_space<vmem>>, vector<8x25xbf16>
    %c4_304 = arith.constant 4 : index
    %c0_305 = arith.constant 0 : index
    %c0_306 = arith.constant 0 : index
    %376 = vector.load %arg4[%c4_304, %c0_305, %c0_306] : memref<10x25x50xbf16, #tpu.memory_space<vmem>>, vector<1x25x50xbf16>
    %377 = vector.shape_cast %376 : vector<1x25x50xbf16> to vector<25x50xbf16>
    %cst_307 = arith.constant dense<0.000000e+00> : vector<8x50xf32>
    %378 = tpu.matmul %375, %377, %cst_307 {dimension_numbers = #tpu.dot_dimension_numbers<[1], [0], [0], [1], [0, 0, 1, 1], [], []>} : vector<8x25xbf16>, vector<25x50xbf16>, vector<8x50xf32> -> vector<8x50xf32>
    %379 = arith.addf %374, %378 : vector<8x50xf32>
    %c56_308 = arith.constant 56 : index
    %c0_309 = arith.constant 0 : index
    %380 = vector.load %arg9[%c56_308, %c0_309] : memref<96x25xbf16, #tpu.memory_space<vmem>>, vector<8x25xbf16>
    %c5_310 = arith.constant 5 : index
    %c0_311 = arith.constant 0 : index
    %c0_312 = arith.constant 0 : index
    %381 = vector.load %arg4[%c5_310, %c0_311, %c0_312] : memref<10x25x50xbf16, #tpu.memory_space<vmem>>, vector<1x25x50xbf16>
    %382 = vector.shape_cast %381 : vector<1x25x50xbf16> to vector<25x50xbf16>
    %cst_313 = arith.constant dense<0.000000e+00> : vector<8x50xf32>
    %383 = tpu.matmul %380, %382, %cst_313 {dimension_numbers = #tpu.dot_dimension_numbers<[1], [0], [0], [1], [0, 0, 1, 1], [], []>} : vector<8x25xbf16>, vector<25x50xbf16>, vector<8x50xf32> -> vector<8x50xf32>
    %384 = arith.addf %379, %383 : vector<8x50xf32>
    %c64_314 = arith.constant 64 : index
    %c0_315 = arith.constant 0 : index
    %385 = vector.load %arg9[%c64_314, %c0_315] : memref<96x25xbf16, #tpu.memory_space<vmem>>, vector<8x25xbf16>
    %c6_316 = arith.constant 6 : index
    %c0_317 = arith.constant 0 : index
    %c0_318 = arith.constant 0 : index
    %386 = vector.load %arg4[%c6_316, %c0_317, %c0_318] : memref<10x25x50xbf16, #tpu.memory_space<vmem>>, vector<1x25x50xbf16>
    %387 = vector.shape_cast %386 : vector<1x25x50xbf16> to vector<25x50xbf16>
    %cst_319 = arith.constant dense<0.000000e+00> : vector<8x50xf32>
    %388 = tpu.matmul %385, %387, %cst_319 {dimension_numbers = #tpu.dot_dimension_numbers<[1], [0], [0], [1], [0, 0, 1, 1], [], []>} : vector<8x25xbf16>, vector<25x50xbf16>, vector<8x50xf32> -> vector<8x50xf32>
    %389 = arith.addf %384, %388 : vector<8x50xf32>
    %c72_320 = arith.constant 72 : index
    %c0_321 = arith.constant 0 : index
    %390 = vector.load %arg9[%c72_320, %c0_321] : memref<96x25xbf16, #tpu.memory_space<vmem>>, vector<8x25xbf16>
    %c7_322 = arith.constant 7 : index
    %c0_323 = arith.constant 0 : index
    %c0_324 = arith.constant 0 : index
    %391 = vector.load %arg4[%c7_322, %c0_323, %c0_324] : memref<10x25x50xbf16, #tpu.memory_space<vmem>>, vector<1x25x50xbf16>
    %392 = vector.shape_cast %391 : vector<1x25x50xbf16> to vector<25x50xbf16>
    %cst_325 = arith.constant dense<0.000000e+00> : vector<8x50xf32>
    %393 = tpu.matmul %390, %392, %cst_325 {dimension_numbers = #tpu.dot_dimension_numbers<[1], [0], [0], [1], [0, 0, 1, 1], [], []>} : vector<8x25xbf16>, vector<25x50xbf16>, vector<8x50xf32> -> vector<8x50xf32>
    %394 = arith.addf %389, %393 : vector<8x50xf32>
    %c80_326 = arith.constant 80 : index
    %c0_327 = arith.constant 0 : index
    %395 = vector.load %arg9[%c80_326, %c0_327] : memref<96x25xbf16, #tpu.memory_space<vmem>>, vector<8x25xbf16>
    %c8_328 = arith.constant 8 : index
    %c0_329 = arith.constant 0 : index
    %c0_330 = arith.constant 0 : index
    %396 = vector.load %arg4[%c8_328, %c0_329, %c0_330] : memref<10x25x50xbf16, #tpu.memory_space<vmem>>, vector<1x25x50xbf16>
    %397 = vector.shape_cast %396 : vector<1x25x50xbf16> to vector<25x50xbf16>
    %cst_331 = arith.constant dense<0.000000e+00> : vector<8x50xf32>
    %398 = tpu.matmul %395, %397, %cst_331 {dimension_numbers = #tpu.dot_dimension_numbers<[1], [0], [0], [1], [0, 0, 1, 1], [], []>} : vector<8x25xbf16>, vector<25x50xbf16>, vector<8x50xf32> -> vector<8x50xf32>
    %399 = arith.addf %394, %398 : vector<8x50xf32>
    %c88_332 = arith.constant 88 : index
    %c0_333 = arith.constant 0 : index
    %400 = vector.load %arg9[%c88_332, %c0_333] : memref<96x25xbf16, #tpu.memory_space<vmem>>, vector<8x25xbf16>
    %c9_334 = arith.constant 9 : index
    %c0_335 = arith.constant 0 : index
    %c0_336 = arith.constant 0 : index
    %401 = vector.load %arg4[%c9_334, %c0_335, %c0_336] : memref<10x25x50xbf16, #tpu.memory_space<vmem>>, vector<1x25x50xbf16>
    %402 = vector.shape_cast %401 : vector<1x25x50xbf16> to vector<25x50xbf16>
    %cst_337 = arith.constant dense<0.000000e+00> : vector<8x50xf32>
    %403 = tpu.matmul %400, %402, %cst_337 {dimension_numbers = #tpu.dot_dimension_numbers<[1], [0], [0], [1], [0, 0, 1, 1], [], []>} : vector<8x25xbf16>, vector<25x50xbf16>, vector<8x50xf32> -> vector<8x50xf32>
    %404 = arith.addf %399, %403 : vector<8x50xf32>
    %405 = arith.maximumf %355, %404 : vector<8x50xf32>
    %406 = vector.broadcast %2 : vector<1x50xf32> to vector<8x50xf32>
    %407 = arith.addf %405, %406 : vector<8x50xf32>
    %cst_338 = arith.constant 0.000000e+00 : f32
    %408 = vector.broadcast %cst_338 : f32 to vector<8x50xf32>
    %409 = arith.cmpf ogt, %407, %408 : vector<8x50xf32>
    %410 = math.exp %407 : vector<8x50xf32>
    %cst_339 = arith.constant 1.000000e+00 : f32
    %411 = vector.broadcast %cst_339 : f32 to vector<8x50xf32>
    %412 = arith.subf %410, %411 : vector<8x50xf32>
    %413 = arith.select %409, %407, %412 : vector<8x50xi1>, vector<8x50xf32>
    %414 = arith.truncf %413 : vector<8x50xf32> to vector<8x50xbf16>
    %cst_340 = arith.constant dense<0.000000e+00> : vector<8x128xf32>
    %415 = tpu.matmul %414, %3, %cst_340 {dimension_numbers = #tpu.dot_dimension_numbers<[1], [0], [0], [1], [0, 0, 1, 1], [], []>} : vector<8x50xbf16>, vector<50x128xbf16>, vector<8x128xf32> -> vector<8x128xf32>
    %416 = vector.broadcast %4 : vector<1x128xf32> to vector<8x128xf32>
    %417 = arith.addf %415, %416 : vector<8x128xf32>
    %c0_341 = arith.constant 0 : index
    %c0_342 = arith.constant 0 : index
    %418 = vector.load %arg8[%c0_341, %c0_342] : memref<8x128xf32, #tpu.memory_space<vmem>>, vector<8x128xf32>
    tpu.vector_store %arg8[%c0_341, %c0_342], %417 {strides = array<i32>} : memref<8x128xf32, #tpu.memory_space<vmem>>, vector<8x128xf32>,
    return
  }
  func.func @transform_0(%arg0: i32) -> (i32, i32, i32) {
    %c0_i32 = arith.constant 0 : i32
    %c0_i32_0 = arith.constant 0 : i32
    %c0_i32_1 = arith.constant 0 : i32
    return %c0_i32, %arg0, %c0_i32_0 : i32, i32, i32
  }
  func.func @transform_1(%arg0: i32) -> (i32, i32) {
    %c0_i32 = arith.constant 0 : i32
    %c0_i32_0 = arith.constant 0 : i32
    %c0_i32_1 = arith.constant 0 : i32
    return %c0_i32, %c0_i32_0 : i32, i32
  }
  func.func @transform_2(%arg0: i32) -> (i32, i32) {
    %c0_i32 = arith.constant 0 : i32
    %c0_i32_0 = arith.constant 0 : i32
    %c0_i32_1 = arith.constant 0 : i32
    return %c0_i32, %c0_i32_0 : i32, i32
  }
  func.func @transform_3(%arg0: i32) -> (i32, i32, i32) {
    %c0_i32 = arith.constant 0 : i32
    %c0_i32_0 = arith.constant 0 : i32
    %c0_i32_1 = arith.constant 0 : i32
    %c0_i32_2 = arith.constant 0 : i32
    return %c0_i32, %c0_i32_0, %c0_i32_1 : i32, i32, i32
  }
  func.func @transform_4(%arg0: i32) -> (i32, i32) {
    %c0_i32 = arith.constant 0 : i32
    %c0_i32_0 = arith.constant 0 : i32
    %c0_i32_1 = arith.constant 0 : i32
    return %c0_i32, %c0_i32_0 : i32, i32
  }
  func.func @transform_5(%arg0: i32) -> (i32, i32) {
    %c0_i32 = arith.constant 0 : i32
    %c0_i32_0 = arith.constant 0 : i32
    %c0_i32_1 = arith.constant 0 : i32
    return %c0_i32, %c0_i32_0 : i32, i32
  }
  func.func @transform_6(%arg0: i32) -> (i32, i32) {
    %c0_i32 = arith.constant 0 : i32
    %c0_i32_0 = arith.constant 0 : i32
    %c0_i32_1 = arith.constant 0 : i32
    return %c0_i32, %c0_i32_0 : i32, i32
  }
  func.func @transform_7(%arg0: i32) -> (i32, i32) {
    %c0_i32 = arith.constant 0 : i32
    %c0_i32_0 = arith.constant 0 : i32
    return %arg0, %c0_i32 : i32, i32
  }
}

</mosaic_0001>

<llo_original>
// kernel: deepconvnet_forward.1
$region0: #{deepconvnet_forward.1}
  #allocation0 [shape = 'u32[]', space=smem, size = 0x4, offset = 0x4, fixed_abs, tag = 'smem constant byte address 0x4 - core index']
  #allocation1 [shape = 'u32[144,128]{1,0:T(1,128)}', space=vmem, size = 0x12000, scoped, tag = 'internal scratch']
  #allocation2 [shape = 'bf16[96,25]{1,0:T(8,128)(2,1)}', space=vmem, size = 0x6000, scoped, tag = 'scratch operand']
  %s0 = inlined_call_operand.vmem [shape: bf16[41,8,140], index: 0, kind: input, shape index: {}]
  %s1 = inlined_call_operand.vmem [shape: bf16[140,25], index: 1, kind: input, shape index: {}]
  %s2 = inlined_call_operand.vmem [shape: f32[1,25], index: 2, kind: input, shape index: {}]
  %s3 = inlined_call_operand.vmem [shape: bf16[10,25,50], index: 3, kind: input, shape index: {}]
  %s4 = inlined_call_operand.vmem [shape: f32[1,50], index: 4, kind: input, shape index: {}]
  %s5 = inlined_call_operand.vmem [shape: bf16[50,128], index: 5, kind: input, shape index: {}]
  %s6 = inlined_call_operand.vmem [shape: f32[1,128], index: 6, kind: input, shape index: {}]
  %s7 = inlined_call_operand.vmem [shape: f32[8,128], index: 7, kind: output, shape index: {}]
  %s8 = sld [smem:[#allocation0]]
  $region38: #{deepconvnet_forward.1} parent=0
    _
  %s10 = ssub.s32 1, %s8
  %s11 = scalar_select 0, %s10, %s8
  // Predicated region
  $region2: #{deepconvnet_forward.1} parent=0 // pred_check
    _
  $region3: #{deepconvnet_forward.1} parent=0 // pred_check_branch
    %13 = sbr.rel (0) target = $region5
  $region4: #{deepconvnet_forward.1} parent=0 // pred_region
    _
  $region5: #{deepconvnet_forward.1} parent=0 // pred_fallthru
    _
  // Predicated region
  $region6: #{deepconvnet_forward.1} parent=0 // pred_check
    _
  $region7: #{deepconvnet_forward.1} parent=0 // pred_check_branch
    %15 = sbr.rel (0) target = $region9
  $region8: #{deepconvnet_forward.1} parent=0 // pred_region
    _
  $region9: #{deepconvnet_forward.1} parent=0 // pred_fallthru
    _
  // Predicated region
  $region10: #{deepconvnet_forward.1} parent=0 // pred_check
    _
  $region11: #{deepconvnet_forward.1} parent=0 // pred_check_branch
    %17 = sbr.rel (0) target = $region13
  $region12: #{deepconvnet_forward.1} parent=0 // pred_region
    _
  $region13: #{deepconvnet_forward.1} parent=0 // pred_fallthru
    _
  // Predicated region
  $region14: #{deepconvnet_forward.1} parent=0 // pred_check
    _
  $region15: #{deepconvnet_forward.1} parent=0 // pred_check_branch
    %19 = sbr.rel (0) target = $region17
  $region16: #{deepconvnet_forward.1} parent=0 // pred_region
    _
  $region17: #{deepconvnet_forward.1} parent=0 // pred_fallthru
    _
  // Predicated region
  $region18: #{deepconvnet_forward.1} parent=0 // pred_check
    _
  $region19: #{deepconvnet_forward.1} parent=0 // pred_check_branch
    %21 = sbr.rel (0) target = $region21
  $region20: #{deepconvnet_forward.1} parent=0 // pred_region
    _
  $region21: #{deepconvnet_forward.1} parent=0 // pred_fallthru
    _
  // Predicated region
  $region22: #{deepconvnet_forward.1} parent=0 // pred_check
    _
  $region23: #{deepconvnet_forward.1} parent=0 // pred_check_branch
    %23 = sbr.rel (0) target = $region25
  $region24: #{deepconvnet_forward.1} parent=0 // pred_region
    _
  $region25: #{deepconvnet_forward.1} parent=0 // pred_fallthru
    _
  // Predicated region
  $region26: #{deepconvnet_forward.1} parent=0 // pred_check
    _
  $region27: #{deepconvnet_forward.1} parent=0 // pred_check_branch
    %25 = sbr.rel (0) target = $region29
  $region28: #{deepconvnet_forward.1} parent=0 // pred_region
    _
  $region29: #{deepconvnet_forward.1} parent=0 // pred_fallthru
    _
  %v27 = vld [vmem:[%s1] sm:$0xf]
  %v28 = vld [vmem:[%s1 + $0x4] sm:$0xf]
  %v29 = vld [vmem:[%s1 + $0x8] sm:$0xf]
  %v30 = vld [vmem:[%s1 + $0xc] sm:$0xf]
  %v31 = vld [vmem:[%s1 + $0x10] sm:$0xf]
  %v32 = vld [vmem:[%s1 + $0x14] sm:$0xf]
  %v33 = vld [vmem:[%s1 + $0x18] sm:$0xf]
  %v34 = vld [vmem:[%s1 + $0x1c] sm:$0xf]
  %v35 = vld [vmem:[%s1 + $0x20] sm:$0xf]
  %v36 = vld [vmem:[%s1 + $0x24] sm:$0xf]
  %v37 = vld [vmem:[%s1 + $0x28] sm:$0xf]
  %v38 = vld [vmem:[%s1 + $0x2c] sm:$0xf]
  %v39 = vld [vmem:[%s1 + $0x30] sm:$0xf]
  %v40 = vld [vmem:[%s1 + $0x34] sm:$0xf]
  %v41 = vld [vmem:[%s1 + $0x38] sm:$0xf]
  %v42 = vld [vmem:[%s1 + $0x3c] sm:$0xf]
  %v43 = vld [vmem:[%s1 + $0x40] sm:$0xf]
  %v44 = vld [vmem:[%s1 + $0x44] sm:$0x3]
  %v45 = vld [vmem:[%s2] sm:$0x1]
  %v46 = vld [vmem:[%s4] sm:$0x1]
  %v47 = vld [vmem:[%s5] sm:$0xf]
  %v48 = vld [vmem:[%s5 + $0x4] sm:$0xf]
  %v49 = vld [vmem:[%s5 + $0x8] sm:$0xf]
  %v50 = vld [vmem:[%s5 + $0xc] sm:$0xf]
  %v51 = vld [vmem:[%s5 + $0x10] sm:$0xf]
  %v52 = vld [vmem:[%s5 + $0x14] sm:$0xf]
  %v53 = vld [vmem:[%s5 + $0x18] sm:$0x1]
  %v54 = vld [vmem:[%s6] sm:$0x1]
  %v55 = vld [vmem:[%s0] sm:$0xff]
  %v57 = vunpack.c.l.b16 %v55
  %v58 = vunpack.c.h.b16 %v55
  %v59 = vpack.c.b16 %v57, %v57
  %v60 = vpack.c.b16 %v58, %v58
  %v80 = vunpack.c.l.b16 %v27
  %v81 = vunpack.c.l.b16 %v28
  %v82 = vunpack.c.l.b16 %v29
  %v83 = vunpack.c.l.b16 %v30
  %v84 = vunpack.c.l.b16 %v31
  %v85 = vunpack.c.l.b16 %v32
  %v86 = vunpack.c.l.b16 %v33
  %v87 = vunpack.c.l.b16 %v34
  %v88 = vunpack.c.l.b16 %v35
  %v89 = vunpack.c.l.b16 %v36
  %v90 = vunpack.c.l.b16 %v37
  %v91 = vunpack.c.l.b16 %v38
  %v92 = vunpack.c.l.b16 %v39
  %v93 = vunpack.c.l.b16 %v40
  %v94 = vunpack.c.l.b16 %v41
  %v95 = vunpack.c.l.b16 %v42
  %v96 = vunpack.c.l.b16 %v43
  %v97 = vunpack.c.l.b16 %v44
  %v98 = vpack.c.b16 %v81, %v80
  %v99 = vpack.c.b16 %v83, %v82
  %v100 = vpack.c.b16 %v85, %v84
  %v101 = vpack.c.b16 %v87, %v86
  %v102 = vpack.c.b16 %v89, %v88
  %v103 = vpack.c.b16 %v91, %v90
  %v104 = vpack.c.b16 %v93, %v92
  %v105 = vpack.c.b16 %v95, %v94
  %v106 = vpack.c.b16 %v97, %v96
  %vm115 = vcmask 97280
  %v117 = vsel %vm115, %v60, 0
  %vm119 = vcmask 1045504
  %v121 = vsel %vm119, %v106, 0
  %123 = vmatprep.subr.bf16.mxu0 0
  %124 = vmatpush1.bf16.msra.mxu0 %v105
  %125 = vmatprep.subr.bf16.mxu0 0
  %126 = vmatpush1.bf16.msra.mxu0 %v104
  %127 = vmatprep.subr.bf16.mxu0 0
  %128 = vmatpush1.bf16.msra.mxu0 %v103
  %129 = vmatprep.subr.bf16.mxu0 0
  %130 = vmatpush1.bf16.msra.mxu0 %v102
  %131 = vmatprep.subr.bf16.mxu0 0
  %132 = vmatpush1.bf16.msra.mxu0 %v101
  %133 = vmatprep.subr.bf16.mxu0 0
  %134 = vmatpush1.bf16.msra.mxu0 %v100
  %135 = vmatprep.subr.bf16.mxu0 0
  %136 = vmatpush1.bf16.msra.mxu0 %v99
  %137 = vmatprep.subr.bf16.mxu0 0
  %138 = vmatpush1.bf16.msra.mxu0 %v98
  %139 = vmatprep.subr.bf16.mxu0 0
  %140 = vmatpush2.bf16.msra.mxu0 0
  %141 = vmatprep.subr.bf16.mxu0 0
  %142 = vmatpush2.bf16.msra.mxu0 0
  %143 = vmatprep.subr.bf16.mxu0 0
  %144 = vmatpush2.bf16.msra.mxu0 0
  %145 = vmatprep.subr.bf16.mxu0 0
  %146 = vmatpush2.bf16.msra.mxu0 0
  %147 = vmatprep.subr.bf16.mxu0 0
  %148 = vmatpush2.bf16.msra.mxu0 0
  %149 = vmatprep.subr.bf16.mxu0 0
  %150 = vmatpush2.bf16.msra.mxu0 0
  %151 = vmatprep.subr.bf16.mxu0 0
  %152 = vmatpush2.bf16.msra.mxu0 0
  %153 = vmatprep.subr.bf16.mxu0 0
  %154 = vmatpush2.bf16.msra.mxu0 %v121
  %155 = vmatprep.mubr.bf16.mxu0 %v117
  %156 = vmatmul.mubr.bf16.gmra.mxu0 %v59
  %v157 = vpop.f32.mrf.mxu0
  %v158 = vadd.f32 0.0, %v157
  %v159 = vpop.f32.mrf.mxu0
  %v160 = vpop.f32.mrf.mxu0
  %v161 = vpop.f32.mrf.mxu0
  %162 = vdwg.mxu0
  %s163 = scalar_lea.vmem %s0, 8
  %v164 = vld [vmem:[%s163] sm:$0xff]
  %v166 = vunpack.c.l.b16 %v164
  %v167 = vunpack.c.h.b16 %v164
  %v168 = vpack.c.b16 %v166, %v166
  %v169 = vpack.c.b16 %v167, %v167
  %v172 = vsel %vm115, %v169, 0
  %174 = vmatprep.subr.bf16.mxu0 0
  %175 = vmatpush1.bf16.msra.mxu0 %v105
  %176 = vmatprep.subr.bf16.mxu0 0
  %177 = vmatpush1.bf16.msra.mxu0 %v104
  %178 = vmatprep.subr.bf16.mxu0 0
  %179 = vmatpush1.bf16.msra.mxu0 %v103
  %180 = vmatprep.subr.bf16.mxu0 0
  %181 = vmatpush1.bf16.msra.mxu0 %v102
  %182 = vmatprep.subr.bf16.mxu0 0
  %183 = vmatpush1.bf16.msra.mxu0 %v101
  %184 = vmatprep.subr.bf16.mxu0 0
  %185 = vmatpush1.bf16.msra.mxu0 %v100
  %186 = vmatprep.subr.bf16.mxu0 0
  %187 = vmatpush1.bf16.msra.mxu0 %v99
  %188 = vmatprep.subr.bf16.mxu0 0
  %189 = vmatpush1.bf16.msra.mxu0 %v98
  %190 = vmatprep.subr.bf16.mxu0 0
  %191 = vmatpush2.bf16.msra.mxu0 0
  %192 = vmatprep.subr.bf16.mxu0 0
  %193 = vmatpush2.bf16.msra.mxu0 0
  %194 = vmatprep.subr.bf16.mxu0 0
  %195 = vmatpush2.bf16.msra.mxu0 0
  %196 = vmatprep.subr.bf16.mxu0 0
  %197 = vmatpush2.bf16.msra.mxu0 0
  %198 = vmatprep.subr.bf16.mxu0 0
  %199 = vmatpush2.bf16.msra.mxu0 0
  %200 = vmatprep.subr.bf16.mxu0 0
  %201 = vmatpush2.bf16.msra.mxu0 0
  %202 = vmatprep.subr.bf16.mxu0 0
  %203 = vmatpush2.bf16.msra.mxu0 0
  %204 = vmatprep.subr.bf16.mxu0 0
  %205 = vmatpush2.bf16.msra.mxu0 %v121
  %206 = vmatprep.mubr.bf16.mxu0 %v172
  %207 = vmatmul.mubr.bf16.gmra.mxu0 %v168
  %v208 = vpop.f32.mrf.mxu0
  %v209 = vadd.f32 0.0, %v208
  %v210 = vpop.f32.mrf.mxu0
  %v211 = vpop.f32.mrf.mxu0
  %v212 = vpop.f32.mrf.mxu0
  %213 = vdwg.mxu0
  %v214 = vmax.f32 %v158, %v209
  %s215 = scalar_lea.vmem %s0, 16
  %v216 = vld [vmem:[%s215] sm:$0xff]
  %v218 = vunpack.c.l.b16 %v216
  %v219 = vunpack.c.h.b16 %v216
  %v220 = vpack.c.b16 %v218, %v218
  %v221 = vpack.c.b16 %v219, %v219
  %v224 = vsel %vm115, %v221, 0
  %226 = vmatprep.subr.bf16.mxu0 0
  %227 = vmatpush1.bf16.msra.mxu0 %v105
  %228 = vmatprep.subr.bf16.mxu0 0
  %229 = vmatpush1.bf16.msra.mxu0 %v104
  %230 = vmatprep.subr.bf16.mxu0 0
  %231 = vmatpush1.bf16.msra.mxu0 %v103
  %232 = vmatprep.subr.bf16.mxu0 0
  %233 = vmatpush1.bf16.msra.mxu0 %v102
  %234 = vmatprep.subr.bf16.mxu0 0
  %235 = vmatpush1.bf16.msra.mxu0 %v101
  %236 = vmatprep.subr.bf16.mxu0 0
  %237 = vmatpush1.bf16.msra.mxu0 %v100
  %238 = vmatprep.subr.bf16.mxu0 0
  %239 = vmatpush1.bf16.msra.mxu0 %v99
  %240 = vmatprep.subr.bf16.mxu0 0
  %241 = vmatpush1.bf16.msra.mxu0 %v98
  %242 = vmatprep.subr.bf16.mxu0 0
  %243 = vmatpush2.bf16.msra.mxu0 0
  %244 = vmatprep.subr.bf16.mxu0 0
  %245 = vmatpush2.bf16.msra.mxu0 0
  %246 = vmatprep.subr.bf16.mxu0 0
  %247 = vmatpush2.bf16.msra.mxu0 0
  %248 = vmatprep.subr.bf16.mxu0 0
  %249 = vmatpush2.bf16.msra.mxu0 0
  %250 = vmatprep.subr.bf16.mxu0 0
  %251 = vmatpush2.bf16.msra.mxu0 0
  %252 = vmatprep.subr.bf16.mxu0 0
  %253 = vmatpush2.bf16.msra.mxu0 0
  %254 = vmatprep.subr.bf16.mxu0 0
  %255 = vmatpush2.bf16.msra.mxu0 0
  %256 = vmatprep.subr.bf16.mxu0 0
  %257 = vmatpush2.bf16.msra.mxu0 %v121
  %258 = vmatprep.mubr.bf16.mxu0 %v224
  %259 = vmatmul.mubr.bf16.gmra.mxu0 %v220
  %v260 = vpop.f32.mrf.mxu0
  %v261 = vadd.f32 0.0, %v260
  %v262 = vpop.f32.mrf.mxu0
  %v263 = vpop.f32.mrf.mxu0
  %v264 = vpop.f32.mrf.mxu0
  %265 = vdwg.mxu0
  %v266 = vmax.f32 %v214, %v261
  %v268 = vlaneseq
  %v269 = vshrl.u32 %v268, 7
  %v270 = vsub.s32 0, %v269
  %v271 = vrot.slane %v45, %v270
  %v273 = vadd.f32 %v266, %v271
  %vm274 = vcmp.gt.f32.partialorder %v273, 0.0
  %v275 = vmul.f32 %v273, 1.442695
  %v276 = vpow.pop %v275
  %v277 = vsub.f32 %v276, 1.0
  %v278 = vsel %vm274, %v273, %v277
  %v279 = vpack.c.bf16 %v278, %v278
  %vm280 = vcmask 199680
  %281 = vst.msk [vmem:[#allocation2] sm:$0xf] %vm280, %v279
  %s282 = scalar_lea.vmem %s0, 24
  %v283 = vld [vmem:[%s282] sm:$0xff]
  %v285 = vunpack.c.l.b16 %v283
  %v286 = vunpack.c.h.b16 %v283
  %v287 = vpack.c.b16 %v285, %v285
  %v288 = vpack.c.b16 %v286, %v286
  %v291 = vsel %vm115, %v288, 0
  %293 = vmatprep.subr.bf16.mxu0 0
  %294 = vmatpush1.bf16.msra.mxu0 %v105
  %295 = vmatprep.subr.bf16.mxu0 0
  %296 = vmatpush1.bf16.msra.mxu0 %v104
  %297 = vmatprep.subr.bf16.mxu0 0
  %298 = vmatpush1.bf16.msra.mxu0 %v103
  %299 = vmatprep.subr.bf16.mxu0 0
  %300 = vmatpush1.bf16.msra.mxu0 %v102
  %301 = vmatprep.subr.bf16.mxu0 0
  %302 = vmatpush1.bf16.msra.mxu0 %v101
  %303 = vmatprep.subr.bf16.mxu0 0
  %304 = vmatpush1.bf16.msra.mxu0 %v100
  %305 = vmatprep.subr.bf16.mxu0 0
  %306 = vmatpush1.bf16.msra.mxu0 %v99
  %307 = vmatprep.subr.bf16.mxu0 0
  %308 = vmatpush1.bf16.msra.mxu0 %v98
  %309 = vmatprep.subr.bf16.mxu0 0
  %310 = vmatpush2.bf16.msra.mxu0 0
  %311 = vmatprep.subr.bf16.mxu0 0
  %312 = vmatpush2.bf16.msra.mxu0 0
  %313 = vmatprep.subr.bf16.mxu0 0
  %314 = vmatpush2.bf16.msra.mxu0 0
  %315 = vmatprep.subr.bf16.mxu0 0
  %316 = vmatpush2.bf16.msra.mxu0 0
  %317 = vmatprep.subr.bf16.mxu0 0
  %318 = vmatpush2.bf16.msra.mxu0 0
  %319 = vmatprep.subr.bf16.mxu0 0
  %320 = vmatpush2.bf16.msra.mxu0 0
  %321 = vmatprep.subr.bf16.mxu0 0
  %322 = vmatpush2.bf16.msra.mxu0 0
  %323 = vmatprep.subr.bf16.mxu0 0
  %324 = vmatpush2.bf16.msra.mxu0 %v121
  %325 = vmatprep.mubr.bf16.mxu0 %v291
  %326 = vmatmul.mubr.bf16.gmra.mxu0 %v287
  %v327 = vpop.f32.mrf.mxu0
  %v328 = vadd.f32 0.0, %v327
  %v329 = vpop.f32.mrf.mxu0
  %v330 = vpop.f32.mrf.mxu0
  %v331 = vpop.f32.mrf.mxu0
  %332 = vdwg.mxu0
  %s333 = scalar_lea.vmem %s0, 32
  %v334 = vld [vmem:[%s333] sm:$0xff]
  %v336 = vunpack.c.l.b16 %v334
  %v337 = vunpack.c.h.b16 %v334
  %v338 = vpack.c.b16 %v336, %v336
  %v339 = vpack.c.b16 %v337, %v337
  %v342 = vsel %vm115, %v339, 0
  %344 = vmatprep.subr.bf16.mxu0 0
  %345 = vmatpush1.bf16.msra.mxu0 %v105
  %346 = vmatprep.subr.bf16.mxu0 0
  %347 = vmatpush1.bf16.msra.mxu0 %v104
  %348 = vmatprep.subr.bf16.mxu0 0
  %349 = vmatpush1.bf16.msra.mxu0 %v103
  %350 = vmatprep.subr.bf16.mxu0 0
  %351 = vmatpush1.bf16.msra.mxu0 %v102
  %352 = vmatprep.subr.bf16.mxu0 0
  %353 = vmatpush1.bf16.msra.mxu0 %v101
  %354 = vmatprep.subr.bf16.mxu0 0
  %355 = vmatpush1.bf16.msra.mxu0 %v100
  %356 = vmatprep.subr.bf16.mxu0 0
  %357 = vmatpush1.bf16.msra.mxu0 %v99
  %358 = vmatprep.subr.bf16.mxu0 0
  %359 = vmatpush1.bf16.msra.mxu0 %v98
  %360 = vmatprep.subr.bf16.mxu0 0
  %361 = vmatpush2.bf16.msra.mxu0 0
  %362 = vmatprep.subr.bf16.mxu0 0
  %363 = vmatpush2.bf16.msra.mxu0 0
  %364 = vmatprep.subr.bf16.mxu0 0
  %365 = vmatpush2.bf16.msra.mxu0 0
  %366 = vmatprep.subr.bf16.mxu0 0
  %367 = vmatpush2.bf16.msra.mxu0 0
  %368 = vmatprep.subr.bf16.mxu0 0
  %369 = vmatpush2.bf16.msra.mxu0 0
  %370 = vmatprep.subr.bf16.mxu0 0
  %371 = vmatpush2.bf16.msra.mxu0 0
  %372 = vmatprep.subr.bf16.mxu0 0
  %373 = vmatpush2.bf16.msra.mxu0 0
  %374 = vmatprep.subr.bf16.mxu0 0
  %375 = vmatpush2.bf16.msra.mxu0 %v121
  %376 = vmatprep.mubr.bf16.mxu0 %v342
  %377 = vmatmul.mubr.bf16.gmra.mxu0 %v338
  %v378 = vpop.f32.mrf.mxu0
  %v379 = vadd.f32 0.0, %v378
  %v380 = vpop.f32.mrf.mxu0
  %v381 = vpop.f32.mrf.mxu0
  %v382 = vpop.f32.mrf.mxu0
  %383 = vdwg.mxu0
  %v384 = vmax.f32 %v328, %v379
  %s385 = scalar_lea.vmem %s0, 40
  %v386 = vld [vmem:[%s385] sm:$0xff]
  %v388 = vunpack.c.l.b16 %v386
  %v389 = vunpack.c.h.b16 %v386
  %v390 = vpack.c.b16 %v388, %v388
  %v391 = vpack.c.b16 %v389, %v389
  %v394 = vsel %vm115, %v391, 0
  %396 = vmatprep.subr.bf16.mxu0 0
  %397 = vmatpush1.bf16.msra.mxu0 %v105
  %398 = vmatprep.subr.bf16.mxu0 0
  %399 = vmatpush1.bf16.msra.mxu0 %v104
  %400 = vmatprep.subr.bf16.mxu0 0
  %401 = vmatpush1.bf16.msra.mxu0 %v103
  %402 = vmatprep.subr.bf16.mxu0 0
  %403 = vmatpush1.bf16.msra.mxu0 %v102
  %404 = vmatprep.subr.bf16.mxu0 0
  %405 = vmatpush1.bf16.msra.mxu0 %v101
  %406 = vmatprep.subr.bf16.mxu0 0
  %407 = vmatpush1.bf16.msra.mxu0 %v100
  %408 = vmatprep.subr.bf16.mxu0 0
  %409 = vmatpush1.bf16.msra.mxu0 %v99
  %410 = vmatprep.subr.bf16.mxu0 0
  %411 = vmatpush1.bf16.msra.mxu0 %v98
  %412 = vmatprep.subr.bf16.mxu0 0
  %413 = vmatpush2.bf16.msra.mxu0 0
  %414 = vmatprep.subr.bf16.mxu0 0
  %415 = vmatpush2.bf16.msra.mxu0 0
  %416 = vmatprep.subr.bf16.mxu0 0
  %417 = vmatpush2.bf16.msra.mxu0 0
  %418 = vmatprep.subr.bf16.mxu0 0
  %419 = vmatpush2.bf16.msra.mxu0 0
  %420 = vmatprep.subr.bf16.mxu0 0
  %421 = vmatpush2.bf16.msra.mxu0 0
  %422 = vmatprep.subr.bf16.mxu0 0
  %423 = vmatpush2.bf16.msra.mxu0 0
  %424 = vmatprep.subr.bf16.mxu0 0
  %425 = vmatpush2.bf16.msra.mxu0 0
  %426 = vmatprep.subr.bf16.mxu0 0
  %427 = vmatpush2.bf16.msra.mxu0 %v121
  %428 = vmatprep.mubr.bf16.mxu0 %v394
  %429 = vmatmul.mubr.bf16.gmra.mxu0 %v390
  %v430 = vpop.f32.mrf.mxu0
  %v431 = vadd.f32 0.0, %v430
  %v432 = vpop.f32.mrf.mxu0
  %v433 = vpop.f32.mrf.mxu0
  %v434 = vpop.f32.mrf.mxu0
  %435 = vdwg.mxu0
  %v436 = vmax.f32 %v384, %v431
  %v437 = vadd.f32 %v436, %v271
  %vm438 = vcmp.gt.f32.partialorder %v437, 0.0
  %v439 = vmul.f32 %v437, 1.442695
  %v440 = vpow.pop %v439
  %v441 = vsub.f32 %v440, 1.0
  %v442 = vsel %vm438, %v437, %v441
  %v443 = vpack.c.bf16 %v442, %v442
  %444 = vst.msk [vmem:[#allocation2 + $0x4] sm:$0xf] %vm280, %v443
  %s445 = scalar_lea.vmem %s0, 48
  %v446 = vld [vmem:[%s445] sm:$0xff]
  %v448 = vunpack.c.l.b16 %v446
  %v449 = vunpack.c.h.b16 %v446
  %v450 = vpack.c.b16 %v448, %v448
  %v451 = vpack.c.b16 %v449, %v449
  %v454 = vsel %vm115, %v451, 0
  %456 = vmatprep.subr.bf16.mxu0 0
  %457 = vmatpush1.bf16.msra.mxu0 %v105
  %458 = vmatprep.subr.bf16.mxu0 0
  %459 = vmatpush1.bf16.msra.mxu0 %v104
  %460 = vmatprep.subr.bf16.mxu0 0
  %461 = vmatpush1.bf16.msra.mxu0 %v103
  %462 = vmatprep.subr.bf16.mxu0 0
  %463 = vmatpush1.bf16.msra.mxu0 %v102
  %464 = vmatprep.subr.bf16.mxu0 0
  %465 = vmatpush1.bf16.msra.mxu0 %v101
  %466 = vmatprep.subr.bf16.mxu0 0
  %467 = vmatpush1.bf16.msra.mxu0 %v100
  %468 = vmatprep.subr.bf16.mxu0 0
  %469 = vmatpush1.bf16.msra.mxu0 %v99
  %470 = vmatprep.subr.bf16.mxu0 0
  %471 = vmatpush1.bf16.msra.mxu0 %v98
  %472 = vmatprep.subr.bf16.mxu0 0
  %473 = vmatpush2.bf16.msra.mxu0 0
  %474 = vmatprep.subr.bf16.mxu0 0
  %475 = vmatpush2.bf16.msra.mxu0 0
  %476 = vmatprep.subr.bf16.mxu0 0
  %477 = vmatpush2.bf16.msra.mxu0 0
  %478 = vmatprep.subr.bf16.mxu0 0
  %479 = vmatpush2.bf16.msra.mxu0 0
  %480 = vmatprep.subr.bf16.mxu0 0
  %481 = vmatpush2.bf16.msra.mxu0 0
  %482 = vmatprep.subr.bf16.mxu0 0
  %483 = vmatpush2.bf16.msra.mxu0 0
  %484 = vmatprep.subr.bf16.mxu0 0
  %485 = vmatpush2.bf16.msra.mxu0 0
  %486 = vmatprep.subr.bf16.mxu0 0
  %487 = vmatpush2.bf16.msra.mxu0 %v121
  %488 = vmatprep.mubr.bf16.mxu0 %v454
  %489 = vmatmul.mubr.bf16.gmra.mxu0 %v450
  %v490 = vpop.f32.mrf.mxu0
  %v491 = vadd.f32 0.0, %v490
  %v492 = vpop.f32.mrf.mxu0
  %v493 = vpop.f32.mrf.mxu0
  %v494 = vpop.f32.mrf.mxu0
  %495 = vdwg.mxu0
  %s496 = scalar_lea.vmem %s0, 56
  %v497 = vld [vmem:[%s496] sm:$0xff]
  %v499 = vunpack.c.l.b16 %v497
  %v500 = vunpack.c.h.b16 %v497
  %v501 = vpack.c.b16 %v499, %v499
  %v502 = vpack.c.b16 %v500, %v500
  %v505 = vsel %vm115, %v502, 0
  %507 = vmatprep.subr.bf16.mxu0 0
  %508 = vmatpush1.bf16.msra.mxu0 %v105
  %509 = vmatprep.subr.bf16.mxu0 0
  %510 = vmatpush1.bf16.msra.mxu0 %v104
  %511 = vmatprep.subr.bf16.mxu0 0
  %512 = vmatpush1.bf16.msra.mxu0 %v103
  %513 = vmatprep.subr.bf16.mxu0 0
  %514 = vmatpush1.bf16.msra.mxu0 %v102
  %515 = vmatprep.subr.bf16.mxu0 0
  %516 = vmatpush1.bf16.msra.mxu0 %v101
  %517 = vmatprep.subr.bf16.mxu0 0
  %518 = vmatpush1.bf16.msra.mxu0 %v100
  %519 = vmatprep.subr.bf16.mxu0 0
  %520 = vmatpush1.bf16.msra.mxu0 %v99
  %521 = vmatprep.subr.bf16.mxu0 0
  %522 = vmatpush1.bf16.msra.mxu0 %v98
  %523 = vmatprep.subr.bf16.mxu0 0
  %524 = vmatpush2.bf16.msra.mxu0 0
  %525 = vmatprep.subr.bf16.mxu0 0
  %526 = vmatpush2.bf16.msra.mxu0 0
  %527 = vmatprep.subr.bf16.mxu0 0
  %528 = vmatpush2.bf16.msra.mxu0 0
  %529 = vmatprep.subr.bf16.mxu0 0
  %530 = vmatpush2.bf16.msra.mxu0 0
  %531 = vmatprep.subr.bf16.mxu0 0
  %532 = vmatpush2.bf16.msra.mxu0 0
  %533 = vmatprep.subr.bf16.mxu0 0
  %534 = vmatpush2.bf16.msra.mxu0 0
  %535 = vmatprep.subr.bf16.mxu0 0
  %536 = vmatpush2.bf16.msra.mxu0 0
  %537 = vmatprep.subr.bf16.mxu0 0
  %538 = vmatpush2.bf16.msra.mxu0 %v121
  %539 = vmatprep.mubr.bf16.mxu0 %v505
  %540 = vmatmul.mubr.bf16.gmra.mxu0 %v501
  %v541 = vpop.f32.mrf.mxu0
  %v542 = vadd.f32 0.0, %v541
  %v543 = vpop.f32.mrf.mxu0
  %v544 = vpop.f32.mrf.mxu0
  %v545 = vpop.f32.mrf.mxu0
  %546 = vdwg.mxu0
  %v547 = vmax.f32 %v491, %v542
  %s548 = scalar_lea.vmem %s0, 64
  %v549 = vld [vmem:[%s548] sm:$0xff]
  %v551 = vunpack.c.l.b16 %v549
  %v552 = vunpack.c.h.b16 %v549
  %v553 = vpack.c.b16 %v551, %v551
  %v554 = vpack.c.b16 %v552, %v552
  %v557 = vsel %vm115, %v554, 0
  %559 = vmatprep.subr.bf16.mxu0 0
  %560 = vmatpush1.bf16.msra.mxu0 %v105
  %561 = vmatprep.subr.bf16.mxu0 0
  %562 = vmatpush1.bf16.msra.mxu0 %v104
  %563 = vmatprep.subr.bf16.mxu0 0
  %564 = vmatpush1.bf16.msra.mxu0 %v103
  %565 = vmatprep.subr.bf16.mxu0 0
  %566 = vmatpush1.bf16.msra.mxu0 %v102
  %567 = vmatprep.subr.bf16.mxu0 0
  %568 = vmatpush1.bf16.msra.mxu0 %v101
  %569 = vmatprep.subr.bf16.mxu0 0
  %570 = vmatpush1.bf16.msra.mxu0 %v100
  %571 = vmatprep.subr.bf16.mxu0 0
  %572 = vmatpush1.bf16.msra.mxu0 %v99
  %573 = vmatprep.subr.bf16.mxu0 0
  %574 = vmatpush1.bf16.msra.mxu0 %v98
  %575 = vmatprep.subr.bf16.mxu0 0
  %576 = vmatpush2.bf16.msra.mxu0 0
  %577 = vmatprep.subr.bf16.mxu0 0
  %578 = vmatpush2.bf16.msra.mxu0 0
  %579 = vmatprep.subr.bf16.mxu0 0
  %580 = vmatpush2.bf16.msra.mxu0 0
  %581 = vmatprep.subr.bf16.mxu0 0
  %582 = vmatpush2.bf16.msra.mxu0 0
  %583 = vmatprep.subr.bf16.mxu0 0
  %584 = vmatpush2.bf16.msra.mxu0 0
  %585 = vmatprep.subr.bf16.mxu0 0
  %586 = vmatpush2.bf16.msra.mxu0 0
  %587 = vmatprep.subr.bf16.mxu0 0
  %588 = vmatpush2.bf16.msra.mxu0 0
  %589 = vmatprep.subr.bf16.mxu0 0
  %590 = vmatpush2.bf16.msra.mxu0 %v121
  %591 = vmatprep.mubr.bf16.mxu0 %v557
  %592 = vmatmul.mubr.bf16.gmra.mxu0 %v553
  %v593 = vpop.f32.mrf.mxu0
  %v594 = vadd.f32 0.0, %v593
  %v595 = vpop.f32.mrf.mxu0
  %v596 = vpop.f32.mrf.mxu0
  %v597 = vpop.f32.mrf.mxu0
  %598 = vdwg.mxu0
  %v599 = vmax.f32 %v547, %v594
  %v600 = vadd.f32 %v599, %v271
  %vm601 = vcmp.gt.f32.partialorder %v600, 0.0
  %v602 = vmul.f32 %v600, 1.442695
  %v603 = vpow.pop %v602
  %v604 = vsub.f32 %v603, 1.0
  %v605 = vsel %vm601, %v600, %v604
  %v606 = vpack.c.bf16 %v605, %v605
  %607 = vst.msk [vmem:[#allocation2 + $0x8] sm:$0xf] %vm280, %v606
  %s608 = scalar_lea.vmem %s0, 72
  %v609 = vld [vmem:[%s608] sm:$0xff]
  %v611 = vunpack.c.l.b16 %v609
  %v612 = vunpack.c.h.b16 %v609
  %v613 = vpack.c.b16 %v611, %v611
  %v614 = vpack.c.b16 %v612, %v612
  %v617 = vsel %vm115, %v614, 0
  %619 = vmatprep.subr.bf16.mxu0 0
  %620 = vmatpush1.bf16.msra.mxu0 %v105
  %621 = vmatprep.subr.bf16.mxu0 0
  %622 = vmatpush1.bf16.msra.mxu0 %v104
  %623 = vmatprep.subr.bf16.mxu0 0
  %624 = vmatpush1.bf16.msra.mxu0 %v103
  %625 = vmatprep.subr.bf16.mxu0 0
  %626 = vmatpush1.bf16.msra.mxu0 %v102
  %627 = vmatprep.subr.bf16.mxu0 0
  %628 = vmatpush1.bf16.msra.mxu0 %v101
  %629 = vmatprep.subr.bf16.mxu0 0
  %630 = vmatpush1.bf16.msra.mxu0 %v100
  %631 = vmatprep.subr.bf16.mxu0 0
  %632 = vmatpush1.bf16.msra.mxu0 %v99
  %633 = vmatprep.subr.bf16.mxu0 0
  %634 = vmatpush1.bf16.msra.mxu0 %v98
  %635 = vmatprep.subr.bf16.mxu0 0
  %636 = vmatpush2.bf16.msra.mxu0 0
  %637 = vmatprep.subr.bf16.mxu0 0
  %638 = vmatpush2.bf16.msra.mxu0 0
  %639 = vmatprep.subr.bf16.mxu0 0
  %640 = vmatpush2.bf16.msra.mxu0 0
  %641 = vmatprep.subr.bf16.mxu0 0
  %642 = vmatpush2.bf16.msra.mxu0 0
  %643 = vmatprep.subr.bf16.mxu0 0
  %644 = vmatpush2.bf16.msra.mxu0 0
  %645 = vmatprep.subr.bf16.mxu0 0
  %646 = vmatpush2.bf16.msra.mxu0 0
  %647 = vmatprep.subr.bf16.mxu0 0
  %648 = vmatpush2.bf16.msra.mxu0 0
  %649 = vmatprep.subr.bf16.mxu0 0
  %650 = vmatpush2.bf16.msra.mxu0 %v121
  %651 = vmatprep.mubr.bf16.mxu0 %v617
  %652 = vmatmul.mubr.bf16.gmra.mxu0 %v613
  %v653 = vpop.f32.mrf.mxu0
  %v654 = vadd.f32 0.0, %v653
  %v655 = vpop.f32.mrf.mxu0
  %v656 = vpop.f32.mrf.mxu0
  %v657 = vpop.f32.mrf.mxu0
  %658 = vdwg.mxu0
  %s659 = scalar_lea.vmem %s0, 80
  %v660 = vld [vmem:[%s659] sm:$0xff]
  %v662 = vunpack.c.l.b16 %v660
  %v663 = vunpack.c.h.b16 %v660
  %v664 = vpack.c.b16 %v662, %v662
  %v665 = vpack.c.b16 %v663, %v663
  %v668 = vsel %vm115, %v665, 0
  %670 = vmatprep.subr.bf16.mxu0 0
  %671 = vmatpush1.bf16.msra.mxu0 %v105
  %672 = vmatprep.subr.bf16.mxu0 0
  %673 = vmatpush1.bf16.msra.mxu0 %v104
  %674 = vmatprep.subr.bf16.mxu0 0
  %675 = vmatpush1.bf16.msra.mxu0 %v103
  %676 = vmatprep.subr.bf16.mxu0 0
  %677 = vmatpush1.bf16.msra.mxu0 %v102
  %678 = vmatprep.subr.bf16.mxu0 0
  %679 = vmatpush1.bf16.msra.mxu0 %v101
  %680 = vmatprep.subr.bf16.mxu0 0
  %681 = vmatpush1.bf16.msra.mxu0 %v100
  %682 = vmatprep.subr.bf16.mxu0 0
  %683 = vmatpush1.bf16.msra.mxu0 %v99
  %684 = vmatprep.subr.bf16.mxu0 0
  %685 = vmatpush1.bf16.msra.mxu0 %v98
  %686 = vmatprep.subr.bf16.mxu0 0
  %687 = vmatpush2.bf16.msra.mxu0 0
  %688 = vmatprep.subr.bf16.mxu0 0
  %689 = vmatpush2.bf16.msra.mxu0 0
  %690 = vmatprep.subr.bf16.mxu0 0
  %691 = vmatpush2.bf16.msra.mxu0 0
  %692 = vmatprep.subr.bf16.mxu0 0
  %693 = vmatpush2.bf16.msra.mxu0 0
  %694 = vmatprep.subr.bf16.mxu0 0
  %695 = vmatpush2.bf16.msra.mxu0 0
  %696 = vmatprep.subr.bf16.mxu0 0
  %697 = vmatpush2.bf16.msra.mxu0 0
  %698 = vmatprep.subr.bf16.mxu0 0
  %699 = vmatpush2.bf16.msra.mxu0 0
  %700 = vmatprep.subr.bf16.mxu0 0
  %701 = vmatpush2.bf16.msra.mxu0 %v121
  %702 = vmatprep.mubr.bf16.mxu0 %v668
  %703 = vmatmul.mubr.bf16.gmra.mxu0 %v664
  %v704 = vpop.f32.mrf.mxu0
  %v705 = vadd.f32 0.0, %v704
  %v706 = vpop.f32.mrf.mxu0
  %v707 = vpop.f32.mrf.mxu0
  %v708 = vpop.f32.mrf.mxu0
  %709 = vdwg.mxu0
  %v710 = vmax.f32 %v654, %v705
  %s711 = scalar_lea.vmem %s0, 88
  %v712 = vld [vmem:[%s711] sm:$0xff]
  %v714 = vunpack.c.l.b16 %v712
  %v715 = vunpack.c.h.b16 %v712
  %v716 = vpack.c.b16 %v714, %v714
  %v717 = vpack.c.b16 %v715, %v715
  %v720 = vsel %vm115, %v717, 0
  %722 = vmatprep.subr.bf16.mxu0 0
  %723 = vmatpush1.bf16.msra.mxu0 %v105
  %724 = vmatprep.subr.bf16.mxu0 0
  %725 = vmatpush1.bf16.msra.mxu0 %v104
  %726 = vmatprep.subr.bf16.mxu0 0
  %727 = vmatpush1.bf16.msra.mxu0 %v103
  %728 = vmatprep.subr.bf16.mxu0 0
  %729 = vmatpush1.bf16.msra.mxu0 %v102
  %730 = vmatprep.subr.bf16.mxu0 0
  %731 = vmatpush1.bf16.msra.mxu0 %v101
  %732 = vmatprep.subr.bf16.mxu0 0
  %733 = vmatpush1.bf16.msra.mxu0 %v100
  %734 = vmatprep.subr.bf16.mxu0 0
  %735 = vmatpush1.bf16.msra.mxu0 %v99
  %736 = vmatprep.subr.bf16.mxu0 0
  %737 = vmatpush1.bf16.msra.mxu0 %v98
  %738 = vmatprep.subr.bf16.mxu0 0
  %739 = vmatpush2.bf16.msra.mxu0 0
  %740 = vmatprep.subr.bf16.mxu0 0
  %741 = vmatpush2.bf16.msra.mxu0 0
  %742 = vmatprep.subr.bf16.mxu0 0
  %743 = vmatpush2.bf16.msra.mxu0 0
  %744 = vmatprep.subr.bf16.mxu0 0
  %745 = vmatpush2.bf16.msra.mxu0 0
  %746 = vmatprep.subr.bf16.mxu0 0
  %747 = vmatpush2.bf16.msra.mxu0 0
  %748 = vmatprep.subr.bf16.mxu0 0
  %749 = vmatpush2.bf16.msra.mxu0 0
  %750 = vmatprep.subr.bf16.mxu0 0
  %751 = vmatpush2.bf16.msra.mxu0 0
  %752 = vmatprep.subr.bf16.mxu0 0
  %753 = vmatpush2.bf16.msra.mxu0 %v121
  %754 = vmatprep.mubr.bf16.mxu0 %v720
  %755 = vmatmul.mubr.bf16.gmra.mxu0 %v716
  %v756 = vpop.f32.mrf.mxu0
  %v757 = vadd.f32 0.0, %v756
  %v758 = vpop.f32.mrf.mxu0
  %v759 = vpop.f32.mrf.mxu0
  %v760 = vpop.f32.mrf.mxu0
  %761 = vdwg.mxu0
  %v762 = vmax.f32 %v710, %v757
  %v763 = vadd.f32 %v762, %v271
  %vm764 = vcmp.gt.f32.partialorder %v763, 0.0
  %v765 = vmul.f32 %v763, 1.442695
  %v766 = vpow.pop %v765
  %v767 = vsub.f32 %v766, 1.0
  %v768 = vsel %vm764, %v763, %v767
  %v769 = vpack.c.bf16 %v768, %v768
  %770 = vst.msk [vmem:[#allocation2 + $0xc] sm:$0xf] %vm280, %v769
  %s771 = scalar_lea.vmem %s0, 96
  %v772 = vld [vmem:[%s771] sm:$0xff]
  %v774 = vunpack.c.l.b16 %v772
  %v775 = vunpack.c.h.b16 %v772
  %v776 = vpack.c.b16 %v774, %v774
  %v777 = vpack.c.b16 %v775, %v775
  %v780 = vsel %vm115, %v777, 0
  %782 = vmatprep.subr.bf16.mxu0 0
  %783 = vmatpush1.bf16.msra.mxu0 %v105
  %784 = vmatprep.subr.bf16.mxu0 0
  %785 = vmatpush1.bf16.msra.mxu0 %v104
  %786 = vmatprep.subr.bf16.mxu0 0
  %787 = vmatpush1.bf16.msra.mxu0 %v103
  %788 = vmatprep.subr.bf16.mxu0 0
  %789 = vmatpush1.bf16.msra.mxu0 %v102
  %790 = vmatprep.subr.bf16.mxu0 0
  %791 = vmatpush1.bf16.msra.mxu0 %v101
  %792 = vmatprep.subr.bf16.mxu0 0
  %793 = vmatpush1.bf16.msra.mxu0 %v100
  %794 = vmatprep.subr.bf16.mxu0 0
  %795 = vmatpush1.bf16.msra.mxu0 %v99
  %796 = vmatprep.subr.bf16.mxu0 0
  %797 = vmatpush1.bf16.msra.mxu0 %v98
  %798 = vmatprep.subr.bf16.mxu0 0
  %799 = vmatpush2.bf16.msra.mxu0 0
  %800 = vmatprep.subr.bf16.mxu0 0
  %801 = vmatpush2.bf16.msra.mxu0 0
  %802 = vmatprep.subr.bf16.mxu0 0
  %803 = vmatpush2.bf16.msra.mxu0 0
  %804 = vmatprep.subr.bf16.mxu0 0
  %805 = vmatpush2.bf16.msra.mxu0 0
  %806 = vmatprep.subr.bf16.mxu0 0
  %807 = vmatpush2.bf16.msra.mxu0 0
  %808 = vmatprep.subr.bf16.mxu0 0
  %809 = vmatpush2.bf16.msra.mxu0 0
  %810 = vmatprep.subr.bf16.mxu0 0
  %811 = vmatpush2.bf16.msra.mxu0 0
  %812 = vmatprep.subr.bf16.mxu0 0
  %813 = vmatpush2.bf16.msra.mxu0 %v121
  %814 = vmatprep.mubr.bf16.mxu0 %v780
  %815 = vmatmul.mubr.bf16.gmra.mxu0 %v776
  %v816 = vpop.f32.mrf.mxu0
  %v817 = vadd.f32 0.0, %v816
  %v818 = vpop.f32.mrf.mxu0
  %v819 = vpop.f32.mrf.mxu0
  %v820 = vpop.f32.mrf.mxu0
  %821 = vdwg.mxu0
  %s822 = scalar_lea.vmem %s0, 104
  %v823 = vld [vmem:[%s822] sm:$0xff]
  %v825 = vunpack.c.l.b16 %v823
  %v826 = vunpack.c.h.b16 %v823
  %v827 = vpack.c.b16 %v825, %v825
  %v828 = vpack.c.b16 %v826, %v826
  %v831 = vsel %vm115, %v828, 0
  %833 = vmatprep.subr.bf16.mxu0 0
  %834 = vmatpush1.bf16.msra.mxu0 %v105
  %835 = vmatprep.subr.bf16.mxu0 0
  %836 = vmatpush1.bf16.msra.mxu0 %v104
  %837 = vmatprep.subr.bf16.mxu0 0
  %838 = vmatpush1.bf16.msra.mxu0 %v103
  %839 = vmatprep.subr.bf16.mxu0 0
  %840 = vmatpush1.bf16.msra.mxu0 %v102
  %841 = vmatprep.subr.bf16.mxu0 0
  %842 = vmatpush1.bf16.msra.mxu0 %v101
  %843 = vmatprep.subr.bf16.mxu0 0
  %844 = vmatpush1.bf16.msra.mxu0 %v100
  %845 = vmatprep.subr.bf16.mxu0 0
  %846 = vmatpush1.bf16.msra.mxu0 %v99
  %847 = vmatprep.subr.bf16.mxu0 0
  %848 = vmatpush1.bf16.msra.mxu0 %v98
  %849 = vmatprep.subr.bf16.mxu0 0
  %850 = vmatpush2.bf16.msra.mxu0 0
  %851 = vmatprep.subr.bf16.mxu0 0
  %852 = vmatpush2.bf16.msra.mxu0 0
  %853 = vmatprep.subr.bf16.mxu0 0
  %854 = vmatpush2.bf16.msra.mxu0 0
  %855 = vmatprep.subr.bf16.mxu0 0
  %856 = vmatpush2.bf16.msra.mxu0 0
  %857 = vmatprep.subr.bf16.mxu0 0
  %858 = vmatpush2.bf16.msra.mxu0 0
  %859 = vmatprep.subr.bf16.mxu0 0
  %860 = vmatpush2.bf16.msra.mxu0 0
  %861 = vmatprep.subr.bf16.mxu0 0
  %862 = vmatpush2.bf16.msra.mxu0 0
  %863 = vmatprep.subr.bf16.mxu0 0
  %864 = vmatpush2.bf16.msra.mxu0 %v121
  %865 = vmatprep.mubr.bf16.mxu0 %v831
  %866 = vmatmul.mubr.bf16.gmra.mxu0 %v827
  %v867 = vpop.f32.mrf.mxu0
  %v868 = vadd.f32 0.0, %v867
  %v869 = vpop.f32.mrf.mxu0
  %v870 = vpop.f32.mrf.mxu0
  %v871 = vpop.f32.mrf.mxu0
  %872 = vdwg.mxu0
  %v873 = vmax.f32 %v817, %v868
  %s874 = scalar_lea.vmem %s0, 112
  %v875 = vld [vmem:[%s874] sm:$0xff]
  %v877 = vunpack.c.l.b16 %v875
  %v878 = vunpack.c.h.b16 %v875
  %v879 = vpack.c.b16 %v877, %v877
  %v880 = vpack.c.b16 %v878, %v878
  %v883 = vsel %vm115, %v880, 0
  %885 = vmatprep.subr.bf16.mxu0 0
  %886 = vmatpush1.bf16.msra.mxu0 %v105
  %887 = vmatprep.subr.bf16.mxu0 0
  %888 = vmatpush1.bf16.msra.mxu0 %v104
  %889 = vmatprep.subr.bf16.mxu0 0
  %890 = vmatpush1.bf16.msra.mxu0 %v103
  %891 = vmatprep.subr.bf16.mxu0 0
  %892 = vmatpush1.bf16.msra.mxu0 %v102
  %893 = vmatprep.subr.bf16.mxu0 0
  %894 = vmatpush1.bf16.msra.mxu0 %v101
  %895 = vmatprep.subr.bf16.mxu0 0
  %896 = vmatpush1.bf16.msra.mxu0 %v100
  %897 = vmatprep.subr.bf16.mxu0 0
  %898 = vmatpush1.bf16.msra.mxu0 %v99
  %899 = vmatprep.subr.bf16.mxu0 0
  %900 = vmatpush1.bf16.msra.mxu0 %v98
  %901 = vmatprep.subr.bf16.mxu0 0
  %902 = vmatpush2.bf16.msra.mxu0 0
  %903 = vmatprep.subr.bf16.mxu0 0
  %904 = vmatpush2.bf16.msra.mxu0 0
  %905 = vmatprep.subr.bf16.mxu0 0
  %906 = vmatpush2.bf16.msra.mxu0 0
  %907 = vmatprep.subr.bf16.mxu0 0
  %908 = vmatpush2.bf16.msra.mxu0 0
  %909 = vmatprep.subr.bf16.mxu0 0
  %910 = vmatpush2.bf16.msra.mxu0 0
  %911 = vmatprep.subr.bf16.mxu0 0
  %912 = vmatpush2.bf16.msra.mxu0 0
  %913 = vmatprep.subr.bf16.mxu0 0
  %914 = vmatpush2.bf16.msra.mxu0 0
  %915 = vmatprep.subr.bf16.mxu0 0
  %916 = vmatpush2.bf16.msra.mxu0 %v121
  %917 = vmatprep.mubr.bf16.mxu0 %v883
  %918 = vmatmul.mubr.bf16.gmra.mxu0 %v879
  %v919 = vpop.f32.mrf.mxu0
  %v920 = vadd.f32 0.0, %v919
  %v921 = vpop.f32.mrf.mxu0
  %v922 = vpop.f32.mrf.mxu0
  %v923 = vpop.f32.mrf.mxu0
  %924 = vdwg.mxu0
  %v925 = vmax.f32 %v873, %v920
  %v926 = vadd.f32 %v925, %v271
  %vm927 = vcmp.gt.f32.partialorder %v926, 0.0
  %v928 = vmul.f32 %v926, 1.442695
  %v929 = vpow.pop %v928
  %v930 = vsub.f32 %v929, 1.0
  %v931 = vsel %vm927, %v926, %v930
  %v932 = vpack.c.bf16 %v931, %v931
  %933 = vst.msk [vmem:[#allocation2 + $0x10] sm:$0xf] %vm280, %v932
  %s934 = scalar_lea.vmem %s0, 120
  %v935 = vld [vmem:[%s934] sm:$0xff]
  %v937 = vunpack.c.l.b16 %v935
  %v938 = vunpack.c.h.b16 %v935
  %v939 = vpack.c.b16 %v937, %v937
  %v940 = vpack.c.b16 %v938, %v938
  %v943 = vsel %vm115, %v940, 0
  %945 = vmatprep.subr.bf16.mxu0 0
  %946 = vmatpush1.bf16.msra.mxu0 %v105
  %947 = vmatprep.subr.bf16.mxu0 0
  %948 = vmatpush1.bf16.msra.mxu0 %v104
  %949 = vmatprep.subr.bf16.mxu0 0
  %950 = vmatpush1.bf16.msra.mxu0 %v103
  %951 = vmatprep.subr.bf16.mxu0 0
  %952 = vmatpush1.bf16.msra.mxu0 %v102
  %953 = vmatprep.subr.bf16.mxu0 0
  %954 = vmatpush1.bf16.msra.mxu0 %v101
  %955 = vmatprep.subr.bf16.mxu0 0
  %956 = vmatpush1.bf16.msra.mxu0 %v100
  %957 = vmatprep.subr.bf16.mxu0 0
  %958 = vmatpush1.bf16.msra.mxu0 %v99
  %959 = vmatprep.subr.bf16.mxu0 0
  %960 = vmatpush1.bf16.msra.mxu0 %v98
  %961 = vmatprep.subr.bf16.mxu0 0
  %962 = vmatpush2.bf16.msra.mxu0 0
  %963 = vmatprep.subr.bf16.mxu0 0
  %964 = vmatpush2.bf16.msra.mxu0 0
  %965 = vmatprep.subr.bf16.mxu0 0
  %966 = vmatpush2.bf16.msra.mxu0 0
  %967 = vmatprep.subr.bf16.mxu0 0
  %968 = vmatpush2.bf16.msra.mxu0 0
  %969 = vmatprep.subr.bf16.mxu0 0
  %970 = vmatpush2.bf16.msra.mxu0 0
  %971 = vmatprep.subr.bf16.mxu0 0
  %972 = vmatpush2.bf16.msra.mxu0 0
  %973 = vmatprep.subr.bf16.mxu0 0
  %974 = vmatpush2.bf16.msra.mxu0 0
  %975 = vmatprep.subr.bf16.mxu0 0
  %976 = vmatpush2.bf16.msra.mxu0 %v121
  %977 = vmatprep.mubr.bf16.mxu0 %v943
  %978 = vmatmul.mubr.bf16.gmra.mxu0 %v939
  %v979 = vpop.f32.mrf.mxu0
  %v980 = vadd.f32 0.0, %v979
  %v981 = vpop.f32.mrf.mxu0
  %v982 = vpop.f32.mrf.mxu0
  %v983 = vpop.f32.mrf.mxu0
  %984 = vdwg.mxu0
  %s985 = scalar_lea.vmem %s0, 128
  %v986 = vld [vmem:[%s985] sm:$0xff]
  %v988 = vunpack.c.l.b16 %v986
  %v989 = vunpack.c.h.b16 %v986
  %v990 = vpack.c.b16 %v988, %v988
  %v991 = vpack.c.b16 %v989, %v989
  %v994 = vsel %vm115, %v991, 0
  %996 = vmatprep.subr.bf16.mxu0 0
  %997 = vmatpush1.bf16.msra.mxu0 %v105
  %998 = vmatprep.subr.bf16.mxu0 0
  %999 = vmatpush1.bf16.msra.mxu0 %v104
  %1000 = vmatprep.subr.bf16.mxu0 0
  %1001 = vmatpush1.bf16.msra.mxu0 %v103
  %1002 = vmatprep.subr.bf16.mxu0 0
  %1003 = vmatpush1.bf16.msra.mxu0 %v102
  %1004 = vmatprep.subr.bf16.mxu0 0
  %1005 = vmatpush1.bf16.msra.mxu0 %v101
  %1006 = vmatprep.subr.bf16.mxu0 0
  %1007 = vmatpush1.bf16.msra.mxu0 %v100
  %1008 = vmatprep.subr.bf16.mxu0 0
  %1009 = vmatpush1.bf16.msra.mxu0 %v99
  %1010 = vmatprep.subr.bf16.mxu0 0
  %1011 = vmatpush1.bf16.msra.mxu0 %v98
  %1012 = vmatprep.subr.bf16.mxu0 0
  %1013 = vmatpush2.bf16.msra.mxu0 0
  %1014 = vmatprep.subr.bf16.mxu0 0
  %1015 = vmatpush2.bf16.msra.mxu0 0
  %1016 = vmatprep.subr.bf16.mxu0 0
  %1017 = vmatpush2.bf16.msra.mxu0 0
  %1018 = vmatprep.subr.bf16.mxu0 0
  %1019 = vmatpush2.bf16.msra.mxu0 0
  %1020 = vmatprep.subr.bf16.mxu0 0
  %1021 = vmatpush2.bf16.msra.mxu0 0
  %1022 = vmatprep.subr.bf16.mxu0 0
  %1023 = vmatpush2.bf16.msra.mxu0 0
  %1024 = vmatprep.subr.bf16.mxu0 0
  %1025 = vmatpush2.bf16.msra.mxu0 0
  %1026 = vmatprep.subr.bf16.mxu0 0
  %1027 = vmatpush2.bf16.msra.mxu0 %v121
  %1028 = vmatprep.mubr.bf16.mxu0 %v994
  %1029 = vmatmul.mubr.bf16.gmra.mxu0 %v990
  %v1030 = vpop.f32.mrf.mxu0
  %v1031 = vadd.f32 0.0, %v1030
  %v1032 = vpop.f32.mrf.mxu0
  %v1033 = vpop.f32.mrf.mxu0
  %v1034 = vpop.f32.mrf.mxu0
  %1035 = vdwg.mxu0
  %v1036 = vmax.f32 %v980, %v1031
  %s1037 = scalar_lea.vmem %s0, 136
  %v1038 = vld [vmem:[%s1037] sm:$0xff]
  %v1040 = vunpack.c.l.b16 %v1038
  %v1041 = vunpack.c.h.b16 %v1038
  %v1042 = vpack.c.b16 %v1040, %v1040
  %v1043 = vpack.c.b16 %v1041, %v1041
  %v1046 = vsel %vm115, %v1043, 0
  %1048 = vmatprep.subr.bf16.mxu0 0
  %1049 = vmatpush1.bf16.msra.mxu0 %v105
  %1050 = vmatprep.subr.bf16.mxu0 0
  %1051 = vmatpush1.bf16.msra.mxu0 %v104
  %1052 = vmatprep.subr.bf16.mxu0 0
  %1053 = vmatpush1.bf16.msra.mxu0 %v103
  %1054 = vmatprep.subr.bf16.mxu0 0
  %1055 = vmatpush1.bf16.msra.mxu0 %v102
  %1056 = vmatprep.subr.bf16.mxu0 0
  %1057 = vmatpush1.bf16.msra.mxu0 %v101
  %1058 = vmatprep.subr.bf16.mxu0 0
  %1059 = vmatpush1.bf16.msra.mxu0 %v100
  %1060 = vmatprep.subr.bf16.mxu0 0
  %1061 = vmatpush1.bf16.msra.mxu0 %v99
  %1062 = vmatprep.subr.bf16.mxu0 0
  %1063 = vmatpush1.bf16.msra.mxu0 %v98
  %1064 = vmatprep.subr.bf16.mxu0 0
  %1065 = vmatpush2.bf16.msra.mxu0 0
  %1066 = vmatprep.subr.bf16.mxu0 0
  %1067 = vmatpush2.bf16.msra.mxu0 0
  %1068 = vmatprep.subr.bf16.mxu0 0
  %1069 = vmatpush2.bf16.msra.mxu0 0
  %1070 = vmatprep.subr.bf16.mxu0 0
  %1071 = vmatpush2.bf16.msra.mxu0 0
  %1072 = vmatprep.subr.bf16.mxu0 0
  %1073 = vmatpush2.bf16.msra.mxu0 0
  %1074 = vmatprep.subr.bf16.mxu0 0
  %1075 = vmatpush2.bf16.msra.mxu0 0
  %1076 = vmatprep.subr.bf16.mxu0 0
  %1077 = vmatpush2.bf16.msra.mxu0 0
  %1078 = vmatprep.subr.bf16.mxu0 0
  %1079 = vmatpush2.bf16.msra.mxu0 %v121
  %1080 = vmatprep.mubr.bf16.mxu0 %v1046
  %1081 = vmatmul.mubr.bf16.gmra.mxu0 %v1042
  %v1082 = vpop.f32.mrf.mxu0
  %v1083 = vadd.f32 0.0, %v1082
  %v1084 = vpop.f32.mrf.mxu0
  %v1085 = vpop.f32.mrf.mxu0
  %v1086 = vpop.f32.mrf.mxu0
  %1087 = vdwg.mxu0
  %v1088 = vmax.f32 %v1036, %v1083
  %v1089 = vadd.f32 %v1088, %v271
  %vm1090 = vcmp.gt.f32.partialorder %v1089, 0.0
  %v1091 = vmul.f32 %v1089, 1.442695
  %v1092 = vpow.pop %v1091
  %v1093 = vsub.f32 %v1092, 1.0
  %v1094 = vsel %vm1090, %v1089, %v1093
  %v1095 = vpack.c.bf16 %v1094, %v1094
  %1096 = vst.msk [vmem:[#allocation2 + $0x14] sm:$0xf] %vm280, %v1095
  %s1097 = scalar_lea.vmem %s0, 144
  %v1098 = vld [vmem:[%s1097] sm:$0xff]
  %v1100 = vunpack.c.l.b16 %v1098
  %v1101 = vunpack.c.h.b16 %v1098
  %v1102 = vpack.c.b16 %v1100, %v1100
  %v1103 = vpack.c.b16 %v1101, %v1101
  %v1106 = vsel %vm115, %v1103, 0
  %1108 = vmatprep.subr.bf16.mxu0 0
  %1109 = vmatpush1.bf16.msra.mxu0 %v105
  %1110 = vmatprep.subr.bf16.mxu0 0
  %1111 = vmatpush1.bf16.msra.mxu0 %v104
  %1112 = vmatprep.subr.bf16.mxu0 0
  %1113 = vmatpush1.bf16.msra.mxu0 %v103
  %1114 = vmatprep.subr.bf16.mxu0 0
  %1115 = vmatpush1.bf16.msra.mxu0 %v102
  %1116 = vmatprep.subr.bf16.mxu0 0
  %1117 = vmatpush1.bf16.msra.mxu0 %v101
  %1118 = vmatprep.subr.bf16.mxu0 0
  %1119 = vmatpush1.bf16.msra.mxu0 %v100
  %1120 = vmatprep.subr.bf16.mxu0 0
  %1121 = vmatpush1.bf16.msra.mxu0 %v99
  %1122 = vmatprep.subr.bf16.mxu0 0
  %1123 = vmatpush1.bf16.msra.mxu0 %v98
  %1124 = vmatprep.subr.bf16.mxu0 0
  %1125 = vmatpush2.bf16.msra.mxu0 0
  %1126 = vmatprep.subr.bf16.mxu0 0
  %1127 = vmatpush2.bf16.msra.mxu0 0
  %1128 = vmatprep.subr.bf16.mxu0 0
  %1129 = vmatpush2.bf16.msra.mxu0 0
  %1130 = vmatprep.subr.bf16.mxu0 0
  %1131 = vmatpush2.bf16.msra.mxu0 0
  %1132 = vmatprep.subr.bf16.mxu0 0
  %1133 = vmatpush2.bf16.msra.mxu0 0
  %1134 = vmatprep.subr.bf16.mxu0 0
  %1135 = vmatpush2.bf16.msra.mxu0 0
  %1136 = vmatprep.subr.bf16.mxu0 0
  %1137 = vmatpush2.bf16.msra.mxu0 0
  %1138 = vmatprep.subr.bf16.mxu0 0
  %1139 = vmatpush2.bf16.msra.mxu0 %v121
  %1140 = vmatprep.mubr.bf16.mxu0 %v1106
  %1141 = vmatmul.mubr.bf16.gmra.mxu0 %v1102
  %v1142 = vpop.f32.mrf.mxu0
  %v1143 = vadd.f32 0.0, %v1142
  %v1144 = vpop.f32.mrf.mxu0
  %v1145 = vpop.f32.mrf.mxu0
  %v1146 = vpop.f32.mrf.mxu0
  %1147 = vdwg.mxu0
  %s1148 = scalar_lea.vmem %s0, 152
  %v1149 = vld [vmem:[%s1148] sm:$0xff]
  %v1151 = vunpack.c.l.b16 %v1149
  %v1152 = vunpack.c.h.b16 %v1149
  %v1153 = vpack.c.b16 %v1151, %v1151
  %v1154 = vpack.c.b16 %v1152, %v1152
  %v1157 = vsel %vm115, %v1154, 0
  %1159 = vmatprep.subr.bf16.mxu0 0
  %1160 = vmatpush1.bf16.msra.mxu0 %v105
  %1161 = vmatprep.subr.bf16.mxu0 0
  %1162 = vmatpush1.bf16.msra.mxu0 %v104
  %1163 = vmatprep.subr.bf16.mxu0 0
  %1164 = vmatpush1.bf16.msra.mxu0 %v103
  %1165 = vmatprep.subr.bf16.mxu0 0
  %1166 = vmatpush1.bf16.msra.mxu0 %v102
  %1167 = vmatprep.subr.bf16.mxu0 0
  %1168 = vmatpush1.bf16.msra.mxu0 %v101
  %1169 = vmatprep.subr.bf16.mxu0 0
  %1170 = vmatpush1.bf16.msra.mxu0 %v100
  %1171 = vmatprep.subr.bf16.mxu0 0
  %1172 = vmatpush1.bf16.msra.mxu0 %v99
  %1173 = vmatprep.subr.bf16.mxu0 0
  %1174 = vmatpush1.bf16.msra.mxu0 %v98
  %1175 = vmatprep.subr.bf16.mxu0 0
  %1176 = vmatpush2.bf16.msra.mxu0 0
  %1177 = vmatprep.subr.bf16.mxu0 0
  %1178 = vmatpush2.bf16.msra.mxu0 0
  %1179 = vmatprep.subr.bf16.mxu0 0
  %1180 = vmatpush2.bf16.msra.mxu0 0
  %1181 = vmatprep.subr.bf16.mxu0 0
  %1182 = vmatpush2.bf16.msra.mxu0 0
  %1183 = vmatprep.subr.bf16.mxu0 0
  %1184 = vmatpush2.bf16.msra.mxu0 0
  %1185 = vmatprep.subr.bf16.mxu0 0
  %1186 = vmatpush2.bf16.msra.mxu0 0
  %1187 = vmatprep.subr.bf16.mxu0 0
  %1188 = vmatpush2.bf16.msra.mxu0 0
  %1189 = vmatprep.subr.bf16.mxu0 0
  %1190 = vmatpush2.bf16.msra.mxu0 %v121
  %1191 = vmatprep.mubr.bf16.mxu0 %v1157
  %1192 = vmatmul.mubr.bf16.gmra.mxu0 %v1153
  %v1193 = vpop.f32.mrf.mxu0
  %v1194 = vadd.f32 0.0, %v1193
  %v1195 = vpop.f32.mrf.mxu0
  %v1196 = vpop.f32.mrf.mxu0
  %v1197 = vpop.f32.mrf.mxu0
  %1198 = vdwg.mxu0
  %v1199 = vmax.f32 %v1143, %v1194
  %s1200 = scalar_lea.vmem %s0, 160
  %v1201 = vld [vmem:[%s1200] sm:$0xff]
  %v1203 = vunpack.c.l.b16 %v1201
  %v1204 = vunpack.c.h.b16 %v1201
  %v1205 = vpack.c.b16 %v1203, %v1203
  %v1206 = vpack.c.b16 %v1204, %v1204
  %v1209 = vsel %vm115, %v1206, 0
  %1211 = vmatprep.subr.bf16.mxu0 0
  %1212 = vmatpush1.bf16.msra.mxu0 %v105
  %1213 = vmatprep.subr.bf16.mxu0 0
  %1214 = vmatpush1.bf16.msra.mxu0 %v104
  %1215 = vmatprep.subr.bf16.mxu0 0
  %1216 = vmatpush1.bf16.msra.mxu0 %v103
  %1217 = vmatprep.subr.bf16.mxu0 0
  %1218 = vmatpush1.bf16.msra.mxu0 %v102
  %1219 = vmatprep.subr.bf16.mxu0 0
  %1220 = vmatpush1.bf16.msra.mxu0 %v101
  %1221 = vmatprep.subr.bf16.mxu0 0
  %1222 = vmatpush1.bf16.msra.mxu0 %v100
  %1223 = vmatprep.subr.bf16.mxu0 0
  %1224 = vmatpush1.bf16.msra.mxu0 %v99
  %1225 = vmatprep.subr.bf16.mxu0 0
  %1226 = vmatpush1.bf16.msra.mxu0 %v98
  %1227 = vmatprep.subr.bf16.mxu0 0
  %1228 = vmatpush2.bf16.msra.mxu0 0
  %1229 = vmatprep.subr.bf16.mxu0 0
  %1230 = vmatpush2.bf16.msra.mxu0 0
  %1231 = vmatprep.subr.bf16.mxu0 0
  %1232 = vmatpush2.bf16.msra.mxu0 0
  %1233 = vmatprep.subr.bf16.mxu0 0
  %1234 = vmatpush2.bf16.msra.mxu0 0
  %1235 = vmatprep.subr.bf16.mxu0 0
  %1236 = vmatpush2.bf16.msra.mxu0 0
  %1237 = vmatprep.subr.bf16.mxu0 0
  %1238 = vmatpush2.bf16.msra.mxu0 0
  %1239 = vmatprep.subr.bf16.mxu0 0
  %1240 = vmatpush2.bf16.msra.mxu0 0
  %1241 = vmatprep.subr.bf16.mxu0 0
  %1242 = vmatpush2.bf16.msra.mxu0 %v121
  %1243 = vmatprep.mubr.bf16.mxu0 %v1209
  %1244 = vmatmul.mubr.bf16.gmra.mxu0 %v1205
  %v1245 = vpop.f32.mrf.mxu0
  %v1246 = vadd.f32 0.0, %v1245
  %v1247 = vpop.f32.mrf.mxu0
  %v1248 = vpop.f32.mrf.mxu0
  %v1249 = vpop.f32.mrf.mxu0
  %1250 = vdwg.mxu0
  %v1251 = vmax.f32 %v1199, %v1246
  %v1252 = vadd.f32 %v1251, %v271
  %vm1253 = vcmp.gt.f32.partialorder %v1252, 0.0
  %v1254 = vmul.f32 %v1252, 1.442695
  %v1255 = vpow.pop %v1254
  %v1256 = vsub.f32 %v1255, 1.0
  %v1257 = vsel %vm1253, %v1252, %v1256
  %v1258 = vpack.c.bf16 %v1257, %v1257
  %1259 = vst.msk [vmem:[#allocation2 + $0x18] sm:$0xf] %vm280, %v1258
  %s1260 = scalar_lea.vmem %s0, 168
  %v1261 = vld [vmem:[%s1260] sm:$0xff]
  %v1263 = vunpack.c.l.b16 %v1261
  %v1264 = vunpack.c.h.b16 %v1261
  %v1265 = vpack.c.b16 %v1263, %v1263
  %v1266 = vpack.c.b16 %v1264, %v1264
  %v1269 = vsel %vm115, %v1266, 0
  %1271 = vmatprep.subr.bf16.mxu0 0
  %1272 = vmatpush1.bf16.msra.mxu0 %v105
  %1273 = vmatprep.subr.bf16.mxu0 0
  %1274 = vmatpush1.bf16.msra.mxu0 %v104
  %1275 = vmatprep.subr.bf16.mxu0 0
  %1276 = vmatpush1.bf16.msra.mxu0 %v103
  %1277 = vmatprep.subr.bf16.mxu0 0
  %1278 = vmatpush1.bf16.msra.mxu0 %v102
  %1279 = vmatprep.subr.bf16.mxu0 0
  %1280 = vmatpush1.bf16.msra.mxu0 %v101
  %1281 = vmatprep.subr.bf16.mxu0 0
  %1282 = vmatpush1.bf16.msra.mxu0 %v100
  %1283 = vmatprep.subr.bf16.mxu0 0
  %1284 = vmatpush1.bf16.msra.mxu0 %v99
  %1285 = vmatprep.subr.bf16.mxu0 0
  %1286 = vmatpush1.bf16.msra.mxu0 %v98
  %1287 = vmatprep.subr.bf16.mxu0 0
  %1288 = vmatpush2.bf16.msra.mxu0 0
  %1289 = vmatprep.subr.bf16.mxu0 0
  %1290 = vmatpush2.bf16.msra.mxu0 0
  %1291 = vmatprep.subr.bf16.mxu0 0
  %1292 = vmatpush2.bf16.msra.mxu0 0
  %1293 = vmatprep.subr.bf16.mxu0 0
  %1294 = vmatpush2.bf16.msra.mxu0 0
  %1295 = vmatprep.subr.bf16.mxu0 0
  %1296 = vmatpush2.bf16.msra.mxu0 0
  %1297 = vmatprep.subr.bf16.mxu0 0
  %1298 = vmatpush2.bf16.msra.mxu0 0
  %1299 = vmatprep.subr.bf16.mxu0 0
  %1300 = vmatpush2.bf16.msra.mxu0 0
  %1301 = vmatprep.subr.bf16.mxu0 0
  %1302 = vmatpush2.bf16.msra.mxu0 %v121
  %1303 = vmatprep.mubr.bf16.mxu0 %v1269
  %1304 = vmatmul.mubr.bf16.gmra.mxu0 %v1265
  %v1305 = vpop.f32.mrf.mxu0
  %v1306 = vadd.f32 0.0, %v1305
  %v1307 = vpop.f32.mrf.mxu0
  %v1308 = vpop.f32.mrf.mxu0
  %v1309 = vpop.f32.mrf.mxu0
  %1310 = vdwg.mxu0
  %s1311 = scalar_lea.vmem %s0, 176
  %v1312 = vld [vmem:[%s1311] sm:$0xff]
  %v1314 = vunpack.c.l.b16 %v1312
  %v1315 = vunpack.c.h.b16 %v1312
  %v1316 = vpack.c.b16 %v1314, %v1314
  %v1317 = vpack.c.b16 %v1315, %v1315
  %v1320 = vsel %vm115, %v1317, 0
  %1322 = vmatprep.subr.bf16.mxu0 0
  %1323 = vmatpush1.bf16.msra.mxu0 %v105
  %1324 = vmatprep.subr.bf16.mxu0 0
  %1325 = vmatpush1.bf16.msra.mxu0 %v104
  %1326 = vmatprep.subr.bf16.mxu0 0
  %1327 = vmatpush1.bf16.msra.mxu0 %v103
  %1328 = vmatprep.subr.bf16.mxu0 0
  %1329 = vmatpush1.bf16.msra.mxu0 %v102
  %1330 = vmatprep.subr.bf16.mxu0 0
  %1331 = vmatpush1.bf16.msra.mxu0 %v101
  %1332 = vmatprep.subr.bf16.mxu0 0
  %1333 = vmatpush1.bf16.msra.mxu0 %v100
  %1334 = vmatprep.subr.bf16.mxu0 0
  %1335 = vmatpush1.bf16.msra.mxu0 %v99
  %1336 = vmatprep.subr.bf16.mxu0 0
  %1337 = vmatpush1.bf16.msra.mxu0 %v98
  %1338 = vmatprep.subr.bf16.mxu0 0
  %1339 = vmatpush2.bf16.msra.mxu0 0
  %1340 = vmatprep.subr.bf16.mxu0 0
  %1341 = vmatpush2.bf16.msra.mxu0 0
  %1342 = vmatprep.subr.bf16.mxu0 0
  %1343 = vmatpush2.bf16.msra.mxu0 0
  %1344 = vmatprep.subr.bf16.mxu0 0
  %1345 = vmatpush2.bf16.msra.mxu0 0
  %1346 = vmatprep.subr.bf16.mxu0 0
  %1347 = vmatpush2.bf16.msra.mxu0 0
  %1348 = vmatprep.subr.bf16.mxu0 0
  %1349 = vmatpush2.bf16.msra.mxu0 0
  %1350 = vmatprep.subr.bf16.mxu0 0
  %1351 = vmatpush2.bf16.msra.mxu0 0
  %1352 = vmatprep.subr.bf16.mxu0 0
  %1353 = vmatpush2.bf16.msra.mxu0 %v121
  %1354 = vmatprep.mubr.bf16.mxu0 %v1320
  %1355 = vmatmul.mubr.bf16.gmra.mxu0 %v1316
  %v1356 = vpop.f32.mrf.mxu0
  %v1357 = vadd.f32 0.0, %v1356
  %v1358 = vpop.f32.mrf.mxu0
  %v1359 = vpop.f32.mrf.mxu0
  %v1360 = vpop.f32.mrf.mxu0
  %1361 = vdwg.mxu0
  %v1362 = vmax.f32 %v1306, %v1357
  %s1363 = scalar_lea.vmem %s0, 184
  %v1364 = vld [vmem:[%s1363] sm:$0xff]
  %v1366 = vunpack.c.l.b16 %v1364
  %v1367 = vunpack.c.h.b16 %v1364
  %v1368 = vpack.c.b16 %v1366, %v1366
  %v1369 = vpack.c.b16 %v1367, %v1367
  %v1372 = vsel %vm115, %v1369, 0
  %1374 = vmatprep.subr.bf16.mxu0 0
  %1375 = vmatpush1.bf16.msra.mxu0 %v105
  %1376 = vmatprep.subr.bf16.mxu0 0
  %1377 = vmatpush1.bf16.msra.mxu0 %v104
  %1378 = vmatprep.subr.bf16.mxu0 0
  %1379 = vmatpush1.bf16.msra.mxu0 %v103
  %1380 = vmatprep.subr.bf16.mxu0 0
  %1381 = vmatpush1.bf16.msra.mxu0 %v102
  %1382 = vmatprep.subr.bf16.mxu0 0
  %1383 = vmatpush1.bf16.msra.mxu0 %v101
  %1384 = vmatprep.subr.bf16.mxu0 0
  %1385 = vmatpush1.bf16.msra.mxu0 %v100
  %1386 = vmatprep.subr.bf16.mxu0 0
  %1387 = vmatpush1.bf16.msra.mxu0 %v99
  %1388 = vmatprep.subr.bf16.mxu0 0
  %1389 = vmatpush1.bf16.msra.mxu0 %v98
  %1390 = vmatprep.subr.bf16.mxu0 0
  %1391 = vmatpush2.bf16.msra.mxu0 0
  %1392 = vmatprep.subr.bf16.mxu0 0
  %1393 = vmatpush2.bf16.msra.mxu0 0
  %1394 = vmatprep.subr.bf16.mxu0 0
  %1395 = vmatpush2.bf16.msra.mxu0 0
  %1396 = vmatprep.subr.bf16.mxu0 0
  %1397 = vmatpush2.bf16.msra.mxu0 0
  %1398 = vmatprep.subr.bf16.mxu0 0
  %1399 = vmatpush2.bf16.msra.mxu0 0
  %1400 = vmatprep.subr.bf16.mxu0 0
  %1401 = vmatpush2.bf16.msra.mxu0 0
  %1402 = vmatprep.subr.bf16.mxu0 0
  %1403 = vmatpush2.bf16.msra.mxu0 0
  %1404 = vmatprep.subr.bf16.mxu0 0
  %1405 = vmatpush2.bf16.msra.mxu0 %v121
  %1406 = vmatprep.mubr.bf16.mxu0 %v1372
  %1407 = vmatmul.mubr.bf16.gmra.mxu0 %v1368
  %v1408 = vpop.f32.mrf.mxu0
  %v1409 = vadd.f32 0.0, %v1408
  %v1410 = vpop.f32.mrf.mxu0
  %v1411 = vpop.f32.mrf.mxu0
  %v1412 = vpop.f32.mrf.mxu0
  %1413 = vdwg.mxu0
  %v1414 = vmax.f32 %v1362, %v1409
  %v1415 = vadd.f32 %v1414, %v271
  %vm1416 = vcmp.gt.f32.partialorder %v1415, 0.0
  %v1417 = vmul.f32 %v1415, 1.442695
  %v1418 = vpow.pop %v1417
  %v1419 = vsub.f32 %v1418, 1.0
  %v1420 = vsel %vm1416, %v1415, %v1419
  %v1421 = vpack.c.bf16 %v1420, %v1420
  %1422 = vst.msk [vmem:[#allocation2 + $0x1c] sm:$0xf] %vm280, %v1421
  %s1423 = scalar_lea.vmem %s0, 192
  %v1424 = vld [vmem:[%s1423] sm:$0xff]
  %v1426 = vunpack.c.l.b16 %v1424
  %v1427 = vunpack.c.h.b16 %v1424
  %v1428 = vpack.c.b16 %v1426, %v1426
  %v1429 = vpack.c.b16 %v1427, %v1427
  %v1432 = vsel %vm115, %v1429, 0
  %1434 = vmatprep.subr.bf16.mxu0 0
  %1435 = vmatpush1.bf16.msra.mxu0 %v105
  %1436 = vmatprep.subr.bf16.mxu0 0
  %1437 = vmatpush1.bf16.msra.mxu0 %v104
  %1438 = vmatprep.subr.bf16.mxu0 0
  %1439 = vmatpush1.bf16.msra.mxu0 %v103
  %1440 = vmatprep.subr.bf16.mxu0 0
  %1441 = vmatpush1.bf16.msra.mxu0 %v102
  %1442 = vmatprep.subr.bf16.mxu0 0
  %1443 = vmatpush1.bf16.msra.mxu0 %v101
  %1444 = vmatprep.subr.bf16.mxu0 0
  %1445 = vmatpush1.bf16.msra.mxu0 %v100
  %1446 = vmatprep.subr.bf16.mxu0 0
  %1447 = vmatpush1.bf16.msra.mxu0 %v99
  %1448 = vmatprep.subr.bf16.mxu0 0
  %1449 = vmatpush1.bf16.msra.mxu0 %v98
  %1450 = vmatprep.subr.bf16.mxu0 0
  %1451 = vmatpush2.bf16.msra.mxu0 0
  %1452 = vmatprep.subr.bf16.mxu0 0
  %1453 = vmatpush2.bf16.msra.mxu0 0
  %1454 = vmatprep.subr.bf16.mxu0 0
  %1455 = vmatpush2.bf16.msra.mxu0 0
  %1456 = vmatprep.subr.bf16.mxu0 0
  %1457 = vmatpush2.bf16.msra.mxu0 0
  %1458 = vmatprep.subr.bf16.mxu0 0
  %1459 = vmatpush2.bf16.msra.mxu0 0
  %1460 = vmatprep.subr.bf16.mxu0 0
  %1461 = vmatpush2.bf16.msra.mxu0 0
  %1462 = vmatprep.subr.bf16.mxu0 0
  %1463 = vmatpush2.bf16.msra.mxu0 0
  %1464 = vmatprep.subr.bf16.mxu0 0
  %1465 = vmatpush2.bf16.msra.mxu0 %v121
  %1466 = vmatprep.mubr.bf16.mxu0 %v1432
  %1467 = vmatmul.mubr.bf16.gmra.mxu0 %v1428
  %v1468 = vpop.f32.mrf.mxu0
  %v1469 = vadd.f32 0.0, %v1468
  %v1470 = vpop.f32.mrf.mxu0
  %v1471 = vpop.f32.mrf.mxu0
  %v1472 = vpop.f32.mrf.mxu0
  %1473 = vdwg.mxu0
  %s1474 = scalar_lea.vmem %s0, 200
  %v1475 = vld [vmem:[%s1474] sm:$0xff]
  %v1477 = vunpack.c.l.b16 %v1475
  %v1478 = vunpack.c.h.b16 %v1475
  %v1479 = vpack.c.b16 %v1477, %v1477
  %v1480 = vpack.c.b16 %v1478, %v1478
  %v1483 = vsel %vm115, %v1480, 0
  %1485 = vmatprep.subr.bf16.mxu0 0
  %1486 = vmatpush1.bf16.msra.mxu0 %v105
  %1487 = vmatprep.subr.bf16.mxu0 0
  %1488 = vmatpush1.bf16.msra.mxu0 %v104
  %1489 = vmatprep.subr.bf16.mxu0 0
  %1490 = vmatpush1.bf16.msra.mxu0 %v103
  %1491 = vmatprep.subr.bf16.mxu0 0
  %1492 = vmatpush1.bf16.msra.mxu0 %v102
  %1493 = vmatprep.subr.bf16.mxu0 0
  %1494 = vmatpush1.bf16.msra.mxu0 %v101
  %1495 = vmatprep.subr.bf16.mxu0 0
  %1496 = vmatpush1.bf16.msra.mxu0 %v100
  %1497 = vmatprep.subr.bf16.mxu0 0
  %1498 = vmatpush1.bf16.msra.mxu0 %v99
  %1499 = vmatprep.subr.bf16.mxu0 0
  %1500 = vmatpush1.bf16.msra.mxu0 %v98
  %1501 = vmatprep.subr.bf16.mxu0 0
  %1502 = vmatpush2.bf16.msra.mxu0 0
  %1503 = vmatprep.subr.bf16.mxu0 0
  %1504 = vmatpush2.bf16.msra.mxu0 0
  %1505 = vmatprep.subr.bf16.mxu0 0
  %1506 = vmatpush2.bf16.msra.mxu0 0
  %1507 = vmatprep.subr.bf16.mxu0 0
  %1508 = vmatpush2.bf16.msra.mxu0 0
  %1509 = vmatprep.subr.bf16.mxu0 0
  %1510 = vmatpush2.bf16.msra.mxu0 0
  %1511 = vmatprep.subr.bf16.mxu0 0
  %1512 = vmatpush2.bf16.msra.mxu0 0
  %1513 = vmatprep.subr.bf16.mxu0 0
  %1514 = vmatpush2.bf16.msra.mxu0 0
  %1515 = vmatprep.subr.bf16.mxu0 0
  %1516 = vmatpush2.bf16.msra.mxu0 %v121
  %1517 = vmatprep.mubr.bf16.mxu0 %v1483
  %1518 = vmatmul.mubr.bf16.gmra.mxu0 %v1479
  %v1519 = vpop.f32.mrf.mxu0
  %v1520 = vadd.f32 0.0, %v1519
  %v1521 = vpop.f32.mrf.mxu0
  %v1522 = vpop.f32.mrf.mxu0
  %v1523 = vpop.f32.mrf.mxu0
  %1524 = vdwg.mxu0
  %v1525 = vmax.f32 %v1469, %v1520
  %s1526 = scalar_lea.vmem %s0, 208
  %v1527 = vld [vmem:[%s1526] sm:$0xff]
  %v1529 = vunpack.c.l.b16 %v1527
  %v1530 = vunpack.c.h.b16 %v1527
  %v1531 = vpack.c.b16 %v1529, %v1529
  %v1532 = vpack.c.b16 %v1530, %v1530
  %v1535 = vsel %vm115, %v1532, 0
  %1537 = vmatprep.subr.bf16.mxu0 0
  %1538 = vmatpush1.bf16.msra.mxu0 %v105
  %1539 = vmatprep.subr.bf16.mxu0 0
  %1540 = vmatpush1.bf16.msra.mxu0 %v104
  %1541 = vmatprep.subr.bf16.mxu0 0
  %1542 = vmatpush1.bf16.msra.mxu0 %v103
  %1543 = vmatprep.subr.bf16.mxu0 0
  %1544 = vmatpush1.bf16.msra.mxu0 %v102
  %1545 = vmatprep.subr.bf16.mxu0 0
  %1546 = vmatpush1.bf16.msra.mxu0 %v101
  %1547 = vmatprep.subr.bf16.mxu0 0
  %1548 = vmatpush1.bf16.msra.mxu0 %v100
  %1549 = vmatprep.subr.bf16.mxu0 0
  %1550 = vmatpush1.bf16.msra.mxu0 %v99
  %1551 = vmatprep.subr.bf16.mxu0 0
  %1552 = vmatpush1.bf16.msra.mxu0 %v98
  %1553 = vmatprep.subr.bf16.mxu0 0
  %1554 = vmatpush2.bf16.msra.mxu0 0
  %1555 = vmatprep.subr.bf16.mxu0 0
  %1556 = vmatpush2.bf16.msra.mxu0 0
  %1557 = vmatprep.subr.bf16.mxu0 0
  %1558 = vmatpush2.bf16.msra.mxu0 0
  %1559 = vmatprep.subr.bf16.mxu0 0
  %1560 = vmatpush2.bf16.msra.mxu0 0
  %1561 = vmatprep.subr.bf16.mxu0 0
  %1562 = vmatpush2.bf16.msra.mxu0 0
  %1563 = vmatprep.subr.bf16.mxu0 0
  %1564 = vmatpush2.bf16.msra.mxu0 0
  %1565 = vmatprep.subr.bf16.mxu0 0
  %1566 = vmatpush2.bf16.msra.mxu0 0
  %1567 = vmatprep.subr.bf16.mxu0 0
  %1568 = vmatpush2.bf16.msra.mxu0 %v121
  %1569 = vmatprep.mubr.bf16.mxu0 %v1535
  %1570 = vmatmul.mubr.bf16.gmra.mxu0 %v1531
  %v1571 = vpop.f32.mrf.mxu0
  %v1572 = vadd.f32 0.0, %v1571
  %v1573 = vpop.f32.mrf.mxu0
  %v1574 = vpop.f32.mrf.mxu0
  %v1575 = vpop.f32.mrf.mxu0
  %1576 = vdwg.mxu0
  %v1577 = vmax.f32 %v1525, %v1572
  %v1578 = vadd.f32 %v1577, %v271
  %vm1579 = vcmp.gt.f32.partialorder %v1578, 0.0
  %v1580 = vmul.f32 %v1578, 1.442695
  %v1581 = vpow.pop %v1580
  %v1582 = vsub.f32 %v1581, 1.0
  %v1583 = vsel %vm1579, %v1578, %v1582
  %v1584 = vpack.c.bf16 %v1583, %v1583
  %1585 = vst.msk [vmem:[#allocation2 + $0x20] sm:$0xf] %vm280, %v1584
  %s1586 = scalar_lea.vmem %s0, 216
  %v1587 = vld [vmem:[%s1586] sm:$0xff]
  %v1589 = vunpack.c.l.b16 %v1587
  %v1590 = vunpack.c.h.b16 %v1587
  %v1591 = vpack.c.b16 %v1589, %v1589
  %v1592 = vpack.c.b16 %v1590, %v1590
  %v1595 = vsel %vm115, %v1592, 0
  %1597 = vmatprep.subr.bf16.mxu0 0
  %1598 = vmatpush1.bf16.msra.mxu0 %v105
  %1599 = vmatprep.subr.bf16.mxu0 0
  %1600 = vmatpush1.bf16.msra.mxu0 %v104
  %1601 = vmatprep.subr.bf16.mxu0 0
  %1602 = vmatpush1.bf16.msra.mxu0 %v103
  %1603 = vmatprep.subr.bf16.mxu0 0
  %1604 = vmatpush1.bf16.msra.mxu0 %v102
  %1605 = vmatprep.subr.bf16.mxu0 0
  %1606 = vmatpush1.bf16.msra.mxu0 %v101
  %1607 = vmatprep.subr.bf16.mxu0 0
  %1608 = vmatpush1.bf16.msra.mxu0 %v100
  %1609 = vmatprep.subr.bf16.mxu0 0
  %1610 = vmatpush1.bf16.msra.mxu0 %v99
  %1611 = vmatprep.subr.bf16.mxu0 0
  %1612 = vmatpush1.bf16.msra.mxu0 %v98
  %1613 = vmatprep.subr.bf16.mxu0 0
  %1614 = vmatpush2.bf16.msra.mxu0 0
  %1615 = vmatprep.subr.bf16.mxu0 0
  %1616 = vmatpush2.bf16.msra.mxu0 0
  %1617 = vmatprep.subr.bf16.mxu0 0
  %1618 = vmatpush2.bf16.msra.mxu0 0
  %1619 = vmatprep.subr.bf16.mxu0 0
  %1620 = vmatpush2.bf16.msra.mxu0 0
  %1621 = vmatprep.subr.bf16.mxu0 0
  %1622 = vmatpush2.bf16.msra.mxu0 0
  %1623 = vmatprep.subr.bf16.mxu0 0
  %1624 = vmatpush2.bf16.msra.mxu0 0
  %1625 = vmatprep.subr.bf16.mxu0 0
  %1626 = vmatpush2.bf16.msra.mxu0 0
  %1627 = vmatprep.subr.bf16.mxu0 0
  %1628 = vmatpush2.bf16.msra.mxu0 %v121
  %1629 = vmatprep.mubr.bf16.mxu0 %v1595
  %1630 = vmatmul.mubr.bf16.gmra.mxu0 %v1591
  %v1631 = vpop.f32.mrf.mxu0
  %v1632 = vadd.f32 0.0, %v1631
  %v1633 = vpop.f32.mrf.mxu0
  %v1634 = vpop.f32.mrf.mxu0
  %v1635 = vpop.f32.mrf.mxu0
  %1636 = vdwg.mxu0
  %s1637 = scalar_lea.vmem %s0, 224
  %v1638 = vld [vmem:[%s1637] sm:$0xff]
  %v1640 = vunpack.c.l.b16 %v1638
  %v1641 = vunpack.c.h.b16 %v1638
  %v1642 = vpack.c.b16 %v1640, %v1640
  %v1643 = vpack.c.b16 %v1641, %v1641
  %v1646 = vsel %vm115, %v1643, 0
  %1648 = vmatprep.subr.bf16.mxu0 0
  %1649 = vmatpush1.bf16.msra.mxu0 %v105
  %1650 = vmatprep.subr.bf16.mxu0 0
  %1651 = vmatpush1.bf16.msra.mxu0 %v104
  %1652 = vmatprep.subr.bf16.mxu0 0
  %1653 = vmatpush1.bf16.msra.mxu0 %v103
  %1654 = vmatprep.subr.bf16.mxu0 0
  %1655 = vmatpush1.bf16.msra.mxu0 %v102
  %1656 = vmatprep.subr.bf16.mxu0 0
  %1657 = vmatpush1.bf16.msra.mxu0 %v101
  %1658 = vmatprep.subr.bf16.mxu0 0
  %1659 = vmatpush1.bf16.msra.mxu0 %v100
  %1660 = vmatprep.subr.bf16.mxu0 0
  %1661 = vmatpush1.bf16.msra.mxu0 %v99
  %1662 = vmatprep.subr.bf16.mxu0 0
  %1663 = vmatpush1.bf16.msra.mxu0 %v98
  %1664 = vmatprep.subr.bf16.mxu0 0
  %1665 = vmatpush2.bf16.msra.mxu0 0
  %1666 = vmatprep.subr.bf16.mxu0 0
  %1667 = vmatpush2.bf16.msra.mxu0 0
  %1668 = vmatprep.subr.bf16.mxu0 0
  %1669 = vmatpush2.bf16.msra.mxu0 0
  %1670 = vmatprep.subr.bf16.mxu0 0
  %1671 = vmatpush2.bf16.msra.mxu0 0
  %1672 = vmatprep.subr.bf16.mxu0 0
  %1673 = vmatpush2.bf16.msra.mxu0 0
  %1674 = vmatprep.subr.bf16.mxu0 0
  %1675 = vmatpush2.bf16.msra.mxu0 0
  %1676 = vmatprep.subr.bf16.mxu0 0
  %1677 = vmatpush2.bf16.msra.mxu0 0
  %1678 = vmatprep.subr.bf16.mxu0 0
  %1679 = vmatpush2.bf16.msra.mxu0 %v121
  %1680 = vmatprep.mubr.bf16.mxu0 %v1646
  %1681 = vmatmul.mubr.bf16.gmra.mxu0 %v1642
  %v1682 = vpop.f32.mrf.mxu0
  %v1683 = vadd.f32 0.0, %v1682
  %v1684 = vpop.f32.mrf.mxu0
  %v1685 = vpop.f32.mrf.mxu0
  %v1686 = vpop.f32.mrf.mxu0
  %1687 = vdwg.mxu0
  %v1688 = vmax.f32 %v1632, %v1683
  %s1689 = scalar_lea.vmem %s0, 232
  %v1690 = vld [vmem:[%s1689] sm:$0xff]
  %v1692 = vunpack.c.l.b16 %v1690
  %v1693 = vunpack.c.h.b16 %v1690
  %v1694 = vpack.c.b16 %v1692, %v1692
  %v1695 = vpack.c.b16 %v1693, %v1693
  %v1698 = vsel %vm115, %v1695, 0
  %1700 = vmatprep.subr.bf16.mxu0 0
  %1701 = vmatpush1.bf16.msra.mxu0 %v105
  %1702 = vmatprep.subr.bf16.mxu0 0
  %1703 = vmatpush1.bf16.msra.mxu0 %v104
  %1704 = vmatprep.subr.bf16.mxu0 0
  %1705 = vmatpush1.bf16.msra.mxu0 %v103
  %1706 = vmatprep.subr.bf16.mxu0 0
  %1707 = vmatpush1.bf16.msra.mxu0 %v102
  %1708 = vmatprep.subr.bf16.mxu0 0
  %1709 = vmatpush1.bf16.msra.mxu0 %v101
  %1710 = vmatprep.subr.bf16.mxu0 0
  %1711 = vmatpush1.bf16.msra.mxu0 %v100
  %1712 = vmatprep.subr.bf16.mxu0 0
  %1713 = vmatpush1.bf16.msra.mxu0 %v99
  %1714 = vmatprep.subr.bf16.mxu0 0
  %1715 = vmatpush1.bf16.msra.mxu0 %v98
  %1716 = vmatprep.subr.bf16.mxu0 0
  %1717 = vmatpush2.bf16.msra.mxu0 0
  %1718 = vmatprep.subr.bf16.mxu0 0
  %1719 = vmatpush2.bf16.msra.mxu0 0
  %1720 = vmatprep.subr.bf16.mxu0 0
  %1721 = vmatpush2.bf16.msra.mxu0 0
  %1722 = vmatprep.subr.bf16.mxu0 0
  %1723 = vmatpush2.bf16.msra.mxu0 0
  %1724 = vmatprep.subr.bf16.mxu0 0
  %1725 = vmatpush2.bf16.msra.mxu0 0
  %1726 = vmatprep.subr.bf16.mxu0 0
  %1727 = vmatpush2.bf16.msra.mxu0 0
  %1728 = vmatprep.subr.bf16.mxu0 0
  %1729 = vmatpush2.bf16.msra.mxu0 0
  %1730 = vmatprep.subr.bf16.mxu0 0
  %1731 = vmatpush2.bf16.msra.mxu0 %v121
  %1732 = vmatprep.mubr.bf16.mxu0 %v1698
  %1733 = vmatmul.mubr.bf16.gmra.mxu0 %v1694
  %v1734 = vpop.f32.mrf.mxu0
  %v1735 = vadd.f32 0.0, %v1734
  %v1736 = vpop.f32.mrf.mxu0
  %v1737 = vpop.f32.mrf.mxu0
  %v1738 = vpop.f32.mrf.mxu0
  %1739 = vdwg.mxu0
  %v1740 = vmax.f32 %v1688, %v1735
  %v1741 = vadd.f32 %v1740, %v271
  %vm1742 = vcmp.gt.f32.partialorder %v1741, 0.0
  %v1743 = vmul.f32 %v1741, 1.442695
  %v1744 = vpow.pop %v1743
  %v1745 = vsub.f32 %v1744, 1.0
  %v1746 = vsel %vm1742, %v1741, %v1745
  %v1747 = vpack.c.bf16 %v1746, %v1746
  %1748 = vst.msk [vmem:[#allocation2 + $0x24] sm:$0xf] %vm280, %v1747
  %s1749 = scalar_lea.vmem %s0, 240
  %v1750 = vld [vmem:[%s1749] sm:$0xff]
  %v1752 = vunpack.c.l.b16 %v1750
  %v1753 = vunpack.c.h.b16 %v1750
  %v1754 = vpack.c.b16 %v1752, %v1752
  %v1755 = vpack.c.b16 %v1753, %v1753
  %v1758 = vsel %vm115, %v1755, 0
  %1760 = vmatprep.subr.bf16.mxu0 0
  %1761 = vmatpush1.bf16.msra.mxu0 %v105
  %1762 = vmatprep.subr.bf16.mxu0 0
  %1763 = vmatpush1.bf16.msra.mxu0 %v104
  %1764 = vmatprep.subr.bf16.mxu0 0
  %1765 = vmatpush1.bf16.msra.mxu0 %v103
  %1766 = vmatprep.subr.bf16.mxu0 0
  %1767 = vmatpush1.bf16.msra.mxu0 %v102
  %1768 = vmatprep.subr.bf16.mxu0 0
  %1769 = vmatpush1.bf16.msra.mxu0 %v101
  %1770 = vmatprep.subr.bf16.mxu0 0
  %1771 = vmatpush1.bf16.msra.mxu0 %v100
  %1772 = vmatprep.subr.bf16.mxu0 0
  %1773 = vmatpush1.bf16.msra.mxu0 %v99
  %1774 = vmatprep.subr.bf16.mxu0 0
  %1775 = vmatpush1.bf16.msra.mxu0 %v98
  %1776 = vmatprep.subr.bf16.mxu0 0
  %1777 = vmatpush2.bf16.msra.mxu0 0
  %1778 = vmatprep.subr.bf16.mxu0 0
  %1779 = vmatpush2.bf16.msra.mxu0 0
  %1780 = vmatprep.subr.bf16.mxu0 0
  %1781 = vmatpush2.bf16.msra.mxu0 0
  %1782 = vmatprep.subr.bf16.mxu0 0
  %1783 = vmatpush2.bf16.msra.mxu0 0
  %1784 = vmatprep.subr.bf16.mxu0 0
  %1785 = vmatpush2.bf16.msra.mxu0 0
  %1786 = vmatprep.subr.bf16.mxu0 0
  %1787 = vmatpush2.bf16.msra.mxu0 0
  %1788 = vmatprep.subr.bf16.mxu0 0
  %1789 = vmatpush2.bf16.msra.mxu0 0
  %1790 = vmatprep.subr.bf16.mxu0 0
  %1791 = vmatpush2.bf16.msra.mxu0 %v121
  %1792 = vmatprep.mubr.bf16.mxu0 %v1758
  %1793 = vmatmul.mubr.bf16.gmra.mxu0 %v1754
  %v1794 = vpop.f32.mrf.mxu0
  %v1795 = vadd.f32 0.0, %v1794
  %v1796 = vpop.f32.mrf.mxu0
  %v1797 = vpop.f32.mrf.mxu0
  %v1798 = vpop.f32.mrf.mxu0
  %1799 = vdwg.mxu0
  %s1800 = scalar_lea.vmem %s0, 248
  %v1801 = vld [vmem:[%s1800] sm:$0xff]
  %v1803 = vunpack.c.l.b16 %v1801
  %v1804 = vunpack.c.h.b16 %v1801
  %v1805 = vpack.c.b16 %v1803, %v1803
  %v1806 = vpack.c.b16 %v1804, %v1804
  %v1809 = vsel %vm115, %v1806, 0
  %1811 = vmatprep.subr.bf16.mxu0 0
  %1812 = vmatpush1.bf16.msra.mxu0 %v105
  %1813 = vmatprep.subr.bf16.mxu0 0
  %1814 = vmatpush1.bf16.msra.mxu0 %v104
  %1815 = vmatprep.subr.bf16.mxu0 0
  %1816 = vmatpush1.bf16.msra.mxu0 %v103
  %1817 = vmatprep.subr.bf16.mxu0 0
  %1818 = vmatpush1.bf16.msra.mxu0 %v102
  %1819 = vmatprep.subr.bf16.mxu0 0
  %1820 = vmatpush1.bf16.msra.mxu0 %v101
  %1821 = vmatprep.subr.bf16.mxu0 0
  %1822 = vmatpush1.bf16.msra.mxu0 %v100
  %1823 = vmatprep.subr.bf16.mxu0 0
  %1824 = vmatpush1.bf16.msra.mxu0 %v99
  %1825 = vmatprep.subr.bf16.mxu0 0
  %1826 = vmatpush1.bf16.msra.mxu0 %v98
  %1827 = vmatprep.subr.bf16.mxu0 0
  %1828 = vmatpush2.bf16.msra.mxu0 0
  %1829 = vmatprep.subr.bf16.mxu0 0
  %1830 = vmatpush2.bf16.msra.mxu0 0
  %1831 = vmatprep.subr.bf16.mxu0 0
  %1832 = vmatpush2.bf16.msra.mxu0 0
  %1833 = vmatprep.subr.bf16.mxu0 0
  %1834 = vmatpush2.bf16.msra.mxu0 0
  %1835 = vmatprep.subr.bf16.mxu0 0
  %1836 = vmatpush2.bf16.msra.mxu0 0
  %1837 = vmatprep.subr.bf16.mxu0 0
  %1838 = vmatpush2.bf16.msra.mxu0 0
  %1839 = vmatprep.subr.bf16.mxu0 0
  %1840 = vmatpush2.bf16.msra.mxu0 0
  %1841 = vmatprep.subr.bf16.mxu0 0
  %1842 = vmatpush2.bf16.msra.mxu0 %v121
  %1843 = vmatprep.mubr.bf16.mxu0 %v1809
  %1844 = vmatmul.mubr.bf16.gmra.mxu0 %v1805
  %v1845 = vpop.f32.mrf.mxu0
  %v1846 = vadd.f32 0.0, %v1845
  %v1847 = vpop.f32.mrf.mxu0
  %v1848 = vpop.f32.mrf.mxu0
  %v1849 = vpop.f32.mrf.mxu0
  %1850 = vdwg.mxu0
  %v1851 = vmax.f32 %v1795, %v1846
  %s1852 = scalar_lea.vmem %s0, 256
  %v1853 = vld [vmem:[%s1852] sm:$0xff]
  %v1855 = vunpack.c.l.b16 %v1853
  %v1856 = vunpack.c.h.b16 %v1853
  %v1857 = vpack.c.b16 %v1855, %v1855
  %v1858 = vpack.c.b16 %v1856, %v1856
  %v1861 = vsel %vm115, %v1858, 0
  %1863 = vmatprep.subr.bf16.mxu0 0
  %1864 = vmatpush1.bf16.msra.mxu0 %v105
  %1865 = vmatprep.subr.bf16.mxu0 0
  %1866 = vmatpush1.bf16.msra.mxu0 %v104
  %1867 = vmatprep.subr.bf16.mxu0 0
  %1868 = vmatpush1.bf16.msra.mxu0 %v103
  %1869 = vmatprep.subr.bf16.mxu0 0
  %1870 = vmatpush1.bf16.msra.mxu0 %v102
  %1871 = vmatprep.subr.bf16.mxu0 0
  %1872 = vmatpush1.bf16.msra.mxu0 %v101
  %1873 = vmatprep.subr.bf16.mxu0 0
  %1874 = vmatpush1.bf16.msra.mxu0 %v100
  %1875 = vmatprep.subr.bf16.mxu0 0
  %1876 = vmatpush1.bf16.msra.mxu0 %v99
  %1877 = vmatprep.subr.bf16.mxu0 0
  %1878 = vmatpush1.bf16.msra.mxu0 %v98
  %1879 = vmatprep.subr.bf16.mxu0 0
  %1880 = vmatpush2.bf16.msra.mxu0 0
  %1881 = vmatprep.subr.bf16.mxu0 0
  %1882 = vmatpush2.bf16.msra.mxu0 0
  %1883 = vmatprep.subr.bf16.mxu0 0
  %1884 = vmatpush2.bf16.msra.mxu0 0
  %1885 = vmatprep.subr.bf16.mxu0 0
  %1886 = vmatpush2.bf16.msra.mxu0 0
  %1887 = vmatprep.subr.bf16.mxu0 0
  %1888 = vmatpush2.bf16.msra.mxu0 0
  %1889 = vmatprep.subr.bf16.mxu0 0
  %1890 = vmatpush2.bf16.msra.mxu0 0
  %1891 = vmatprep.subr.bf16.mxu0 0
  %1892 = vmatpush2.bf16.msra.mxu0 0
  %1893 = vmatprep.subr.bf16.mxu0 0
  %1894 = vmatpush2.bf16.msra.mxu0 %v121
  %1895 = vmatprep.mubr.bf16.mxu0 %v1861
  %1896 = vmatmul.mubr.bf16.gmra.mxu0 %v1857
  %v1897 = vpop.f32.mrf.mxu0
  %v1898 = vadd.f32 0.0, %v1897
  %v1899 = vpop.f32.mrf.mxu0
  %v1900 = vpop.f32.mrf.mxu0
  %v1901 = vpop.f32.mrf.mxu0
  %1902 = vdwg.mxu0
  %v1903 = vmax.f32 %v1851, %v1898
  %v1904 = vadd.f32 %v1903, %v271
  %vm1905 = vcmp.gt.f32.partialorder %v1904, 0.0
  %v1906 = vmul.f32 %v1904, 1.442695
  %v1907 = vpow.pop %v1906
  %v1908 = vsub.f32 %v1907, 1.0
  %v1909 = vsel %vm1905, %v1904, %v1908
  %v1910 = vpack.c.bf16 %v1909, %v1909
  %1911 = vst.msk [vmem:[#allocation2 + $0x28] sm:$0xf] %vm280, %v1910
  %s1912 = scalar_lea.vmem %s0, 264
  %v1913 = vld [vmem:[%s1912] sm:$0xff]
  %v1915 = vunpack.c.l.b16 %v1913
  %v1916 = vunpack.c.h.b16 %v1913
  %v1917 = vpack.c.b16 %v1915, %v1915
  %v1918 = vpack.c.b16 %v1916, %v1916
  %v1921 = vsel %vm115, %v1918, 0
  %1923 = vmatprep.subr.bf16.mxu0 0
  %1924 = vmatpush1.bf16.msra.mxu0 %v105
  %1925 = vmatprep.subr.bf16.mxu0 0
  %1926 = vmatpush1.bf16.msra.mxu0 %v104
  %1927 = vmatprep.subr.bf16.mxu0 0
  %1928 = vmatpush1.bf16.msra.mxu0 %v103
  %1929 = vmatprep.subr.bf16.mxu0 0
  %1930 = vmatpush1.bf16.msra.mxu0 %v102
  %1931 = vmatprep.subr.bf16.mxu0 0
  %1932 = vmatpush1.bf16.msra.mxu0 %v101
  %1933 = vmatprep.subr.bf16.mxu0 0
  %1934 = vmatpush1.bf16.msra.mxu0 %v100
  %1935 = vmatprep.subr.bf16.mxu0 0
  %1936 = vmatpush1.bf16.msra.mxu0 %v99
  %1937 = vmatprep.subr.bf16.mxu0 0
  %1938 = vmatpush1.bf16.msra.mxu0 %v98
  %1939 = vmatprep.subr.bf16.mxu0 0
  %1940 = vmatpush2.bf16.msra.mxu0 0
  %1941 = vmatprep.subr.bf16.mxu0 0
  %1942 = vmatpush2.bf16.msra.mxu0 0
  %1943 = vmatprep.subr.bf16.mxu0 0
  %1944 = vmatpush2.bf16.msra.mxu0 0
  %1945 = vmatprep.subr.bf16.mxu0 0
  %1946 = vmatpush2.bf16.msra.mxu0 0
  %1947 = vmatprep.subr.bf16.mxu0 0
  %1948 = vmatpush2.bf16.msra.mxu0 0
  %1949 = vmatprep.subr.bf16.mxu0 0
  %1950 = vmatpush2.bf16.msra.mxu0 0
  %1951 = vmatprep.subr.bf16.mxu0 0
  %1952 = vmatpush2.bf16.msra.mxu0 0
  %1953 = vmatprep.subr.bf16.mxu0 0
  %1954 = vmatpush2.bf16.msra.mxu0 %v121
  %1955 = vmatprep.mubr.bf16.mxu0 %v1921
  %1956 = vmatmul.mubr.bf16.gmra.mxu0 %v1917
  %v1957 = vpop.f32.mrf.mxu0
  %v1958 = vadd.f32 0.0, %v1957
  %v1959 = vpop.f32.mrf.mxu0
  %v1960 = vpop.f32.mrf.mxu0
  %v1961 = vpop.f32.mrf.mxu0
  %1962 = vdwg.mxu0
  %s1963 = scalar_lea.vmem %s0, 272
  %v1964 = vld [vmem:[%s1963] sm:$0xff]
  %v1966 = vunpack.c.l.b16 %v1964
  %v1967 = vunpack.c.h.b16 %v1964
  %v1968 = vpack.c.b16 %v1966, %v1966
  %v1969 = vpack.c.b16 %v1967, %v1967
  %v1972 = vsel %vm115, %v1969, 0
  %1974 = vmatprep.subr.bf16.mxu0 0
  %1975 = vmatpush1.bf16.msra.mxu0 %v105
  %1976 = vmatprep.subr.bf16.mxu0 0
  %1977 = vmatpush1.bf16.msra.mxu0 %v104
  %1978 = vmatprep.subr.bf16.mxu0 0
  %1979 = vmatpush1.bf16.msra.mxu0 %v103
  %1980 = vmatprep.subr.bf16.mxu0 0
  %1981 = vmatpush1.bf16.msra.mxu0 %v102
  %1982 = vmatprep.subr.bf16.mxu0 0
  %1983 = vmatpush1.bf16.msra.mxu0 %v101
  %1984 = vmatprep.subr.bf16.mxu0 0
  %1985 = vmatpush1.bf16.msra.mxu0 %v100
  %1986 = vmatprep.subr.bf16.mxu0 0
  %1987 = vmatpush1.bf16.msra.mxu0 %v99
  %1988 = vmatprep.subr.bf16.mxu0 0
  %1989 = vmatpush1.bf16.msra.mxu0 %v98
  %1990 = vmatprep.subr.bf16.mxu0 0
  %1991 = vmatpush2.bf16.msra.mxu0 0
  %1992 = vmatprep.subr.bf16.mxu0 0
  %1993 = vmatpush2.bf16.msra.mxu0 0
  %1994 = vmatprep.subr.bf16.mxu0 0
  %1995 = vmatpush2.bf16.msra.mxu0 0
  %1996 = vmatprep.subr.bf16.mxu0 0
  %1997 = vmatpush2.bf16.msra.mxu0 0
  %1998 = vmatprep.subr.bf16.mxu0 0
  %1999 = vmatpush2.bf16.msra.mxu0 0
  %2000 = vmatprep.subr.bf16.mxu0 0
  %2001 = vmatpush2.bf16.msra.mxu0 0
  %2002 = vmatprep.subr.bf16.mxu0 0
  %2003 = vmatpush2.bf16.msra.mxu0 0
  %2004 = vmatprep.subr.bf16.mxu0 0
  %2005 = vmatpush2.bf16.msra.mxu0 %v121
  %2006 = vmatprep.mubr.bf16.mxu0 %v1972
  %2007 = vmatmul.mubr.bf16.gmra.mxu0 %v1968
  %v2008 = vpop.f32.mrf.mxu0
  %v2009 = vadd.f32 0.0, %v2008
  %v2010 = vpop.f32.mrf.mxu0
  %v2011 = vpop.f32.mrf.mxu0
  %v2012 = vpop.f32.mrf.mxu0
  %2013 = vdwg.mxu0
  %v2014 = vmax.f32 %v1958, %v2009
  %s2015 = scalar_lea.vmem %s0, 280
  %v2016 = vld [vmem:[%s2015] sm:$0xff]
  %v2018 = vunpack.c.l.b16 %v2016
  %v2019 = vunpack.c.h.b16 %v2016
  %v2020 = vpack.c.b16 %v2018, %v2018
  %v2021 = vpack.c.b16 %v2019, %v2019
  %v2024 = vsel %vm115, %v2021, 0
  %2026 = vmatprep.subr.bf16.mxu0 0
  %2027 = vmatpush1.bf16.msra.mxu0 %v105
  %2028 = vmatprep.subr.bf16.mxu0 0
  %2029 = vmatpush1.bf16.msra.mxu0 %v104
  %2030 = vmatprep.subr.bf16.mxu0 0
  %2031 = vmatpush1.bf16.msra.mxu0 %v103
  %2032 = vmatprep.subr.bf16.mxu0 0
  %2033 = vmatpush1.bf16.msra.mxu0 %v102
  %2034 = vmatprep.subr.bf16.mxu0 0
  %2035 = vmatpush1.bf16.msra.mxu0 %v101
  %2036 = vmatprep.subr.bf16.mxu0 0
  %2037 = vmatpush1.bf16.msra.mxu0 %v100
  %2038 = vmatprep.subr.bf16.mxu0 0
  %2039 = vmatpush1.bf16.msra.mxu0 %v99
  %2040 = vmatprep.subr.bf16.mxu0 0
  %2041 = vmatpush1.bf16.msra.mxu0 %v98
  %2042 = vmatprep.subr.bf16.mxu0 0
  %2043 = vmatpush2.bf16.msra.mxu0 0
  %2044 = vmatprep.subr.bf16.mxu0 0
  %2045 = vmatpush2.bf16.msra.mxu0 0
  %2046 = vmatprep.subr.bf16.mxu0 0
  %2047 = vmatpush2.bf16.msra.mxu0 0
  %2048 = vmatprep.subr.bf16.mxu0 0
  %2049 = vmatpush2.bf16.msra.mxu0 0
  %2050 = vmatprep.subr.bf16.mxu0 0
  %2051 = vmatpush2.bf16.msra.mxu0 0
  %2052 = vmatprep.subr.bf16.mxu0 0
  %2053 = vmatpush2.bf16.msra.mxu0 0
  %2054 = vmatprep.subr.bf16.mxu0 0
  %2055 = vmatpush2.bf16.msra.mxu0 0
  %2056 = vmatprep.subr.bf16.mxu0 0
  %2057 = vmatpush2.bf16.msra.mxu0 %v121
  %2058 = vmatprep.mubr.bf16.mxu0 %v2024
  %2059 = vmatmul.mubr.bf16.gmra.mxu0 %v2020
  %v2060 = vpop.f32.mrf.mxu0
  %v2061 = vadd.f32 0.0, %v2060
  %v2062 = vpop.f32.mrf.mxu0
  %v2063 = vpop.f32.mrf.mxu0
  %v2064 = vpop.f32.mrf.mxu0
  %2065 = vdwg.mxu0
  %v2066 = vmax.f32 %v2014, %v2061
  %v2067 = vadd.f32 %v2066, %v271
  %vm2068 = vcmp.gt.f32.partialorder %v2067, 0.0
  %v2069 = vmul.f32 %v2067, 1.442695
  %v2070 = vpow.pop %v2069
  %v2071 = vsub.f32 %v2070, 1.0
  %v2072 = vsel %vm2068, %v2067, %v2071
  %v2073 = vpack.c.bf16 %v2072, %v2072
  %2074 = vst.msk [vmem:[#allocation2 + $0x2c] sm:$0xf] %vm280, %v2073
  %v2075 = vld [vmem:[#allocation2] sm:$0xf]
  %v2076 = vld [vmem:[%s3] sm:$0xf]
  %v2077 = vld [vmem:[%s3 + $0x4] sm:$0xf]
  %v2078 = vld [vmem:[%s3 + $0x8] sm:$0xf]
  %v2079 = vld [vmem:[%s3 + $0xc] sm:$0x1]
  %v2080 = vld [vmem:[#allocation2 + $0x4] sm:$0xf]
  %s2081 = scalar_lea.vmem %s3, 16
  %v2082 = vld [vmem:[%s2081] sm:$0xf]
  %v2083 = vld [vmem:[%s2081 + $0x4] sm:$0xf]
  %v2084 = vld [vmem:[%s2081 + $0x8] sm:$0xf]
  %v2085 = vld [vmem:[%s2081 + $0xc] sm:$0x1]
  %v2090 = vunpack.c.l.b16 %v2082
  %v2091 = vunpack.c.l.b16 %v2083
  %v2092 = vunpack.c.l.b16 %v2084
  %v2093 = vunpack.c.l.b16 %v2085
  %v2094 = vpack.c.b16 %v2091, %v2090
  %v2095 = vpack.c.b16 %v2093, %v2092
  %vm2097 = vcmask 203776
  %v2099 = vsel %vm2097, %v2080, 0
  %vm2101 = vcmask 1043456
  %vm2102 = vcmask 1044480
  %v2103 = vsel %vm2101, 4294967295, 65535
  %v2104 = vsel %vm2102, %v2103, 0
  %v2106 = vand.u32 %v2095, %v2104
  %2108 = vmatprep.subr.bf16.mxu0 0
  %2109 = vmatpush1.bf16.msra.mxu0 0
  %2110 = vmatprep.subr.bf16.mxu0 0
  %2111 = vmatpush1.bf16.msra.mxu0 0
  %2112 = vmatprep.subr.bf16.mxu0 0
  %2113 = vmatpush1.bf16.msra.mxu0 0
  %2114 = vmatprep.subr.bf16.mxu0 0
  %2115 = vmatpush1.bf16.msra.mxu0 0
  %2116 = vmatprep.subr.bf16.mxu0 0
  %2117 = vmatpush1.bf16.msra.mxu0 0
  %2118 = vmatprep.subr.bf16.mxu0 0
  %2119 = vmatpush1.bf16.msra.mxu0 0
  %2120 = vmatprep.subr.bf16.mxu0 0
  %2121 = vmatpush1.bf16.msra.mxu0 %v2106
  %2122 = vmatprep.subr.bf16.mxu0 0
  %2123 = vmatpush1.bf16.msra.mxu0 %v2094
  %2124 = vmatprep.subr.bf16.mxu0 0
  %2125 = vmatpush2.bf16.msra.mxu0 0
  %2126 = vmatprep.subr.bf16.mxu0 0
  %2127 = vmatpush2.bf16.msra.mxu0 0
  %2128 = vmatprep.subr.bf16.mxu0 0
  %2129 = vmatpush2.bf16.msra.mxu0 0
  %2130 = vmatprep.subr.bf16.mxu0 0
  %2131 = vmatpush2.bf16.msra.mxu0 0
  %2132 = vmatprep.subr.bf16.mxu0 0
  %2133 = vmatpush2.bf16.msra.mxu0 0
  %2134 = vmatprep.subr.bf16.mxu0 0
  %2135 = vmatpush2.bf16.msra.mxu0 0
  %2136 = vmatprep.subr.bf16.mxu0 0
  %2137 = vmatpush2.bf16.msra.mxu0 0
  %2138 = vmatprep.subr.bf16.mxu0 0
  %2139 = vmatpush2.bf16.msra.mxu0 0
  %2140 = vmatprep.mubr.bf16.mxu0 0
  %2141 = vmatmul.mubr.bf16.gmra.mxu0 %v2099
  %v2142 = vpop.f32.mrf.mxu0
  %v2143 = vadd.f32 0.0, %v2142
  %v2144 = vpop.f32.mrf.mxu0
  %v2145 = vpop.f32.mrf.mxu0
  %v2146 = vpop.f32.mrf.mxu0
  %2147 = vdwg.mxu0
  %v2152 = vunpack.c.l.b16 %v2076
  %v2153 = vunpack.c.l.b16 %v2077
  %v2154 = vunpack.c.l.b16 %v2078
  %v2155 = vunpack.c.l.b16 %v2079
  %v2156 = vpack.c.b16 %v2153, %v2152
  %v2157 = vpack.c.b16 %v2155, %v2154
  %v2160 = vsel %vm2097, %v2075, 0
  %v2163 = vand.u32 %v2157, %v2104
  %2165 = vmatprep.subr.bf16.mxu0 0
  %2166 = vmatpush1.bf16.msra.mxu0 0
  %2167 = vmatprep.subr.bf16.mxu0 0
  %2168 = vmatpush1.bf16.msra.mxu0 0
  %2169 = vmatprep.subr.bf16.mxu0 0
  %2170 = vmatpush1.bf16.msra.mxu0 0
  %2171 = vmatprep.subr.bf16.mxu0 0
  %2172 = vmatpush1.bf16.msra.mxu0 0
  %2173 = vmatprep.subr.bf16.mxu0 0
  %2174 = vmatpush1.bf16.msra.mxu0 0
  %2175 = vmatprep.subr.bf16.mxu0 0
  %2176 = vmatpush1.bf16.msra.mxu0 0
  %2177 = vmatprep.subr.bf16.mxu0 0
  %2178 = vmatpush1.bf16.msra.mxu0 %v2163
  %2179 = vmatprep.subr.bf16.mxu0 0
  %2180 = vmatpush1.bf16.msra.mxu0 %v2156
  %2181 = vmatprep.subr.bf16.mxu0 0
  %2182 = vmatpush2.bf16.msra.mxu0 0
  %2183 = vmatprep.subr.bf16.mxu0 0
  %2184 = vmatpush2.bf16.msra.mxu0 0
  %2185 = vmatprep.subr.bf16.mxu0 0
  %2186 = vmatpush2.bf16.msra.mxu0 0
  %2187 = vmatprep.subr.bf16.mxu0 0
  %2188 = vmatpush2.bf16.msra.mxu0 0
  %2189 = vmatprep.subr.bf16.mxu0 0
  %2190 = vmatpush2.bf16.msra.mxu0 0
  %2191 = vmatprep.subr.bf16.mxu0 0
  %2192 = vmatpush2.bf16.msra.mxu0 0
  %2193 = vmatprep.subr.bf16.mxu0 0
  %2194 = vmatpush2.bf16.msra.mxu0 0
  %2195 = vmatprep.subr.bf16.mxu0 0
  %2196 = vmatpush2.bf16.msra.mxu0 0
  %2197 = vmatprep.mubr.bf16.mxu0 0
  %2198 = vmatmul.mubr.bf16.gmra.mxu0 %v2160
  %v2199 = vpop.f32.mrf.mxu0
  %v2200 = vadd.f32 %v2143, %v2199
  %v2201 = vpop.f32.mrf.mxu0
  %v2202 = vpop.f32.mrf.mxu0
  %v2203 = vpop.f32.mrf.mxu0
  %2204 = vdwg.mxu0
  %v2205 = vld [vmem:[#allocation2 + $0x8] sm:$0xf]
  %s2206 = scalar_lea.vmem %s3, 32
  %v2207 = vld [vmem:[%s2206] sm:$0xf]
  %v2208 = vld [vmem:[%s2206 + $0x4] sm:$0xf]
  %v2209 = vld [vmem:[%s2206 + $0x8] sm:$0xf]
  %v2210 = vld [vmem:[%s2206 + $0xc] sm:$0x1]
  %v2215 = vunpack.c.l.b16 %v2207
  %v2216 = vunpack.c.l.b16 %v2208
  %v2217 = vunpack.c.l.b16 %v2209
  %v2218 = vunpack.c.l.b16 %v2210
  %v2219 = vpack.c.b16 %v2216, %v2215
  %v2220 = vpack.c.b16 %v2218, %v2217
  %v2223 = vsel %vm2097, %v2205, 0
  %v2226 = vand.u32 %v2220, %v2104
  %2228 = vmatprep.subr.bf16.mxu0 0
  %2229 = vmatpush1.bf16.msra.mxu0 0
  %2230 = vmatprep.subr.bf16.mxu0 0
  %2231 = vmatpush1.bf16.msra.mxu0 0
  %2232 = vmatprep.subr.bf16.mxu0 0
  %2233 = vmatpush1.bf16.msra.mxu0 0
  %2234 = vmatprep.subr.bf16.mxu0 0
  %2235 = vmatpush1.bf16.msra.mxu0 0
  %2236 = vmatprep.subr.bf16.mxu0 0
  %2237 = vmatpush1.bf16.msra.mxu0 0
  %2238 = vmatprep.subr.bf16.mxu0 0
  %2239 = vmatpush1.bf16.msra.mxu0 0
  %2240 = vmatprep.subr.bf16.mxu0 0
  %2241 = vmatpush1.bf16.msra.mxu0 %v2226
  %2242 = vmatprep.subr.bf16.mxu0 0
  %2243 = vmatpush1.bf16.msra.mxu0 %v2219
  %2244 = vmatprep.subr.bf16.mxu0 0
  %2245 = vmatpush2.bf16.msra.mxu0 0
  %2246 = vmatprep.subr.bf16.mxu0 0
  %2247 = vmatpush2.bf16.msra.mxu0 0
  %2248 = vmatprep.subr.bf16.mxu0 0
  %2249 = vmatpush2.bf16.msra.mxu0 0
  %2250 = vmatprep.subr.bf16.mxu0 0
  %2251 = vmatpush2.bf16.msra.mxu0 0
  %2252 = vmatprep.subr.bf16.mxu0 0
  %2253 = vmatpush2.bf16.msra.mxu0 0
  %2254 = vmatprep.subr.bf16.mxu0 0
  %2255 = vmatpush2.bf16.msra.mxu0 0
  %2256 = vmatprep.subr.bf16.mxu0 0
  %2257 = vmatpush2.bf16.msra.mxu0 0
  %2258 = vmatprep.subr.bf16.mxu0 0
  %2259 = vmatpush2.bf16.msra.mxu0 0
  %2260 = vmatprep.mubr.bf16.mxu0 0
  %2261 = vmatmul.mubr.bf16.gmra.mxu0 %v2223
  %v2262 = vpop.f32.mrf.mxu0
  %v2263 = vadd.f32 0.0, %v2262
  %v2264 = vpop.f32.mrf.mxu0
  %v2265 = vpop.f32.mrf.mxu0
  %v2266 = vpop.f32.mrf.mxu0
  %2267 = vdwg.mxu0
  %v2268 = vadd.f32 %v2200, %v2263
  %v2269 = vld [vmem:[#allocation2 + $0xc] sm:$0xf]
  %s2270 = scalar_lea.vmem %s3, 48
  %v2271 = vld [vmem:[%s2270] sm:$0xf]
  %v2272 = vld [vmem:[%s2270 + $0x4] sm:$0xf]
  %v2273 = vld [vmem:[%s2270 + $0x8] sm:$0xf]
  %v2274 = vld [vmem:[%s2270 + $0xc] sm:$0x1]
  %v2279 = vunpack.c.l.b16 %v2271
  %v2280 = vunpack.c.l.b16 %v2272
  %v2281 = vunpack.c.l.b16 %v2273
  %v2282 = vunpack.c.l.b16 %v2274
  %v2283 = vpack.c.b16 %v2280, %v2279
  %v2284 = vpack.c.b16 %v2282, %v2281
  %v2287 = vsel %vm2097, %v2269, 0
  %v2290 = vand.u32 %v2284, %v2104
  %2292 = vmatprep.subr.bf16.mxu0 0
  %2293 = vmatpush1.bf16.msra.mxu0 0
  %2294 = vmatprep.subr.bf16.mxu0 0
  %2295 = vmatpush1.bf16.msra.mxu0 0
  %2296 = vmatprep.subr.bf16.mxu0 0
  %2297 = vmatpush1.bf16.msra.mxu0 0
  %2298 = vmatprep.subr.bf16.mxu0 0
  %2299 = vmatpush1.bf16.msra.mxu0 0
  %2300 = vmatprep.subr.bf16.mxu0 0
  %2301 = vmatpush1.bf16.msra.mxu0 0
  %2302 = vmatprep.subr.bf16.mxu0 0
  %2303 = vmatpush1.bf16.msra.mxu0 0
  %2304 = vmatprep.subr.bf16.mxu0 0
  %2305 = vmatpush1.bf16.msra.mxu0 %v2290
  %2306 = vmatprep.subr.bf16.mxu0 0
  %2307 = vmatpush1.bf16.msra.mxu0 %v2283
  %2308 = vmatprep.subr.bf16.mxu0 0
  %2309 = vmatpush2.bf16.msra.mxu0 0
  %2310 = vmatprep.subr.bf16.mxu0 0
  %2311 = vmatpush2.bf16.msra.mxu0 0
  %2312 = vmatprep.subr.bf16.mxu0 0
  %2313 = vmatpush2.bf16.msra.mxu0 0
  %2314 = vmatprep.subr.bf16.mxu0 0
  %2315 = vmatpush2.bf16.msra.mxu0 0
  %2316 = vmatprep.subr.bf16.mxu0 0
  %2317 = vmatpush2.bf16.msra.mxu0 0
  %2318 = vmatprep.subr.bf16.mxu0 0
  %2319 = vmatpush2.bf16.msra.mxu0 0
  %2320 = vmatprep.subr.bf16.mxu0 0
  %2321 = vmatpush2.bf16.msra.mxu0 0
  %2322 = vmatprep.subr.bf16.mxu0 0
  %2323 = vmatpush2.bf16.msra.mxu0 0
  %2324 = vmatprep.mubr.bf16.mxu0 0
  %2325 = vmatmul.mubr.bf16.gmra.mxu0 %v2287
  %v2326 = vpop.f32.mrf.mxu0
  %v2327 = vadd.f32 0.0, %v2326
  %v2328 = vpop.f32.mrf.mxu0
  %v2329 = vpop.f32.mrf.mxu0
  %v2330 = vpop.f32.mrf.mxu0
  %2331 = vdwg.mxu0
  %v2332 = vadd.f32 %v2268, %v2327
  %v2333 = vld [vmem:[#allocation2 + $0x10] sm:$0xf]
  %s2334 = scalar_lea.vmem %s3, 64
  %v2335 = vld [vmem:[%s2334] sm:$0xf]
  %v2336 = vld [vmem:[%s2334 + $0x4] sm:$0xf]
  %v2337 = vld [vmem:[%s2334 + $0x8] sm:$0xf]
  %v2338 = vld [vmem:[%s2334 + $0xc] sm:$0x1]
  %v2343 = vunpack.c.l.b16 %v2335
  %v2344 = vunpack.c.l.b16 %v2336
  %v2345 = vunpack.c.l.b16 %v2337
  %v2346 = vunpack.c.l.b16 %v2338
  %v2347 = vpack.c.b16 %v2344, %v2343
  %v2348 = vpack.c.b16 %v2346, %v2345
  %v2351 = vsel %vm2097, %v2333, 0
  %v2354 = vand.u32 %v2348, %v2104
  %2356 = vmatprep.subr.bf16.mxu0 0
  %2357 = vmatpush1.bf16.msra.mxu0 0
  %2358 = vmatprep.subr.bf16.mxu0 0
  %2359 = vmatpush1.bf16.msra.mxu0 0
  %2360 = vmatprep.subr.bf16.mxu0 0
  %2361 = vmatpush1.bf16.msra.mxu0 0
  %2362 = vmatprep.subr.bf16.mxu0 0
  %2363 = vmatpush1.bf16.msra.mxu0 0
  %2364 = vmatprep.subr.bf16.mxu0 0
  %2365 = vmatpush1.bf16.msra.mxu0 0
  %2366 = vmatprep.subr.bf16.mxu0 0
  %2367 = vmatpush1.bf16.msra.mxu0 0
  %2368 = vmatprep.subr.bf16.mxu0 0
  %2369 = vmatpush1.bf16.msra.mxu0 %v2354
  %2370 = vmatprep.subr.bf16.mxu0 0
  %2371 = vmatpush1.bf16.msra.mxu0 %v2347
  %2372 = vmatprep.subr.bf16.mxu0 0
  %2373 = vmatpush2.bf16.msra.mxu0 0
  %2374 = vmatprep.subr.bf16.mxu0 0
  %2375 = vmatpush2.bf16.msra.mxu0 0
  %2376 = vmatprep.subr.bf16.mxu0 0
  %2377 = vmatpush2.bf16.msra.mxu0 0
  %2378 = vmatprep.subr.bf16.mxu0 0
  %2379 = vmatpush2.bf16.msra.mxu0 0
  %2380 = vmatprep.subr.bf16.mxu0 0
  %2381 = vmatpush2.bf16.msra.mxu0 0
  %2382 = vmatprep.subr.bf16.mxu0 0
  %2383 = vmatpush2.bf16.msra.mxu0 0
  %2384 = vmatprep.subr.bf16.mxu0 0
  %2385 = vmatpush2.bf16.msra.mxu0 0
  %2386 = vmatprep.subr.bf16.mxu0 0
  %2387 = vmatpush2.bf16.msra.mxu0 0
  %2388 = vmatprep.mubr.bf16.mxu0 0
  %2389 = vmatmul.mubr.bf16.gmra.mxu0 %v2351
  %v2390 = vpop.f32.mrf.mxu0
  %v2391 = vadd.f32 0.0, %v2390
  %v2392 = vpop.f32.mrf.mxu0
  %v2393 = vpop.f32.mrf.mxu0
  %v2394 = vpop.f32.mrf.mxu0
  %2395 = vdwg.mxu0
  %v2396 = vadd.f32 %v2332, %v2391
  %v2397 = vld [vmem:[#allocation2 + $0x14] sm:$0xf]
  %s2398 = scalar_lea.vmem %s3, 80
  %v2399 = vld [vmem:[%s2398] sm:$0xf]
  %v2400 = vld [vmem:[%s2398 + $0x4] sm:$0xf]
  %v2401 = vld [vmem:[%s2398 + $0x8] sm:$0xf]
  %v2402 = vld [vmem:[%s2398 + $0xc] sm:$0x1]
  %v2407 = vunpack.c.l.b16 %v2399
  %v2408 = vunpack.c.l.b16 %v2400
  %v2409 = vunpack.c.l.b16 %v2401
  %v2410 = vunpack.c.l.b16 %v2402
  %v2411 = vpack.c.b16 %v2408, %v2407
  %v2412 = vpack.c.b16 %v2410, %v2409
  %v2415 = vsel %vm2097, %v2397, 0
  %v2418 = vand.u32 %v2412, %v2104
  %2420 = vmatprep.subr.bf16.mxu0 0
  %2421 = vmatpush1.bf16.msra.mxu0 0
  %2422 = vmatprep.subr.bf16.mxu0 0
  %2423 = vmatpush1.bf16.msra.mxu0 0
  %2424 = vmatprep.subr.bf16.mxu0 0
  %2425 = vmatpush1.bf16.msra.mxu0 0
  %2426 = vmatprep.subr.bf16.mxu0 0
  %2427 = vmatpush1.bf16.msra.mxu0 0
  %2428 = vmatprep.subr.bf16.mxu0 0
  %2429 = vmatpush1.bf16.msra.mxu0 0
  %2430 = vmatprep.subr.bf16.mxu0 0
  %2431 = vmatpush1.bf16.msra.mxu0 0
  %2432 = vmatprep.subr.bf16.mxu0 0
  %2433 = vmatpush1.bf16.msra.mxu0 %v2418
  %2434 = vmatprep.subr.bf16.mxu0 0
  %2435 = vmatpush1.bf16.msra.mxu0 %v2411
  %2436 = vmatprep.subr.bf16.mxu0 0
  %2437 = vmatpush2.bf16.msra.mxu0 0
  %2438 = vmatprep.subr.bf16.mxu0 0
  %2439 = vmatpush2.bf16.msra.mxu0 0
  %2440 = vmatprep.subr.bf16.mxu0 0
  %2441 = vmatpush2.bf16.msra.mxu0 0
  %2442 = vmatprep.subr.bf16.mxu0 0
  %2443 = vmatpush2.bf16.msra.mxu0 0
  %2444 = vmatprep.subr.bf16.mxu0 0
  %2445 = vmatpush2.bf16.msra.mxu0 0
  %2446 = vmatprep.subr.bf16.mxu0 0
  %2447 = vmatpush2.bf16.msra.mxu0 0
  %2448 = vmatprep.subr.bf16.mxu0 0
  %2449 = vmatpush2.bf16.msra.mxu0 0
  %2450 = vmatprep.subr.bf16.mxu0 0
  %2451 = vmatpush2.bf16.msra.mxu0 0
  %2452 = vmatprep.mubr.bf16.mxu0 0
  %2453 = vmatmul.mubr.bf16.gmra.mxu0 %v2415
  %v2454 = vpop.f32.mrf.mxu0
  %v2455 = vadd.f32 0.0, %v2454
  %v2456 = vpop.f32.mrf.mxu0
  %v2457 = vpop.f32.mrf.mxu0
  %v2458 = vpop.f32.mrf.mxu0
  %2459 = vdwg.mxu0
  %v2460 = vadd.f32 %v2396, %v2455
  %v2461 = vld [vmem:[#allocation2 + $0x18] sm:$0xf]
  %s2462 = scalar_lea.vmem %s3, 96
  %v2463 = vld [vmem:[%s2462] sm:$0xf]
  %v2464 = vld [vmem:[%s2462 + $0x4] sm:$0xf]
  %v2465 = vld [vmem:[%s2462 + $0x8] sm:$0xf]
  %v2466 = vld [vmem:[%s2462 + $0xc] sm:$0x1]
  %v2471 = vunpack.c.l.b16 %v2463
  %v2472 = vunpack.c.l.b16 %v2464
  %v2473 = vunpack.c.l.b16 %v2465
  %v2474 = vunpack.c.l.b16 %v2466
  %v2475 = vpack.c.b16 %v2472, %v2471
  %v2476 = vpack.c.b16 %v2474, %v2473
  %v2479 = vsel %vm2097, %v2461, 0
  %v2482 = vand.u32 %v2476, %v2104
  %2484 = vmatprep.subr.bf16.mxu0 0
  %2485 = vmatpush1.bf16.msra.mxu0 0
  %2486 = vmatprep.subr.bf16.mxu0 0
  %2487 = vmatpush1.bf16.msra.mxu0 0
  %2488 = vmatprep.subr.bf16.mxu0 0
  %2489 = vmatpush1.bf16.msra.mxu0 0
  %2490 = vmatprep.subr.bf16.mxu0 0
  %2491 = vmatpush1.bf16.msra.mxu0 0
  %2492 = vmatprep.subr.bf16.mxu0 0
  %2493 = vmatpush1.bf16.msra.mxu0 0
  %2494 = vmatprep.subr.bf16.mxu0 0
  %2495 = vmatpush1.bf16.msra.mxu0 0
  %2496 = vmatprep.subr.bf16.mxu0 0
  %2497 = vmatpush1.bf16.msra.mxu0 %v2482
  %2498 = vmatprep.subr.bf16.mxu0 0
  %2499 = vmatpush1.bf16.msra.mxu0 %v2475
  %2500 = vmatprep.subr.bf16.mxu0 0
  %2501 = vmatpush2.bf16.msra.mxu0 0
  %2502 = vmatprep.subr.bf16.mxu0 0
  %2503 = vmatpush2.bf16.msra.mxu0 0
  %2504 = vmatprep.subr.bf16.mxu0 0
  %2505 = vmatpush2.bf16.msra.mxu0 0
  %2506 = vmatprep.subr.bf16.mxu0 0
  %2507 = vmatpush2.bf16.msra.mxu0 0
  %2508 = vmatprep.subr.bf16.mxu0 0
  %2509 = vmatpush2.bf16.msra.mxu0 0
  %2510 = vmatprep.subr.bf16.mxu0 0
  %2511 = vmatpush2.bf16.msra.mxu0 0
  %2512 = vmatprep.subr.bf16.mxu0 0
  %2513 = vmatpush2.bf16.msra.mxu0 0
  %2514 = vmatprep.subr.bf16.mxu0 0
  %2515 = vmatpush2.bf16.msra.mxu0 0
  %2516 = vmatprep.mubr.bf16.mxu0 0
  %2517 = vmatmul.mubr.bf16.gmra.mxu0 %v2479
  %v2518 = vpop.f32.mrf.mxu0
  %v2519 = vadd.f32 0.0, %v2518
  %v2520 = vpop.f32.mrf.mxu0
  %v2521 = vpop.f32.mrf.mxu0
  %v2522 = vpop.f32.mrf.mxu0
  %2523 = vdwg.mxu0
  %v2524 = vadd.f32 %v2460, %v2519
  %v2525 = vld [vmem:[#allocation2 + $0x1c] sm:$0xf]
  %s2526 = scalar_lea.vmem %s3, 112
  %v2527 = vld [vmem:[%s2526] sm:$0xf]
  %v2528 = vld [vmem:[%s2526 + $0x4] sm:$0xf]
  %v2529 = vld [vmem:[%s2526 + $0x8] sm:$0xf]
  %v2530 = vld [vmem:[%s2526 + $0xc] sm:$0x1]
  %v2535 = vunpack.c.l.b16 %v2527
  %v2536 = vunpack.c.l.b16 %v2528
  %v2537 = vunpack.c.l.b16 %v2529
  %v2538 = vunpack.c.l.b16 %v2530
  %v2539 = vpack.c.b16 %v2536, %v2535
  %v2540 = vpack.c.b16 %v2538, %v2537
  %v2543 = vsel %vm2097, %v2525, 0
  %v2546 = vand.u32 %v2540, %v2104
  %2548 = vmatprep.subr.bf16.mxu0 0
  %2549 = vmatpush1.bf16.msra.mxu0 0
  %2550 = vmatprep.subr.bf16.mxu0 0
  %2551 = vmatpush1.bf16.msra.mxu0 0
  %2552 = vmatprep.subr.bf16.mxu0 0
  %2553 = vmatpush1.bf16.msra.mxu0 0
  %2554 = vmatprep.subr.bf16.mxu0 0
  %2555 = vmatpush1.bf16.msra.mxu0 0
  %2556 = vmatprep.subr.bf16.mxu0 0
  %2557 = vmatpush1.bf16.msra.mxu0 0
  %2558 = vmatprep.subr.bf16.mxu0 0
  %2559 = vmatpush1.bf16.msra.mxu0 0
  %2560 = vmatprep.subr.bf16.mxu0 0
  %2561 = vmatpush1.bf16.msra.mxu0 %v2546
  %2562 = vmatprep.subr.bf16.mxu0 0
  %2563 = vmatpush1.bf16.msra.mxu0 %v2539
  %2564 = vmatprep.subr.bf16.mxu0 0
  %2565 = vmatpush2.bf16.msra.mxu0 0
  %2566 = vmatprep.subr.bf16.mxu0 0
  %2567 = vmatpush2.bf16.msra.mxu0 0
  %2568 = vmatprep.subr.bf16.mxu0 0
  %2569 = vmatpush2.bf16.msra.mxu0 0
  %2570 = vmatprep.subr.bf16.mxu0 0
  %2571 = vmatpush2.bf16.msra.mxu0 0
  %2572 = vmatprep.subr.bf16.mxu0 0
  %2573 = vmatpush2.bf16.msra.mxu0 0
  %2574 = vmatprep.subr.bf16.mxu0 0
  %2575 = vmatpush2.bf16.msra.mxu0 0
  %2576 = vmatprep.subr.bf16.mxu0 0
  %2577 = vmatpush2.bf16.msra.mxu0 0
  %2578 = vmatprep.subr.bf16.mxu0 0
  %2579 = vmatpush2.bf16.msra.mxu0 0
  %2580 = vmatprep.mubr.bf16.mxu0 0
  %2581 = vmatmul.mubr.bf16.gmra.mxu0 %v2543
  %v2582 = vpop.f32.mrf.mxu0
  %v2583 = vadd.f32 0.0, %v2582
  %v2584 = vpop.f32.mrf.mxu0
  %v2585 = vpop.f32.mrf.mxu0
  %v2586 = vpop.f32.mrf.mxu0
  %2587 = vdwg.mxu0
  %v2588 = vadd.f32 %v2524, %v2583
  %v2589 = vld [vmem:[#allocation2 + $0x20] sm:$0xf]
  %s2590 = scalar_lea.vmem %s3, 128
  %v2591 = vld [vmem:[%s2590] sm:$0xf]
  %v2592 = vld [vmem:[%s2590 + $0x4] sm:$0xf]
  %v2593 = vld [vmem:[%s2590 + $0x8] sm:$0xf]
  %v2594 = vld [vmem:[%s2590 + $0xc] sm:$0x1]
  %v2599 = vunpack.c.l.b16 %v2591
  %v2600 = vunpack.c.l.b16 %v2592
  %v2601 = vunpack.c.l.b16 %v2593
  %v2602 = vunpack.c.l.b16 %v2594
  %v2603 = vpack.c.b16 %v2600, %v2599
  %v2604 = vpack.c.b16 %v2602, %v2601
  %v2607 = vsel %vm2097, %v2589, 0
  %v2610 = vand.u32 %v2604, %v2104
  %2612 = vmatprep.subr.bf16.mxu0 0
  %2613 = vmatpush1.bf16.msra.mxu0 0
  %2614 = vmatprep.subr.bf16.mxu0 0
  %2615 = vmatpush1.bf16.msra.mxu0 0
  %2616 = vmatprep.subr.bf16.mxu0 0
  %2617 = vmatpush1.bf16.msra.mxu0 0
  %2618 = vmatprep.subr.bf16.mxu0 0
  %2619 = vmatpush1.bf16.msra.mxu0 0
  %2620 = vmatprep.subr.bf16.mxu0 0
  %2621 = vmatpush1.bf16.msra.mxu0 0
  %2622 = vmatprep.subr.bf16.mxu0 0
  %2623 = vmatpush1.bf16.msra.mxu0 0
  %2624 = vmatprep.subr.bf16.mxu0 0
  %2625 = vmatpush1.bf16.msra.mxu0 %v2610
  %2626 = vmatprep.subr.bf16.mxu0 0
  %2627 = vmatpush1.bf16.msra.mxu0 %v2603
  %2628 = vmatprep.subr.bf16.mxu0 0
  %2629 = vmatpush2.bf16.msra.mxu0 0
  %2630 = vmatprep.subr.bf16.mxu0 0
  %2631 = vmatpush2.bf16.msra.mxu0 0
  %2632 = vmatprep.subr.bf16.mxu0 0
  %2633 = vmatpush2.bf16.msra.mxu0 0
  %2634 = vmatprep.subr.bf16.mxu0 0
  %2635 = vmatpush2.bf16.msra.mxu0 0
  %2636 = vmatprep.subr.bf16.mxu0 0
  %2637 = vmatpush2.bf16.msra.mxu0 0
  %2638 = vmatprep.subr.bf16.mxu0 0
  %2639 = vmatpush2.bf16.msra.mxu0 0
  %2640 = vmatprep.subr.bf16.mxu0 0
  %2641 = vmatpush2.bf16.msra.mxu0 0
  %2642 = vmatprep.subr.bf16.mxu0 0
  %2643 = vmatpush2.bf16.msra.mxu0 0
  %2644 = vmatprep.mubr.bf16.mxu0 0
  %2645 = vmatmul.mubr.bf16.gmra.mxu0 %v2607
  %v2646 = vpop.f32.mrf.mxu0
  %v2647 = vadd.f32 0.0, %v2646
  %v2648 = vpop.f32.mrf.mxu0
  %v2649 = vpop.f32.mrf.mxu0
  %v2650 = vpop.f32.mrf.mxu0
  %2651 = vdwg.mxu0
  %v2652 = vadd.f32 %v2588, %v2647
  %v2653 = vld [vmem:[#allocation2 + $0x24] sm:$0xf]
  %s2654 = scalar_lea.vmem %s3, 144
  %v2655 = vld [vmem:[%s2654] sm:$0xf]
  %v2656 = vld [vmem:[%s2654 + $0x4] sm:$0xf]
  %v2657 = vld [vmem:[%s2654 + $0x8] sm:$0xf]
  %v2658 = vld [vmem:[%s2654 + $0xc] sm:$0x1]
  %v2663 = vunpack.c.l.b16 %v2655
  %v2664 = vunpack.c.l.b16 %v2656
  %v2665 = vunpack.c.l.b16 %v2657
  %v2666 = vunpack.c.l.b16 %v2658
  %v2667 = vpack.c.b16 %v2664, %v2663
  %v2668 = vpack.c.b16 %v2666, %v2665
  %v2671 = vsel %vm2097, %v2653, 0
  %v2674 = vand.u32 %v2668, %v2104
  %2676 = vmatprep.subr.bf16.mxu0 0
  %2677 = vmatpush1.bf16.msra.mxu0 0
  %2678 = vmatprep.subr.bf16.mxu0 0
  %2679 = vmatpush1.bf16.msra.mxu0 0
  %2680 = vmatprep.subr.bf16.mxu0 0
  %2681 = vmatpush1.bf16.msra.mxu0 0
  %2682 = vmatprep.subr.bf16.mxu0 0
  %2683 = vmatpush1.bf16.msra.mxu0 0
  %2684 = vmatprep.subr.bf16.mxu0 0
  %2685 = vmatpush1.bf16.msra.mxu0 0
  %2686 = vmatprep.subr.bf16.mxu0 0
  %2687 = vmatpush1.bf16.msra.mxu0 0
  %2688 = vmatprep.subr.bf16.mxu0 0
  %2689 = vmatpush1.bf16.msra.mxu0 %v2674
  %2690 = vmatprep.subr.bf16.mxu0 0
  %2691 = vmatpush1.bf16.msra.mxu0 %v2667
  %2692 = vmatprep.subr.bf16.mxu0 0
  %2693 = vmatpush2.bf16.msra.mxu0 0
  %2694 = vmatprep.subr.bf16.mxu0 0
  %2695 = vmatpush2.bf16.msra.mxu0 0
  %2696 = vmatprep.subr.bf16.mxu0 0
  %2697 = vmatpush2.bf16.msra.mxu0 0
  %2698 = vmatprep.subr.bf16.mxu0 0
  %2699 = vmatpush2.bf16.msra.mxu0 0
  %2700 = vmatprep.subr.bf16.mxu0 0
  %2701 = vmatpush2.bf16.msra.mxu0 0
  %2702 = vmatprep.subr.bf16.mxu0 0
  %2703 = vmatpush2.bf16.msra.mxu0 0
  %2704 = vmatprep.subr.bf16.mxu0 0
  %2705 = vmatpush2.bf16.msra.mxu0 0
  %2706 = vmatprep.subr.bf16.mxu0 0
  %2707 = vmatpush2.bf16.msra.mxu0 0
  %2708 = vmatprep.mubr.bf16.mxu0 0
  %2709 = vmatmul.mubr.bf16.gmra.mxu0 %v2671
  %v2710 = vpop.f32.mrf.mxu0
  %v2711 = vadd.f32 0.0, %v2710
  %v2712 = vpop.f32.mrf.mxu0
  %v2713 = vpop.f32.mrf.mxu0
  %v2714 = vpop.f32.mrf.mxu0
  %2715 = vdwg.mxu0
  %v2716 = vadd.f32 %v2652, %v2711
  %2717 = vmatprep.subr.bf16.mxu0 0
  %2718 = vmatpush1.bf16.msra.mxu0 0
  %2719 = vmatprep.subr.bf16.mxu0 0
  %2720 = vmatpush1.bf16.msra.mxu0 0
  %2721 = vmatprep.subr.bf16.mxu0 0
  %2722 = vmatpush1.bf16.msra.mxu0 0
  %2723 = vmatprep.subr.bf16.mxu0 0
  %2724 = vmatpush1.bf16.msra.mxu0 0
  %2725 = vmatprep.subr.bf16.mxu0 0
  %2726 = vmatpush1.bf16.msra.mxu0 0
  %2727 = vmatprep.subr.bf16.mxu0 0
  %2728 = vmatpush1.bf16.msra.mxu0 0
  %2729 = vmatprep.subr.bf16.mxu0 0
  %2730 = vmatpush1.bf16.msra.mxu0 %v2106
  %2731 = vmatprep.subr.bf16.mxu0 0
  %2732 = vmatpush1.bf16.msra.mxu0 %v2094
  %2733 = vmatprep.subr.bf16.mxu0 0
  %2734 = vmatpush2.bf16.msra.mxu0 0
  %2735 = vmatprep.subr.bf16.mxu0 0
  %2736 = vmatpush2.bf16.msra.mxu0 0
  %2737 = vmatprep.subr.bf16.mxu0 0
  %2738 = vmatpush2.bf16.msra.mxu0 0
  %2739 = vmatprep.subr.bf16.mxu0 0
  %2740 = vmatpush2.bf16.msra.mxu0 0
  %2741 = vmatprep.subr.bf16.mxu0 0
  %2742 = vmatpush2.bf16.msra.mxu0 0
  %2743 = vmatprep.subr.bf16.mxu0 0
  %2744 = vmatpush2.bf16.msra.mxu0 0
  %2745 = vmatprep.subr.bf16.mxu0 0
  %2746 = vmatpush2.bf16.msra.mxu0 0
  %2747 = vmatprep.subr.bf16.mxu0 0
  %2748 = vmatpush2.bf16.msra.mxu0 0
  %2749 = vmatprep.mubr.bf16.mxu0 0
  %2750 = vmatmul.mubr.bf16.gmra.mxu0 %v2223
  %v2751 = vpop.f32.mrf.mxu0
  %v2752 = vadd.f32 0.0, %v2751
  %v2753 = vpop.f32.mrf.mxu0
  %v2754 = vpop.f32.mrf.mxu0
  %v2755 = vpop.f32.mrf.mxu0
  %2756 = vdwg.mxu0
  %2757 = vmatprep.subr.bf16.mxu0 0
  %2758 = vmatpush1.bf16.msra.mxu0 0
  %2759 = vmatprep.subr.bf16.mxu0 0
  %2760 = vmatpush1.bf16.msra.mxu0 0
  %2761 = vmatprep.subr.bf16.mxu0 0
  %2762 = vmatpush1.bf16.msra.mxu0 0
  %2763 = vmatprep.subr.bf16.mxu0 0
  %2764 = vmatpush1.bf16.msra.mxu0 0
  %2765 = vmatprep.subr.bf16.mxu0 0
  %2766 = vmatpush1.bf16.msra.mxu0 0
  %2767 = vmatprep.subr.bf16.mxu0 0
  %2768 = vmatpush1.bf16.msra.mxu0 0
  %2769 = vmatprep.subr.bf16.mxu0 0
  %2770 = vmatpush1.bf16.msra.mxu0 %v2163
  %2771 = vmatprep.subr.bf16.mxu0 0
  %2772 = vmatpush1.bf16.msra.mxu0 %v2156
  %2773 = vmatprep.subr.bf16.mxu0 0
  %2774 = vmatpush2.bf16.msra.mxu0 0
  %2775 = vmatprep.subr.bf16.mxu0 0
  %2776 = vmatpush2.bf16.msra.mxu0 0
  %2777 = vmatprep.subr.bf16.mxu0 0
  %2778 = vmatpush2.bf16.msra.mxu0 0
  %2779 = vmatprep.subr.bf16.mxu0 0
  %2780 = vmatpush2.bf16.msra.mxu0 0
  %2781 = vmatprep.subr.bf16.mxu0 0
  %2782 = vmatpush2.bf16.msra.mxu0 0
  %2783 = vmatprep.subr.bf16.mxu0 0
  %2784 = vmatpush2.bf16.msra.mxu0 0
  %2785 = vmatprep.subr.bf16.mxu0 0
  %2786 = vmatpush2.bf16.msra.mxu0 0
  %2787 = vmatprep.subr.bf16.mxu0 0
  %2788 = vmatpush2.bf16.msra.mxu0 0
  %2789 = vmatprep.mubr.bf16.mxu0 0
  %2790 = vmatmul.mubr.bf16.gmra.mxu0 %v2099
  %v2791 = vpop.f32.mrf.mxu0
  %v2792 = vadd.f32 %v2752, %v2791
  %v2793 = vpop.f32.mrf.mxu0
  %v2794 = vpop.f32.mrf.mxu0
  %v2795 = vpop.f32.mrf.mxu0
  %2796 = vdwg.mxu0
  %2797 = vmatprep.subr.bf16.mxu0 0
  %2798 = vmatpush1.bf16.msra.mxu0 0
  %2799 = vmatprep.subr.bf16.mxu0 0
  %2800 = vmatpush1.bf16.msra.mxu0 0
  %2801 = vmatprep.subr.bf16.mxu0 0
  %2802 = vmatpush1.bf16.msra.mxu0 0
  %2803 = vmatprep.subr.bf16.mxu0 0
  %2804 = vmatpush1.bf16.msra.mxu0 0
  %2805 = vmatprep.subr.bf16.mxu0 0
  %2806 = vmatpush1.bf16.msra.mxu0 0
  %2807 = vmatprep.subr.bf16.mxu0 0
  %2808 = vmatpush1.bf16.msra.mxu0 0
  %2809 = vmatprep.subr.bf16.mxu0 0
  %2810 = vmatpush1.bf16.msra.mxu0 %v2226
  %2811 = vmatprep.subr.bf16.mxu0 0
  %2812 = vmatpush1.bf16.msra.mxu0 %v2219
  %2813 = vmatprep.subr.bf16.mxu0 0
  %2814 = vmatpush2.bf16.msra.mxu0 0
  %2815 = vmatprep.subr.bf16.mxu0 0
  %2816 = vmatpush2.bf16.msra.mxu0 0
  %2817 = vmatprep.subr.bf16.mxu0 0
  %2818 = vmatpush2.bf16.msra.mxu0 0
  %2819 = vmatprep.subr.bf16.mxu0 0
  %2820 = vmatpush2.bf16.msra.mxu0 0
  %2821 = vmatprep.subr.bf16.mxu0 0
  %2822 = vmatpush2.bf16.msra.mxu0 0
  %2823 = vmatprep.subr.bf16.mxu0 0
  %2824 = vmatpush2.bf16.msra.mxu0 0
  %2825 = vmatprep.subr.bf16.mxu0 0
  %2826 = vmatpush2.bf16.msra.mxu0 0
  %2827 = vmatprep.subr.bf16.mxu0 0
  %2828 = vmatpush2.bf16.msra.mxu0 0
  %2829 = vmatprep.mubr.bf16.mxu0 0
  %2830 = vmatmul.mubr.bf16.gmra.mxu0 %v2287
  %v2831 = vpop.f32.mrf.mxu0
  %v2832 = vadd.f32 0.0, %v2831
  %v2833 = vpop.f32.mrf.mxu0
  %v2834 = vpop.f32.mrf.mxu0
  %v2835 = vpop.f32.mrf.mxu0
  %2836 = vdwg.mxu0
  %v2837 = vadd.f32 %v2792, %v2832
  %2838 = vmatprep.subr.bf16.mxu0 0
  %2839 = vmatpush1.bf16.msra.mxu0 0
  %2840 = vmatprep.subr.bf16.mxu0 0
  %2841 = vmatpush1.bf16.msra.mxu0 0
  %2842 = vmatprep.subr.bf16.mxu0 0
  %2843 = vmatpush1.bf16.msra.mxu0 0
  %2844 = vmatprep.subr.bf16.mxu0 0
  %2845 = vmatpush1.bf16.msra.mxu0 0
  %2846 = vmatprep.subr.bf16.mxu0 0
  %2847 = vmatpush1.bf16.msra.mxu0 0
  %2848 = vmatprep.subr.bf16.mxu0 0
  %2849 = vmatpush1.bf16.msra.mxu0 0
  %2850 = vmatprep.subr.bf16.mxu0 0
  %2851 = vmatpush1.bf16.msra.mxu0 %v2290
  %2852 = vmatprep.subr.bf16.mxu0 0
  %2853 = vmatpush1.bf16.msra.mxu0 %v2283
  %2854 = vmatprep.subr.bf16.mxu0 0
  %2855 = vmatpush2.bf16.msra.mxu0 0
  %2856 = vmatprep.subr.bf16.mxu0 0
  %2857 = vmatpush2.bf16.msra.mxu0 0
  %2858 = vmatprep.subr.bf16.mxu0 0
  %2859 = vmatpush2.bf16.msra.mxu0 0
  %2860 = vmatprep.subr.bf16.mxu0 0
  %2861 = vmatpush2.bf16.msra.mxu0 0
  %2862 = vmatprep.subr.bf16.mxu0 0
  %2863 = vmatpush2.bf16.msra.mxu0 0
  %2864 = vmatprep.subr.bf16.mxu0 0
  %2865 = vmatpush2.bf16.msra.mxu0 0
  %2866 = vmatprep.subr.bf16.mxu0 0
  %2867 = vmatpush2.bf16.msra.mxu0 0
  %2868 = vmatprep.subr.bf16.mxu0 0
  %2869 = vmatpush2.bf16.msra.mxu0 0
  %2870 = vmatprep.mubr.bf16.mxu0 0
  %2871 = vmatmul.mubr.bf16.gmra.mxu0 %v2351
  %v2872 = vpop.f32.mrf.mxu0
  %v2873 = vadd.f32 0.0, %v2872
  %v2874 = vpop.f32.mrf.mxu0
  %v2875 = vpop.f32.mrf.mxu0
  %v2876 = vpop.f32.mrf.mxu0
  %2877 = vdwg.mxu0
  %v2878 = vadd.f32 %v2837, %v2873
  %2879 = vmatprep.subr.bf16.mxu0 0
  %2880 = vmatpush1.bf16.msra.mxu0 0
  %2881 = vmatprep.subr.bf16.mxu0 0
  %2882 = vmatpush1.bf16.msra.mxu0 0
  %2883 = vmatprep.subr.bf16.mxu0 0
  %2884 = vmatpush1.bf16.msra.mxu0 0
  %2885 = vmatprep.subr.bf16.mxu0 0
  %2886 = vmatpush1.bf16.msra.mxu0 0
  %2887 = vmatprep.subr.bf16.mxu0 0
  %2888 = vmatpush1.bf16.msra.mxu0 0
  %2889 = vmatprep.subr.bf16.mxu0 0
  %2890 = vmatpush1.bf16.msra.mxu0 0
  %2891 = vmatprep.subr.bf16.mxu0 0
  %2892 = vmatpush1.bf16.msra.mxu0 %v2354
  %2893 = vmatprep.subr.bf16.mxu0 0
  %2894 = vmatpush1.bf16.msra.mxu0 %v2347
  %2895 = vmatprep.subr.bf16.mxu0 0
  %2896 = vmatpush2.bf16.msra.mxu0 0
  %2897 = vmatprep.subr.bf16.mxu0 0
  %2898 = vmatpush2.bf16.msra.mxu0 0
  %2899 = vmatprep.subr.bf16.mxu0 0
  %2900 = vmatpush2.bf16.msra.mxu0 0
  %2901 = vmatprep.subr.bf16.mxu0 0
  %2902 = vmatpush2.bf16.msra.mxu0 0
  %2903 = vmatprep.subr.bf16.mxu0 0
  %2904 = vmatpush2.bf16.msra.mxu0 0
  %2905 = vmatprep.subr.bf16.mxu0 0
  %2906 = vmatpush2.bf16.msra.mxu0 0
  %2907 = vmatprep.subr.bf16.mxu0 0
  %2908 = vmatpush2.bf16.msra.mxu0 0
  %2909 = vmatprep.subr.bf16.mxu0 0
  %2910 = vmatpush2.bf16.msra.mxu0 0
  %2911 = vmatprep.mubr.bf16.mxu0 0
  %2912 = vmatmul.mubr.bf16.gmra.mxu0 %v2415
  %v2913 = vpop.f32.mrf.mxu0
  %v2914 = vadd.f32 0.0, %v2913
  %v2915 = vpop.f32.mrf.mxu0
  %v2916 = vpop.f32.mrf.mxu0
  %v2917 = vpop.f32.mrf.mxu0
  %2918 = vdwg.mxu0
  %v2919 = vadd.f32 %v2878, %v2914
  %2920 = vmatprep.subr.bf16.mxu0 0
  %2921 = vmatpush1.bf16.msra.mxu0 0
  %2922 = vmatprep.subr.bf16.mxu0 0
  %2923 = vmatpush1.bf16.msra.mxu0 0
  %2924 = vmatprep.subr.bf16.mxu0 0
  %2925 = vmatpush1.bf16.msra.mxu0 0
  %2926 = vmatprep.subr.bf16.mxu0 0
  %2927 = vmatpush1.bf16.msra.mxu0 0
  %2928 = vmatprep.subr.bf16.mxu0 0
  %2929 = vmatpush1.bf16.msra.mxu0 0
  %2930 = vmatprep.subr.bf16.mxu0 0
  %2931 = vmatpush1.bf16.msra.mxu0 0
  %2932 = vmatprep.subr.bf16.mxu0 0
  %2933 = vmatpush1.bf16.msra.mxu0 %v2418
  %2934 = vmatprep.subr.bf16.mxu0 0
  %2935 = vmatpush1.bf16.msra.mxu0 %v2411
  %2936 = vmatprep.subr.bf16.mxu0 0
  %2937 = vmatpush2.bf16.msra.mxu0 0
  %2938 = vmatprep.subr.bf16.mxu0 0
  %2939 = vmatpush2.bf16.msra.mxu0 0
  %2940 = vmatprep.subr.bf16.mxu0 0
  %2941 = vmatpush2.bf16.msra.mxu0 0
  %2942 = vmatprep.subr.bf16.mxu0 0
  %2943 = vmatpush2.bf16.msra.mxu0 0
  %2944 = vmatprep.subr.bf16.mxu0 0
  %2945 = vmatpush2.bf16.msra.mxu0 0
  %2946 = vmatprep.subr.bf16.mxu0 0
  %2947 = vmatpush2.bf16.msra.mxu0 0
  %2948 = vmatprep.subr.bf16.mxu0 0
  %2949 = vmatpush2.bf16.msra.mxu0 0
  %2950 = vmatprep.subr.bf16.mxu0 0
  %2951 = vmatpush2.bf16.msra.mxu0 0
  %2952 = vmatprep.mubr.bf16.mxu0 0
  %2953 = vmatmul.mubr.bf16.gmra.mxu0 %v2479
  %v2954 = vpop.f32.mrf.mxu0
  %v2955 = vadd.f32 0.0, %v2954
  %v2956 = vpop.f32.mrf.mxu0
  %v2957 = vpop.f32.mrf.mxu0
  %v2958 = vpop.f32.mrf.mxu0
  %2959 = vdwg.mxu0
  %v2960 = vadd.f32 %v2919, %v2955
  %2961 = vmatprep.subr.bf16.mxu0 0
  %2962 = vmatpush1.bf16.msra.mxu0 0
  %2963 = vmatprep.subr.bf16.mxu0 0
  %2964 = vmatpush1.bf16.msra.mxu0 0
  %2965 = vmatprep.subr.bf16.mxu0 0
  %2966 = vmatpush1.bf16.msra.mxu0 0
  %2967 = vmatprep.subr.bf16.mxu0 0
  %2968 = vmatpush1.bf16.msra.mxu0 0
  %2969 = vmatprep.subr.bf16.mxu0 0
  %2970 = vmatpush1.bf16.msra.mxu0 0
  %2971 = vmatprep.subr.bf16.mxu0 0
  %2972 = vmatpush1.bf16.msra.mxu0 0
  %2973 = vmatprep.subr.bf16.mxu0 0
  %2974 = vmatpush1.bf16.msra.mxu0 %v2482
  %2975 = vmatprep.subr.bf16.mxu0 0
  %2976 = vmatpush1.bf16.msra.mxu0 %v2475
  %2977 = vmatprep.subr.bf16.mxu0 0
  %2978 = vmatpush2.bf16.msra.mxu0 0
  %2979 = vmatprep.subr.bf16.mxu0 0
  %2980 = vmatpush2.bf16.msra.mxu0 0
  %2981 = vmatprep.subr.bf16.mxu0 0
  %2982 = vmatpush2.bf16.msra.mxu0 0
  %2983 = vmatprep.subr.bf16.mxu0 0
  %2984 = vmatpush2.bf16.msra.mxu0 0
  %2985 = vmatprep.subr.bf16.mxu0 0
  %2986 = vmatpush2.bf16.msra.mxu0 0
  %2987 = vmatprep.subr.bf16.mxu0 0
  %2988 = vmatpush2.bf16.msra.mxu0 0
  %2989 = vmatprep.subr.bf16.mxu0 0
  %2990 = vmatpush2.bf16.msra.mxu0 0
  %2991 = vmatprep.subr.bf16.mxu0 0
  %2992 = vmatpush2.bf16.msra.mxu0 0
  %2993 = vmatprep.mubr.bf16.mxu0 0
  %2994 = vmatmul.mubr.bf16.gmra.mxu0 %v2543
  %v2995 = vpop.f32.mrf.mxu0
  %v2996 = vadd.f32 0.0, %v2995
  %v2997 = vpop.f32.mrf.mxu0
  %v2998 = vpop.f32.mrf.mxu0
  %v2999 = vpop.f32.mrf.mxu0
  %3000 = vdwg.mxu0
  %v3001 = vadd.f32 %v2960, %v2996
  %3002 = vmatprep.subr.bf16.mxu0 0
  %3003 = vmatpush1.bf16.msra.mxu0 0
  %3004 = vmatprep.subr.bf16.mxu0 0
  %3005 = vmatpush1.bf16.msra.mxu0 0
  %3006 = vmatprep.subr.bf16.mxu0 0
  %3007 = vmatpush1.bf16.msra.mxu0 0
  %3008 = vmatprep.subr.bf16.mxu0 0
  %3009 = vmatpush1.bf16.msra.mxu0 0
  %3010 = vmatprep.subr.bf16.mxu0 0
  %3011 = vmatpush1.bf16.msra.mxu0 0
  %3012 = vmatprep.subr.bf16.mxu0 0
  %3013 = vmatpush1.bf16.msra.mxu0 0
  %3014 = vmatprep.subr.bf16.mxu0 0
  %3015 = vmatpush1.bf16.msra.mxu0 %v2546
  %3016 = vmatprep.subr.bf16.mxu0 0
  %3017 = vmatpush1.bf16.msra.mxu0 %v2539
  %3018 = vmatprep.subr.bf16.mxu0 0
  %3019 = vmatpush2.bf16.msra.mxu0 0
  %3020 = vmatprep.subr.bf16.mxu0 0
  %3021 = vmatpush2.bf16.msra.mxu0 0
  %3022 = vmatprep.subr.bf16.mxu0 0
  %3023 = vmatpush2.bf16.msra.mxu0 0
  %3024 = vmatprep.subr.bf16.mxu0 0
  %3025 = vmatpush2.bf16.msra.mxu0 0
  %3026 = vmatprep.subr.bf16.mxu0 0
  %3027 = vmatpush2.bf16.msra.mxu0 0
  %3028 = vmatprep.subr.bf16.mxu0 0
  %3029 = vmatpush2.bf16.msra.mxu0 0
  %3030 = vmatprep.subr.bf16.mxu0 0
  %3031 = vmatpush2.bf16.msra.mxu0 0
  %3032 = vmatprep.subr.bf16.mxu0 0
  %3033 = vmatpush2.bf16.msra.mxu0 0
  %3034 = vmatprep.mubr.bf16.mxu0 0
  %3035 = vmatmul.mubr.bf16.gmra.mxu0 %v2607
  %v3036 = vpop.f32.mrf.mxu0
  %v3037 = vadd.f32 0.0, %v3036
  %v3038 = vpop.f32.mrf.mxu0
  %v3039 = vpop.f32.mrf.mxu0
  %v3040 = vpop.f32.mrf.mxu0
  %3041 = vdwg.mxu0
  %v3042 = vadd.f32 %v3001, %v3037
  %3043 = vmatprep.subr.bf16.mxu0 0
  %3044 = vmatpush1.bf16.msra.mxu0 0
  %3045 = vmatprep.subr.bf16.mxu0 0
  %3046 = vmatpush1.bf16.msra.mxu0 0
  %3047 = vmatprep.subr.bf16.mxu0 0
  %3048 = vmatpush1.bf16.msra.mxu0 0
  %3049 = vmatprep.subr.bf16.mxu0 0
  %3050 = vmatpush1.bf16.msra.mxu0 0
  %3051 = vmatprep.subr.bf16.mxu0 0
  %3052 = vmatpush1.bf16.msra.mxu0 0
  %3053 = vmatprep.subr.bf16.mxu0 0
  %3054 = vmatpush1.bf16.msra.mxu0 0
  %3055 = vmatprep.subr.bf16.mxu0 0
  %3056 = vmatpush1.bf16.msra.mxu0 %v2610
  %3057 = vmatprep.subr.bf16.mxu0 0
  %3058 = vmatpush1.bf16.msra.mxu0 %v2603
  %3059 = vmatprep.subr.bf16.mxu0 0
  %3060 = vmatpush2.bf16.msra.mxu0 0
  %3061 = vmatprep.subr.bf16.mxu0 0
  %3062 = vmatpush2.bf16.msra.mxu0 0
  %3063 = vmatprep.subr.bf16.mxu0 0
  %3064 = vmatpush2.bf16.msra.mxu0 0
  %3065 = vmatprep.subr.bf16.mxu0 0
  %3066 = vmatpush2.bf16.msra.mxu0 0
  %3067 = vmatprep.subr.bf16.mxu0 0
  %3068 = vmatpush2.bf16.msra.mxu0 0
  %3069 = vmatprep.subr.bf16.mxu0 0
  %3070 = vmatpush2.bf16.msra.mxu0 0
  %3071 = vmatprep.subr.bf16.mxu0 0
  %3072 = vmatpush2.bf16.msra.mxu0 0
  %3073 = vmatprep.subr.bf16.mxu0 0
  %3074 = vmatpush2.bf16.msra.mxu0 0
  %3075 = vmatprep.mubr.bf16.mxu0 0
  %3076 = vmatmul.mubr.bf16.gmra.mxu0 %v2671
  %v3077 = vpop.f32.mrf.mxu0
  %v3078 = vadd.f32 0.0, %v3077
  %v3079 = vpop.f32.mrf.mxu0
  %v3080 = vpop.f32.mrf.mxu0
  %v3081 = vpop.f32.mrf.mxu0
  %3082 = vdwg.mxu0
  %v3083 = vadd.f32 %v3042, %v3078
  %v3084 = vld [vmem:[#allocation2 + $0x28] sm:$0xf]
  %v3086 = vsel %vm2097, %v3084, 0
  %3088 = vmatprep.subr.bf16.mxu0 0
  %3089 = vmatpush1.bf16.msra.mxu0 0
  %3090 = vmatprep.subr.bf16.mxu0 0
  %3091 = vmatpush1.bf16.msra.mxu0 0
  %3092 = vmatprep.subr.bf16.mxu0 0
  %3093 = vmatpush1.bf16.msra.mxu0 0
  %3094 = vmatprep.subr.bf16.mxu0 0
  %3095 = vmatpush1.bf16.msra.mxu0 0
  %3096 = vmatprep.subr.bf16.mxu0 0
  %3097 = vmatpush1.bf16.msra.mxu0 0
  %3098 = vmatprep.subr.bf16.mxu0 0
  %3099 = vmatpush1.bf16.msra.mxu0 0
  %3100 = vmatprep.subr.bf16.mxu0 0
  %3101 = vmatpush1.bf16.msra.mxu0 %v2674
  %3102 = vmatprep.subr.bf16.mxu0 0
  %3103 = vmatpush1.bf16.msra.mxu0 %v2667
  %3104 = vmatprep.subr.bf16.mxu0 0
  %3105 = vmatpush2.bf16.msra.mxu0 0
  %3106 = vmatprep.subr.bf16.mxu0 0
  %3107 = vmatpush2.bf16.msra.mxu0 0
  %3108 = vmatprep.subr.bf16.mxu0 0
  %3109 = vmatpush2.bf16.msra.mxu0 0
  %3110 = vmatprep.subr.bf16.mxu0 0
  %3111 = vmatpush2.bf16.msra.mxu0 0
  %3112 = vmatprep.subr.bf16.mxu0 0
  %3113 = vmatpush2.bf16.msra.mxu0 0
  %3114 = vmatprep.subr.bf16.mxu0 0
  %3115 = vmatpush2.bf16.msra.mxu0 0
  %3116 = vmatprep.subr.bf16.mxu0 0
  %3117 = vmatpush2.bf16.msra.mxu0 0
  %3118 = vmatprep.subr.bf16.mxu0 0
  %3119 = vmatpush2.bf16.msra.mxu0 0
  %3120 = vmatprep.mubr.bf16.mxu0 0
  %3121 = vmatmul.mubr.bf16.gmra.mxu0 %v3086
  %v3122 = vpop.f32.mrf.mxu0
  %v3123 = vadd.f32 0.0, %v3122
  %v3124 = vpop.f32.mrf.mxu0
  %v3125 = vpop.f32.mrf.mxu0
  %v3126 = vpop.f32.mrf.mxu0
  %3127 = vdwg.mxu0
  %v3128 = vadd.f32 %v3083, %v3123
  %v3129 = vmax.f32 %v2716, %v3128
  %3130 = vmatprep.subr.bf16.mxu0 0
  %3131 = vmatpush1.bf16.msra.mxu0 0
  %3132 = vmatprep.subr.bf16.mxu0 0
  %3133 = vmatpush1.bf16.msra.mxu0 0
  %3134 = vmatprep.subr.bf16.mxu0 0
  %3135 = vmatpush1.bf16.msra.mxu0 0
  %3136 = vmatprep.subr.bf16.mxu0 0
  %3137 = vmatpush1.bf16.msra.mxu0 0
  %3138 = vmatprep.subr.bf16.mxu0 0
  %3139 = vmatpush1.bf16.msra.mxu0 0
  %3140 = vmatprep.subr.bf16.mxu0 0
  %3141 = vmatpush1.bf16.msra.mxu0 0
  %3142 = vmatprep.subr.bf16.mxu0 0
  %3143 = vmatpush1.bf16.msra.mxu0 %v2106
  %3144 = vmatprep.subr.bf16.mxu0 0
  %3145 = vmatpush1.bf16.msra.mxu0 %v2094
  %3146 = vmatprep.subr.bf16.mxu0 0
  %3147 = vmatpush2.bf16.msra.mxu0 0
  %3148 = vmatprep.subr.bf16.mxu0 0
  %3149 = vmatpush2.bf16.msra.mxu0 0
  %3150 = vmatprep.subr.bf16.mxu0 0
  %3151 = vmatpush2.bf16.msra.mxu0 0
  %3152 = vmatprep.subr.bf16.mxu0 0
  %3153 = vmatpush2.bf16.msra.mxu0 0
  %3154 = vmatprep.subr.bf16.mxu0 0
  %3155 = vmatpush2.bf16.msra.mxu0 0
  %3156 = vmatprep.subr.bf16.mxu0 0
  %3157 = vmatpush2.bf16.msra.mxu0 0
  %3158 = vmatprep.subr.bf16.mxu0 0
  %3159 = vmatpush2.bf16.msra.mxu0 0
  %3160 = vmatprep.subr.bf16.mxu0 0
  %3161 = vmatpush2.bf16.msra.mxu0 0
  %3162 = vmatprep.mubr.bf16.mxu0 0
  %3163 = vmatmul.mubr.bf16.gmra.mxu0 %v2287
  %v3164 = vpop.f32.mrf.mxu0
  %v3165 = vadd.f32 0.0, %v3164
  %v3166 = vpop.f32.mrf.mxu0
  %v3167 = vpop.f32.mrf.mxu0
  %v3168 = vpop.f32.mrf.mxu0
  %3169 = vdwg.mxu0
  %3170 = vmatprep.subr.bf16.mxu0 0
  %3171 = vmatpush1.bf16.msra.mxu0 0
  %3172 = vmatprep.subr.bf16.mxu0 0
  %3173 = vmatpush1.bf16.msra.mxu0 0
  %3174 = vmatprep.subr.bf16.mxu0 0
  %3175 = vmatpush1.bf16.msra.mxu0 0
  %3176 = vmatprep.subr.bf16.mxu0 0
  %3177 = vmatpush1.bf16.msra.mxu0 0
  %3178 = vmatprep.subr.bf16.mxu0 0
  %3179 = vmatpush1.bf16.msra.mxu0 0
  %3180 = vmatprep.subr.bf16.mxu0 0
  %3181 = vmatpush1.bf16.msra.mxu0 0
  %3182 = vmatprep.subr.bf16.mxu0 0
  %3183 = vmatpush1.bf16.msra.mxu0 %v2163
  %3184 = vmatprep.subr.bf16.mxu0 0
  %3185 = vmatpush1.bf16.msra.mxu0 %v2156
  %3186 = vmatprep.subr.bf16.mxu0 0
  %3187 = vmatpush2.bf16.msra.mxu0 0
  %3188 = vmatprep.subr.bf16.mxu0 0
  %3189 = vmatpush2.bf16.msra.mxu0 0
  %3190 = vmatprep.subr.bf16.mxu0 0
  %3191 = vmatpush2.bf16.msra.mxu0 0
  %3192 = vmatprep.subr.bf16.mxu0 0
  %3193 = vmatpush2.bf16.msra.mxu0 0
  %3194 = vmatprep.subr.bf16.mxu0 0
  %3195 = vmatpush2.bf16.msra.mxu0 0
  %3196 = vmatprep.subr.bf16.mxu0 0
  %3197 = vmatpush2.bf16.msra.mxu0 0
  %3198 = vmatprep.subr.bf16.mxu0 0
  %3199 = vmatpush2.bf16.msra.mxu0 0
  %3200 = vmatprep.subr.bf16.mxu0 0
  %3201 = vmatpush2.bf16.msra.mxu0 0
  %3202 = vmatprep.mubr.bf16.mxu0 0
  %3203 = vmatmul.mubr.bf16.gmra.mxu0 %v2223
  %v3204 = vpop.f32.mrf.mxu0
  %v3205 = vadd.f32 %v3165, %v3204
  %v3206 = vpop.f32.mrf.mxu0
  %v3207 = vpop.f32.mrf.mxu0
  %v3208 = vpop.f32.mrf.mxu0
  %3209 = vdwg.mxu0
  %3210 = vmatprep.subr.bf16.mxu0 0
  %3211 = vmatpush1.bf16.msra.mxu0 0
  %3212 = vmatprep.subr.bf16.mxu0 0
  %3213 = vmatpush1.bf16.msra.mxu0 0
  %3214 = vmatprep.subr.bf16.mxu0 0
  %3215 = vmatpush1.bf16.msra.mxu0 0
  %3216 = vmatprep.subr.bf16.mxu0 0
  %3217 = vmatpush1.bf16.msra.mxu0 0
  %3218 = vmatprep.subr.bf16.mxu0 0
  %3219 = vmatpush1.bf16.msra.mxu0 0
  %3220 = vmatprep.subr.bf16.mxu0 0
  %3221 = vmatpush1.bf16.msra.mxu0 0
  %3222 = vmatprep.subr.bf16.mxu0 0
  %3223 = vmatpush1.bf16.msra.mxu0 %v2226
  %3224 = vmatprep.subr.bf16.mxu0 0
  %3225 = vmatpush1.bf16.msra.mxu0 %v2219
  %3226 = vmatprep.subr.bf16.mxu0 0
  %3227 = vmatpush2.bf16.msra.mxu0 0
  %3228 = vmatprep.subr.bf16.mxu0 0
  %3229 = vmatpush2.bf16.msra.mxu0 0
  %3230 = vmatprep.subr.bf16.mxu0 0
  %3231 = vmatpush2.bf16.msra.mxu0 0
  %3232 = vmatprep.subr.bf16.mxu0 0
  %3233 = vmatpush2.bf16.msra.mxu0 0
  %3234 = vmatprep.subr.bf16.mxu0 0
  %3235 = vmatpush2.bf16.msra.mxu0 0
  %3236 = vmatprep.subr.bf16.mxu0 0
  %3237 = vmatpush2.bf16.msra.mxu0 0
  %3238 = vmatprep.subr.bf16.mxu0 0
  %3239 = vmatpush2.bf16.msra.mxu0 0
  %3240 = vmatprep.subr.bf16.mxu0 0
  %3241 = vmatpush2.bf16.msra.mxu0 0
  %3242 = vmatprep.mubr.bf16.mxu0 0
  %3243 = vmatmul.mubr.bf16.gmra.mxu0 %v2351
  %v3244 = vpop.f32.mrf.mxu0
  %v3245 = vadd.f32 0.0, %v3244
  %v3246 = vpop.f32.mrf.mxu0
  %v3247 = vpop.f32.mrf.mxu0
  %v3248 = vpop.f32.mrf.mxu0
  %3249 = vdwg.mxu0
  %v3250 = vadd.f32 %v3205, %v3245
  %3251 = vmatprep.subr.bf16.mxu0 0
  %3252 = vmatpush1.bf16.msra.mxu0 0
  %3253 = vmatprep.subr.bf16.mxu0 0
  %3254 = vmatpush1.bf16.msra.mxu0 0
  %3255 = vmatprep.subr.bf16.mxu0 0
  %3256 = vmatpush1.bf16.msra.mxu0 0
  %3257 = vmatprep.subr.bf16.mxu0 0
  %3258 = vmatpush1.bf16.msra.mxu0 0
  %3259 = vmatprep.subr.bf16.mxu0 0
  %3260 = vmatpush1.bf16.msra.mxu0 0
  %3261 = vmatprep.subr.bf16.mxu0 0
  %3262 = vmatpush1.bf16.msra.mxu0 0
  %3263 = vmatprep.subr.bf16.mxu0 0
  %3264 = vmatpush1.bf16.msra.mxu0 %v2290
  %3265 = vmatprep.subr.bf16.mxu0 0
  %3266 = vmatpush1.bf16.msra.mxu0 %v2283
  %3267 = vmatprep.subr.bf16.mxu0 0
  %3268 = vmatpush2.bf16.msra.mxu0 0
  %3269 = vmatprep.subr.bf16.mxu0 0
  %3270 = vmatpush2.bf16.msra.mxu0 0
  %3271 = vmatprep.subr.bf16.mxu0 0
  %3272 = vmatpush2.bf16.msra.mxu0 0
  %3273 = vmatprep.subr.bf16.mxu0 0
  %3274 = vmatpush2.bf16.msra.mxu0 0
  %3275 = vmatprep.subr.bf16.mxu0 0
  %3276 = vmatpush2.bf16.msra.mxu0 0
  %3277 = vmatprep.subr.bf16.mxu0 0
  %3278 = vmatpush2.bf16.msra.mxu0 0
  %3279 = vmatprep.subr.bf16.mxu0 0
  %3280 = vmatpush2.bf16.msra.mxu0 0
  %3281 = vmatprep.subr.bf16.mxu0 0
  %3282 = vmatpush2.bf16.msra.mxu0 0
  %3283 = vmatprep.mubr.bf16.mxu0 0
  %3284 = vmatmul.mubr.bf16.gmra.mxu0 %v2415
  %v3285 = vpop.f32.mrf.mxu0
  %v3286 = vadd.f32 0.0, %v3285
  %v3287 = vpop.f32.mrf.mxu0
  %v3288 = vpop.f32.mrf.mxu0
  %v3289 = vpop.f32.mrf.mxu0
  %3290 = vdwg.mxu0
  %v3291 = vadd.f32 %v3250, %v3286
  %3292 = vmatprep.subr.bf16.mxu0 0
  %3293 = vmatpush1.bf16.msra.mxu0 0
  %3294 = vmatprep.subr.bf16.mxu0 0
  %3295 = vmatpush1.bf16.msra.mxu0 0
  %3296 = vmatprep.subr.bf16.mxu0 0
  %3297 = vmatpush1.bf16.msra.mxu0 0
  %3298 = vmatprep.subr.bf16.mxu0 0
  %3299 = vmatpush1.bf16.msra.mxu0 0
  %3300 = vmatprep.subr.bf16.mxu0 0
  %3301 = vmatpush1.bf16.msra.mxu0 0
  %3302 = vmatprep.subr.bf16.mxu0 0
  %3303 = vmatpush1.bf16.msra.mxu0 0
  %3304 = vmatprep.subr.bf16.mxu0 0
  %3305 = vmatpush1.bf16.msra.mxu0 %v2354
  %3306 = vmatprep.subr.bf16.mxu0 0
  %3307 = vmatpush1.bf16.msra.mxu0 %v2347
  %3308 = vmatprep.subr.bf16.mxu0 0
  %3309 = vmatpush2.bf16.msra.mxu0 0
  %3310 = vmatprep.subr.bf16.mxu0 0
  %3311 = vmatpush2.bf16.msra.mxu0 0
  %3312 = vmatprep.subr.bf16.mxu0 0
  %3313 = vmatpush2.bf16.msra.mxu0 0
  %3314 = vmatprep.subr.bf16.mxu0 0
  %3315 = vmatpush2.bf16.msra.mxu0 0
  %3316 = vmatprep.subr.bf16.mxu0 0
  %3317 = vmatpush2.bf16.msra.mxu0 0
  %3318 = vmatprep.subr.bf16.mxu0 0
  %3319 = vmatpush2.bf16.msra.mxu0 0
  %3320 = vmatprep.subr.bf16.mxu0 0
  %3321 = vmatpush2.bf16.msra.mxu0 0
  %3322 = vmatprep.subr.bf16.mxu0 0
  %3323 = vmatpush2.bf16.msra.mxu0 0
  %3324 = vmatprep.mubr.bf16.mxu0 0
  %3325 = vmatmul.mubr.bf16.gmra.mxu0 %v2479
  %v3326 = vpop.f32.mrf.mxu0
  %v3327 = vadd.f32 0.0, %v3326
  %v3328 = vpop.f32.mrf.mxu0
  %v3329 = vpop.f32.mrf.mxu0
  %v3330 = vpop.f32.mrf.mxu0
  %3331 = vdwg.mxu0
  %v3332 = vadd.f32 %v3291, %v3327
  %3333 = vmatprep.subr.bf16.mxu0 0
  %3334 = vmatpush1.bf16.msra.mxu0 0
  %3335 = vmatprep.subr.bf16.mxu0 0
  %3336 = vmatpush1.bf16.msra.mxu0 0
  %3337 = vmatprep.subr.bf16.mxu0 0
  %3338 = vmatpush1.bf16.msra.mxu0 0
  %3339 = vmatprep.subr.bf16.mxu0 0
  %3340 = vmatpush1.bf16.msra.mxu0 0
  %3341 = vmatprep.subr.bf16.mxu0 0
  %3342 = vmatpush1.bf16.msra.mxu0 0
  %3343 = vmatprep.subr.bf16.mxu0 0
  %3344 = vmatpush1.bf16.msra.mxu0 0
  %3345 = vmatprep.subr.bf16.mxu0 0
  %3346 = vmatpush1.bf16.msra.mxu0 %v2418
  %3347 = vmatprep.subr.bf16.mxu0 0
  %3348 = vmatpush1.bf16.msra.mxu0 %v2411
  %3349 = vmatprep.subr.bf16.mxu0 0
  %3350 = vmatpush2.bf16.msra.mxu0 0
  %3351 = vmatprep.subr.bf16.mxu0 0
  %3352 = vmatpush2.bf16.msra.mxu0 0
  %3353 = vmatprep.subr.bf16.mxu0 0
  %3354 = vmatpush2.bf16.msra.mxu0 0
  %3355 = vmatprep.subr.bf16.mxu0 0
  %3356 = vmatpush2.bf16.msra.mxu0 0
  %3357 = vmatprep.subr.bf16.mxu0 0
  %3358 = vmatpush2.bf16.msra.mxu0 0
  %3359 = vmatprep.subr.bf16.mxu0 0
  %3360 = vmatpush2.bf16.msra.mxu0 0
  %3361 = vmatprep.subr.bf16.mxu0 0
  %3362 = vmatpush2.bf16.msra.mxu0 0
  %3363 = vmatprep.subr.bf16.mxu0 0
  %3364 = vmatpush2.bf16.msra.mxu0 0
  %3365 = vmatprep.mubr.bf16.mxu0 0
  %3366 = vmatmul.mubr.bf16.gmra.mxu0 %v2543
  %v3367 = vpop.f32.mrf.mxu0
  %v3368 = vadd.f32 0.0, %v3367
  %v3369 = vpop.f32.mrf.mxu0
  %v3370 = vpop.f32.mrf.mxu0
  %v3371 = vpop.f32.mrf.mxu0
  %3372 = vdwg.mxu0
  %v3373 = vadd.f32 %v3332, %v3368
  %3374 = vmatprep.subr.bf16.mxu0 0
  %3375 = vmatpush1.bf16.msra.mxu0 0
  %3376 = vmatprep.subr.bf16.mxu0 0
  %3377 = vmatpush1.bf16.msra.mxu0 0
  %3378 = vmatprep.subr.bf16.mxu0 0
  %3379 = vmatpush1.bf16.msra.mxu0 0
  %3380 = vmatprep.subr.bf16.mxu0 0
  %3381 = vmatpush1.bf16.msra.mxu0 0
  %3382 = vmatprep.subr.bf16.mxu0 0
  %3383 = vmatpush1.bf16.msra.mxu0 0
  %3384 = vmatprep.subr.bf16.mxu0 0
  %3385 = vmatpush1.bf16.msra.mxu0 0
  %3386 = vmatprep.subr.bf16.mxu0 0
  %3387 = vmatpush1.bf16.msra.mxu0 %v2482
  %3388 = vmatprep.subr.bf16.mxu0 0
  %3389 = vmatpush1.bf16.msra.mxu0 %v2475
  %3390 = vmatprep.subr.bf16.mxu0 0
  %3391 = vmatpush2.bf16.msra.mxu0 0
  %3392 = vmatprep.subr.bf16.mxu0 0
  %3393 = vmatpush2.bf16.msra.mxu0 0
  %3394 = vmatprep.subr.bf16.mxu0 0
  %3395 = vmatpush2.bf16.msra.mxu0 0
  %3396 = vmatprep.subr.bf16.mxu0 0
  %3397 = vmatpush2.bf16.msra.mxu0 0
  %3398 = vmatprep.subr.bf16.mxu0 0
  %3399 = vmatpush2.bf16.msra.mxu0 0
  %3400 = vmatprep.subr.bf16.mxu0 0
  %3401 = vmatpush2.bf16.msra.mxu0 0
  %3402 = vmatprep.subr.bf16.mxu0 0
  %3403 = vmatpush2.bf16.msra.mxu0 0
  %3404 = vmatprep.subr.bf16.mxu0 0
  %3405 = vmatpush2.bf16.msra.mxu0 0
  %3406 = vmatprep.mubr.bf16.mxu0 0
  %3407 = vmatmul.mubr.bf16.gmra.mxu0 %v2607
  %v3408 = vpop.f32.mrf.mxu0
  %v3409 = vadd.f32 0.0, %v3408
  %v3410 = vpop.f32.mrf.mxu0
  %v3411 = vpop.f32.mrf.mxu0
  %v3412 = vpop.f32.mrf.mxu0
  %3413 = vdwg.mxu0
  %v3414 = vadd.f32 %v3373, %v3409
  %3415 = vmatprep.subr.bf16.mxu0 0
  %3416 = vmatpush1.bf16.msra.mxu0 0
  %3417 = vmatprep.subr.bf16.mxu0 0
  %3418 = vmatpush1.bf16.msra.mxu0 0
  %3419 = vmatprep.subr.bf16.mxu0 0
  %3420 = vmatpush1.bf16.msra.mxu0 0
  %3421 = vmatprep.subr.bf16.mxu0 0
  %3422 = vmatpush1.bf16.msra.mxu0 0
  %3423 = vmatprep.subr.bf16.mxu0 0
  %3424 = vmatpush1.bf16.msra.mxu0 0
  %3425 = vmatprep.subr.bf16.mxu0 0
  %3426 = vmatpush1.bf16.msra.mxu0 0
  %3427 = vmatprep.subr.bf16.mxu0 0
  %3428 = vmatpush1.bf16.msra.mxu0 %v2546
  %3429 = vmatprep.subr.bf16.mxu0 0
  %3430 = vmatpush1.bf16.msra.mxu0 %v2539
  %3431 = vmatprep.subr.bf16.mxu0 0
  %3432 = vmatpush2.bf16.msra.mxu0 0
  %3433 = vmatprep.subr.bf16.mxu0 0
  %3434 = vmatpush2.bf16.msra.mxu0 0
  %3435 = vmatprep.subr.bf16.mxu0 0
  %3436 = vmatpush2.bf16.msra.mxu0 0
  %3437 = vmatprep.subr.bf16.mxu0 0
  %3438 = vmatpush2.bf16.msra.mxu0 0
  %3439 = vmatprep.subr.bf16.mxu0 0
  %3440 = vmatpush2.bf16.msra.mxu0 0
  %3441 = vmatprep.subr.bf16.mxu0 0
  %3442 = vmatpush2.bf16.msra.mxu0 0
  %3443 = vmatprep.subr.bf16.mxu0 0
  %3444 = vmatpush2.bf16.msra.mxu0 0
  %3445 = vmatprep.subr.bf16.mxu0 0
  %3446 = vmatpush2.bf16.msra.mxu0 0
  %3447 = vmatprep.mubr.bf16.mxu0 0
  %3448 = vmatmul.mubr.bf16.gmra.mxu0 %v2671
  %v3449 = vpop.f32.mrf.mxu0
  %v3450 = vadd.f32 0.0, %v3449
  %v3451 = vpop.f32.mrf.mxu0
  %v3452 = vpop.f32.mrf.mxu0
  %v3453 = vpop.f32.mrf.mxu0
  %3454 = vdwg.mxu0
  %v3455 = vadd.f32 %v3414, %v3450
  %3456 = vmatprep.subr.bf16.mxu0 0
  %3457 = vmatpush1.bf16.msra.mxu0 0
  %3458 = vmatprep.subr.bf16.mxu0 0
  %3459 = vmatpush1.bf16.msra.mxu0 0
  %3460 = vmatprep.subr.bf16.mxu0 0
  %3461 = vmatpush1.bf16.msra.mxu0 0
  %3462 = vmatprep.subr.bf16.mxu0 0
  %3463 = vmatpush1.bf16.msra.mxu0 0
  %3464 = vmatprep.subr.bf16.mxu0 0
  %3465 = vmatpush1.bf16.msra.mxu0 0
  %3466 = vmatprep.subr.bf16.mxu0 0
  %3467 = vmatpush1.bf16.msra.mxu0 0
  %3468 = vmatprep.subr.bf16.mxu0 0
  %3469 = vmatpush1.bf16.msra.mxu0 %v2610
  %3470 = vmatprep.subr.bf16.mxu0 0
  %3471 = vmatpush1.bf16.msra.mxu0 %v2603
  %3472 = vmatprep.subr.bf16.mxu0 0
  %3473 = vmatpush2.bf16.msra.mxu0 0
  %3474 = vmatprep.subr.bf16.mxu0 0
  %3475 = vmatpush2.bf16.msra.mxu0 0
  %3476 = vmatprep.subr.bf16.mxu0 0
  %3477 = vmatpush2.bf16.msra.mxu0 0
  %3478 = vmatprep.subr.bf16.mxu0 0
  %3479 = vmatpush2.bf16.msra.mxu0 0
  %3480 = vmatprep.subr.bf16.mxu0 0
  %3481 = vmatpush2.bf16.msra.mxu0 0
  %3482 = vmatprep.subr.bf16.mxu0 0
  %3483 = vmatpush2.bf16.msra.mxu0 0
  %3484 = vmatprep.subr.bf16.mxu0 0
  %3485 = vmatpush2.bf16.msra.mxu0 0
  %3486 = vmatprep.subr.bf16.mxu0 0
  %3487 = vmatpush2.bf16.msra.mxu0 0
  %3488 = vmatprep.mubr.bf16.mxu0 0
  %3489 = vmatmul.mubr.bf16.gmra.mxu0 %v3086
  %v3490 = vpop.f32.mrf.mxu0
  %v3491 = vadd.f32 0.0, %v3490
  %v3492 = vpop.f32.mrf.mxu0
  %v3493 = vpop.f32.mrf.mxu0
  %v3494 = vpop.f32.mrf.mxu0
  %3495 = vdwg.mxu0
  %v3496 = vadd.f32 %v3455, %v3491
  %v3497 = vld [vmem:[#allocation2 + $0x2c] sm:$0xf]
  %v3499 = vsel %vm2097, %v3497, 0
  %3501 = vmatprep.subr.bf16.mxu0 0
  %3502 = vmatpush1.bf16.msra.mxu0 0
  %3503 = vmatprep.subr.bf16.mxu0 0
  %3504 = vmatpush1.bf16.msra.mxu0 0
  %3505 = vmatprep.subr.bf16.mxu0 0
  %3506 = vmatpush1.bf16.msra.mxu0 0
  %3507 = vmatprep.subr.bf16.mxu0 0
  %3508 = vmatpush1.bf16.msra.mxu0 0
  %3509 = vmatprep.subr.bf16.mxu0 0
  %3510 = vmatpush1.bf16.msra.mxu0 0
  %3511 = vmatprep.subr.bf16.mxu0 0
  %3512 = vmatpush1.bf16.msra.mxu0 0
  %3513 = vmatprep.subr.bf16.mxu0 0
  %3514 = vmatpush1.bf16.msra.mxu0 %v2674
  %3515 = vmatprep.subr.bf16.mxu0 0
  %3516 = vmatpush1.bf16.msra.mxu0 %v2667
  %3517 = vmatprep.subr.bf16.mxu0 0
  %3518 = vmatpush2.bf16.msra.mxu0 0
  %3519 = vmatprep.subr.bf16.mxu0 0
  %3520 = vmatpush2.bf16.msra.mxu0 0
  %3521 = vmatprep.subr.bf16.mxu0 0
  %3522 = vmatpush2.bf16.msra.mxu0 0
  %3523 = vmatprep.subr.bf16.mxu0 0
  %3524 = vmatpush2.bf16.msra.mxu0 0
  %3525 = vmatprep.subr.bf16.mxu0 0
  %3526 = vmatpush2.bf16.msra.mxu0 0
  %3527 = vmatprep.subr.bf16.mxu0 0
  %3528 = vmatpush2.bf16.msra.mxu0 0
  %3529 = vmatprep.subr.bf16.mxu0 0
  %3530 = vmatpush2.bf16.msra.mxu0 0
  %3531 = vmatprep.subr.bf16.mxu0 0
  %3532 = vmatpush2.bf16.msra.mxu0 0
  %3533 = vmatprep.mubr.bf16.mxu0 0
  %3534 = vmatmul.mubr.bf16.gmra.mxu0 %v3499
  %v3535 = vpop.f32.mrf.mxu0
  %v3536 = vadd.f32 0.0, %v3535
  %v3537 = vpop.f32.mrf.mxu0
  %v3538 = vpop.f32.mrf.mxu0
  %v3539 = vpop.f32.mrf.mxu0
  %3540 = vdwg.mxu0
  %v3541 = vadd.f32 %v3496, %v3536
  %v3542 = vmax.f32 %v3129, %v3541
  %v3544 = vlaneseq
  %v3545 = vshrl.u32 %v3544, 7
  %v3546 = vsub.s32 0, %v3545
  %v3547 = vrot.slane %v46, %v3546
  %v3549 = vadd.f32 %v3542, %v3547
  %vm3550 = vcmp.gt.f32.partialorder %v3549, 0.0
  %v3551 = vmul.f32 %v3549, 1.442695
  %v3552 = vpow.pop %v3551
  %v3553 = vsub.f32 %v3552, 1.0
  %v3554 = vsel %vm3550, %v3549, %v3553
  %v3555 = vpack.c.bf16 %v3554, %v3554
  %v3557 = vlaneseq
  %v3558 = vshrl.u32 %v3557, 7
  %v3559 = vsub.s32 0, %v3558
  %v3560 = vrot.slane %v54, %v3559
  %v3569 = vunpack.c.l.b16 %v47
  %v3570 = vunpack.c.l.b16 %v48
  %v3571 = vunpack.c.l.b16 %v49
  %v3572 = vunpack.c.l.b16 %v50
  %v3573 = vunpack.c.l.b16 %v51
  %v3574 = vunpack.c.l.b16 %v52
  %v3575 = vunpack.c.l.b16 %v53
  %v3576 = vpack.c.b16 %v3570, %v3569
  %v3577 = vpack.c.b16 %v3572, %v3571
  %v3578 = vpack.c.b16 %v3574, %v3573
  %v3579 = vpack.c.b16 %v3575, %v3575
  %vm3583 = vcmask 408576
  %v3585 = vsel %vm3583, %v3555, 0
  %vm3587 = vcmask 1040384
  %v3589 = vsel %vm3587, %v3579, 0
  %3591 = vmatprep.subr.bf16.mxu0 0
  %3592 = vmatpush1.bf16.msra.mxu0 0
  %3593 = vmatprep.subr.bf16.mxu0 0
  %3594 = vmatpush1.bf16.msra.mxu0 0
  %3595 = vmatprep.subr.bf16.mxu0 0
  %3596 = vmatpush1.bf16.msra.mxu0 0
  %3597 = vmatprep.subr.bf16.mxu0 0
  %3598 = vmatpush1.bf16.msra.mxu0 0
  %3599 = vmatprep.subr.bf16.mxu0 0
  %3600 = vmatpush1.bf16.msra.mxu0 %v3589
  %3601 = vmatprep.subr.bf16.mxu0 0
  %3602 = vmatpush1.bf16.msra.mxu0 %v3578
  %3603 = vmatprep.subr.bf16.mxu0 0
  %3604 = vmatpush1.bf16.msra.mxu0 %v3577
  %3605 = vmatprep.subr.bf16.mxu0 0
  %3606 = vmatpush1.bf16.msra.mxu0 %v3576
  %3607 = vmatprep.subr.bf16.mxu0 0
  %3608 = vmatpush2.bf16.msra.mxu0 0
  %3609 = vmatprep.subr.bf16.mxu0 0
  %3610 = vmatpush2.bf16.msra.mxu0 0
  %3611 = vmatprep.subr.bf16.mxu0 0
  %3612 = vmatpush2.bf16.msra.mxu0 0
  %3613 = vmatprep.subr.bf16.mxu0 0
  %3614 = vmatpush2.bf16.msra.mxu0 0
  %3615 = vmatprep.subr.bf16.mxu0 0
  %3616 = vmatpush2.bf16.msra.mxu0 0
  %3617 = vmatprep.subr.bf16.mxu0 0
  %3618 = vmatpush2.bf16.msra.mxu0 0
  %3619 = vmatprep.subr.bf16.mxu0 0
  %3620 = vmatpush2.bf16.msra.mxu0 0
  %3621 = vmatprep.subr.bf16.mxu0 0
  %3622 = vmatpush2.bf16.msra.mxu0 0
  %3623 = vmatprep.mubr.bf16.mxu0 0
  %3624 = vmatmul.mubr.bf16.gmra.mxu0 %v3585
  %v3625 = vpop.f32.mrf.mxu0
  %v3626 = vadd.f32 %v3560, %v3625
  %v3627 = vpop.f32.mrf.mxu0
  %v3628 = vpop.f32.mrf.mxu0
  %v3629 = vpop.f32.mrf.mxu0
  %3630 = vdwg.mxu0
  %3631 = vst [vmem:[%s7] sm:$0xff] %v3626
  // Predicated region
  $region30: #{deepconvnet_forward.1} parent=0 // pred_check
    _
  $region31: #{deepconvnet_forward.1} parent=0 // pred_check_branch
    %3633 = sbr.rel (0) target = $region33
  $region32: #{deepconvnet_forward.1} parent=0 // pred_region
    _
  $region33: #{deepconvnet_forward.1} parent=0 // pred_fallthru
    _
  // Predicated region
  $region34: #{deepconvnet_forward.1} parent=0 // pred_check
    _
  $region35: #{deepconvnet_forward.1} parent=0 // pred_check_branch
    %3635 = sbr.rel (0) target = $region37
  $region36: #{deepconvnet_forward.1} parent=0 // pred_region
    _
  $region37: #{deepconvnet_forward.1} parent=0 // pred_fallthru
    _

</llo_original>
